<compile_context>
chip_gen: v7x
topology: tpu7x:2x2x1
jax: 0.10.0
libtpu: 0.0.40
codegen_flags: <defaults>
</compile_context>

<pallas_src>
import jax
import jax.numpy as jnp
from jax.experimental import pallas as pl
from jax.experimental.pallas import tpu as pltpu

# ---- config defaults (EnhancedSpikeControlLoss.__init__ / method defaults) ----
MAX_GRADIENT_THRESHOLD = 0.12
GRADIENT_WEIGHT = 0.25
HOMOGENEOUS_PENALTY = 3.0
TRANSITION_PENALTY = 0.4
SPIKE_THRESHOLD = 2.5
TEMPORAL_WEIGHT = 0.08
HIGH_VALUE_BOOST = 1.2
SCALING_THRESHOLD = 50000.0
WINDOW_SIZE = 15
VARIANCE_THRESHOLD = 0.05


def _row_kth_smallest_nonneg(vals, k):
    """Exact k-th smallest (0-indexed) of each row of a non-negative f32 [B, n] array.

    For non-negative IEEE-754 floats the int32 bit pattern is monotone in the float
    value, so an MSB-first radix selection over 31 bits (the sign bit is always 0)
    finds the exact k-th order statistic. Matches torch.median (lower median) for
    k = (n - 1) // 2, including ties. O(31 * B * n), no [n, n] temporaries.
    """
    B, n = vals.shape
    x = pltpu.bitcast(vals, jnp.int32)                 # [B, n], all bit patterns >= 0
    prefix = jnp.zeros((B, 1), jnp.int32)              # answer bits fixed so far
    kk = jnp.full((B, 1), float(k), jnp.float32)       # remaining rank in candidate set
    for bit in range(30, -1, -1):
        sh = bit + 1
        cand = (x >> sh) == (prefix >> sh)             # still matches the fixed prefix
        zero_bit = ((x >> bit) & 1) == 0
        c0 = jnp.sum((cand & zero_bit).astype(jnp.float32), axis=1, keepdims=True)
        take_one = kk >= c0                            # k-th smallest has this bit set
        prefix = jnp.where(take_one, prefix | (1 << bit), prefix)
        kk = jnp.where(take_one, kk - c0, kk)
    return pltpu.bitcast(prefix, jnp.float32)          # [B, 1]


def _enhanced_spike_loss_kernel(pred_ref, true_ref, out_ref):
    pred = pred_ref[...]
    true = true_ref[...]
    B, L = pred.shape

    if L == 1:  # torch: early return with plain MSE
        out_ref[0, 0] = jnp.mean((pred - true) ** 2)
        return

    # ---------------- dynamic high-value boost ----------------
    any_high = jnp.max(true) > SCALING_THRESHOLD       # torch: if torch.any(high)
    high = true > SCALING_THRESHOLD
    trans = (true > SCALING_THRESHOLD * 0.8) & (true <= SCALING_THRESHOLD)
    factor = 1.0 + (HIGH_VALUE_BOOST - 1.0) * (
        (true - SCALING_THRESHOLD * 0.8) / (SCALING_THRESHOLD * 0.2))
    scale = jnp.where(high, HIGH_VALUE_BOOST, jnp.where(trans, factor, 1.0))
    boosted = jnp.where(any_high, pred * scale, pred)

    mse_loss = jnp.mean((boosted - true) ** 2)

    # -------- first differences & elementwise terms (computed once, reused) ------
    fd = boosted[:, 1:] - boosted[:, :-1]              # [B, L-1]
    pred_diffs = jnp.abs(fd)
    true_diffs = jnp.abs(true[:, 1:] - true[:, :-1])
    pattern_loss = jnp.mean((pred_diffs - true_diffs) ** 2)
    thr_t = jnp.maximum(true_diffs, MAX_GRADIENT_THRESHOLD)
    relu_sq = jnp.maximum(pred_diffs - 1.5 * thr_t, 0.0) ** 2
    pd_sq = pred_diffs * pred_diffs
    err1 = (boosted[:, 1:] - true[:, 1:]) ** 2         # [B, L-1]
    denom = float(B * (L - 1))

    # ---------------- homogeneous zones on the target ----------------
    # torch: unfold(window=15).var (unbiased, two-pass), replicate-pad by 7,
    # normalize by the per-row max, threshold at 0.05.
    if L > WINDOW_SIZE:
        M = L - WINDOW_SIZE + 1
        win = [true[:, d:d + M] for d in range(WINDOW_SIZE)]   # hoisted shifted slices
        s1 = win[0]
        for d in range(1, WINDOW_SIZE):
            s1 = s1 + win[d]
        win_mean = s1 / float(WINDOW_SIZE)
        ssd = jnp.zeros((B, M), dtype=jnp.float32)
        for d in range(WINDOW_SIZE):                           # two-pass variance
            dev = win[d] - win_mean
            ssd = ssd + dev * dev
        local_var = ssd / float(WINDOW_SIZE - 1)               # [B, M]
        max_var = jnp.max(local_var, axis=1, keepdims=True)
        norm_var = local_var / (max_var + 1e-8)
        zmask = (norm_var < VARIANCE_THRESHOLD).astype(jnp.float32)   # [B, M]
        pad_l = WINDOW_SIZE // 2                               # 7
        pad_r = WINDOW_SIZE - pad_l - 1                        # 7
        hz = jnp.concatenate(                                  # replicate pad -> [B, L]
            [jnp.broadcast_to(zmask[:, :1], (B, pad_l)),
             zmask,
             jnp.broadcast_to(zmask[:, M - 1:], (B, pad_r))], axis=1)
        zone = hz[:, 1:]                                       # [B, L-1], 0/1 float
    else:
        zone = jnp.zeros((B, L - 1), dtype=jnp.float32)

    not_zone = 1.0 - zone
    homogeneous_loss = (jnp.sum(zone * pd_sq) / denom) * HOMOGENEOUS_PENALTY
    # at zone positions torch's excess == relu(-1.5*threshold) == 0 exactly, so the
    # excess**2 sum equals the non-zone-masked sum of relu_sq:
    transition_loss = (jnp.sum(not_zone * relu_sq) / denom) * TRANSITION_PENALTY
    gradient_loss = homogeneous_loss + transition_loss

    tp_cnt = jnp.sum(not_zone)
    tp_sum = jnp.sum(not_zone * err1)
    transition_preservation = jnp.where(
        tp_cnt > 0.0, (tp_sum / jnp.maximum(tp_cnt, 1.0)) * 0.5, 0.0)

    # ---------------- spike detection (median / MAD of 2nd differences) ----------
    if L >= 3:
        n = L - 2
        k = (n - 1) // 2                                # torch.median = lower median
        sd = fd[:, 1:] - fd[:, :-1]                     # [B, n] == temporal 2nd diff
        abs_sd = jnp.abs(sd)
        med = _row_kth_smallest_nonneg(abs_sd, k)                        # [B, 1]
        mad = _row_kth_smallest_nonneg(jnp.abs(sd - med), k)             # [B, 1]
        det = (abs_sd > med + SPIKE_THRESHOLD * mad).astype(jnp.float32)  # [B, n]
        # F.max_pool1d(kernel=3, stride=1, pad=1): 3-tap max via lane shifts.
        if n > 1:
            zcol = jnp.zeros((B, 1), dtype=jnp.float32)
            d_left = jnp.concatenate([det[:, 1:], zcol], axis=1)
            d_right = jnp.concatenate([zcol, det[:, :-1]], axis=1)
            dil = jnp.maximum(det, jnp.maximum(d_left, d_right))
        else:
            dil = det
        err_mid = err1[:, :-1]                          # errors at seq positions 1..L-2
        spike_cnt = jnp.sum(dil)
        spike_sum = jnp.sum(dil * err_mid)
        spike_penalty = jnp.where(
            spike_cnt > 0.0, (spike_sum / jnp.maximum(spike_cnt, 1.0)) * 5.0, 0.0)
        # temporal smoothing: boosted[:,2:] - 2*boosted[:,1:-1] + boosted[:,:-2] == sd
        temporal_loss = jnp.mean(sd * sd) * TEMPORAL_WEIGHT
    else:
        spike_penalty = 0.0
        temporal_loss = 0.0

    total = (mse_loss + pattern_loss * 0.3 + gradient_loss * GRADIENT_WEIGHT
             + spike_penalty * 0.8 + temporal_loss + transition_preservation)
    out_ref[0, 0] = total


def enhanced_spike_control_loss(impedance_pred, impedance_true):
    assert impedance_pred.shape == impedance_true.shape
    pred = impedance_pred.astype(jnp.float32)
    true = impedance_true.astype(jnp.float32)
    # Single invocation: footprint is now O(B*L) (no quadratic temporaries), so even
    # L in the thousands fits comfortably in VMEM on v5e/v6e/v7x.
    # TODO(synk): for very large batches, tile B over a parallel grid axis with
    # per-tile partial sums to pipeline HBM loads and use both v7x TensorCores.
    out = pl.pallas_call(
        _enhanced_spike_loss_kernel,
        out_shape=jax.ShapeDtypeStruct((1, 1), jnp.float32),
        in_specs=[pl.BlockSpec(memory_space=pltpu.MemorySpace.VMEM),
                  pl.BlockSpec(memory_space=pltpu.MemorySpace.VMEM)],
        out_specs=pl.BlockSpec(memory_space=pltpu.MemorySpace.SMEM),
    )(pred, true)
    return out[0, 0]


if __name__ == "__main__":
    key = jax.random.PRNGKey(0)
    k1, k2 = jax.random.split(key)
    B, L = 2, 64   # seq_len > 15 so the homogeneous-zone path is exercised
    impedance_true = jax.random.uniform(k1, (B, L), jnp.float32, 0.0, 80000.0)
    impedance_pred = impedance_true + 2000.0 * jax.random.normal(k2, (B, L), jnp.float32)

    loss = jax.jit(enhanced_spike_control_loss)(impedance_pred, impedance_true)
    jax.block_until_ready(loss)
    print("KERNEL_OK")
</pallas_src>

<mosaic_0001>
module attributes {stable_mosaic.version = 11 : i64} {
  func.func @_enhanced_spike_loss_kernel(%arg0: memref<2x64xf32, #tpu.memory_space<vmem>>, %arg1: memref<2x64xf32, #tpu.memory_space<vmem>>, %arg2: memref<1x1xf32, #tpu.memory_space<smem>>) attributes {dimension_semantics = [], scalar_prefetch = 0 : i64, scratch_operands = 0 : i64, tpu.core_type = #tpu.core_type<tc>} {
    %c0 = arith.constant 0 : index
    %c0_0 = arith.constant 0 : index
    %0 = vector.load %arg0[%c0, %c0_0] : memref<2x64xf32, #tpu.memory_space<vmem>>, vector<2x64xf32>
    %c0_1 = arith.constant 0 : index
    %c0_2 = arith.constant 0 : index
    %1 = vector.load %arg1[%c0_1, %c0_2] : memref<2x64xf32, #tpu.memory_space<vmem>>, vector<2x64xf32>
    %2 = vector.shape_cast %1 : vector<2x64xf32> to vector<1x2x64xf32>
    %cst = arith.constant dense<0xFF800000> : vector<1xf32>
    %3 = vector.multi_reduction <maximumf>, %2, %cst [1, 2] : vector<1x2x64xf32> to vector<1xf32>
    %4 = vector.shape_cast %3 : vector<1xf32> to vector<1x1x1xf32>
    %5 = vector.extract %4[0, 0, 0] : f32 from vector<1x1x1xf32>
    %cst_3 = arith.constant 5.000000e+04 : f32
    %6 = arith.cmpf ogt, %5, %cst_3 : f32
    %cst_4 = arith.constant 5.000000e+04 : f32
    %7 = vector.broadcast %cst_4 : f32 to vector<2x64xf32>
    %8 = arith.cmpf ogt, %1, %7 : vector<2x64xf32>
    %cst_5 = arith.constant 4.000000e+04 : f32
    %9 = vector.broadcast %cst_5 : f32 to vector<2x64xf32>
    %10 = arith.cmpf ogt, %1, %9 : vector<2x64xf32>
    %cst_6 = arith.constant 5.000000e+04 : f32
    %11 = vector.broadcast %cst_6 : f32 to vector<2x64xf32>
    %12 = arith.cmpf ole, %1, %11 : vector<2x64xf32>
    %13 = arith.andi %10, %12 : vector<2x64xi1>
    %cst_7 = arith.constant 4.000000e+04 : f32
    %14 = vector.broadcast %cst_7 : f32 to vector<2x64xf32>
    %15 = arith.subf %1, %14 : vector<2x64xf32>
    %cst_8 = arith.constant 1.000000e+04 : f32
    %16 = vector.broadcast %cst_8 : f32 to vector<2x64xf32>
    %17 = arith.divf %15, %16 : vector<2x64xf32>
    %cst_9 = arith.constant 2.000000e-01 : f32
    %18 = vector.broadcast %cst_9 : f32 to vector<2x64xf32>
    %19 = arith.mulf %18, %17 : vector<2x64xf32>
    %cst_10 = arith.constant 1.000000e+00 : f32
    %20 = vector.broadcast %cst_10 : f32 to vector<2x64xf32>
    %21 = arith.addf %20, %19 : vector<2x64xf32>
    %cst_11 = arith.constant 1.000000e+00 : f32
    %22 = vector.broadcast %cst_11 : f32 to vector<2x64xf32>
    %23 = arith.select %13, %21, %22 : vector<2x64xi1>, vector<2x64xf32>
    %cst_12 = arith.constant 1.200000e+00 : f32
    %24 = vector.broadcast %cst_12 : f32 to vector<2x64xf32>
    %25 = arith.select %8, %24, %23 : vector<2x64xi1>, vector<2x64xf32>
    %26 = arith.mulf %0, %25 : vector<2x64xf32>
    %27 = arith.select %6, %26, %0 : vector<2x64xf32>
    %28 = arith.subf %27, %1 : vector<2x64xf32>
    %29 = arith.mulf %28, %28 : vector<2x64xf32>
    %30 = vector.shape_cast %29 : vector<2x64xf32> to vector<1x2x64xf32>
    %cst_13 = arith.constant dense<0.000000e+00> : vector<1xf32>
    %31 = vector.multi_reduction <add>, %30, %cst_13 [1, 2] : vector<1x2x64xf32> to vector<1xf32>
    %32 = vector.shape_cast %31 : vector<1xf32> to vector<1x1x1xf32>
    %33 = vector.extract %32[0, 0, 0] : f32 from vector<1x1x1xf32>
    %cst_14 = arith.constant 1.280000e+02 : f32
    %34 = arith.divf %33, %cst_14 : f32
    %35 = vector.extract_strided_slice %27 {offsets = [0, 1], sizes = [2, 63], strides = [1, 1]} : vector<2x64xf32> to vector<2x63xf32>
    %36 = vector.extract_strided_slice %27 {offsets = [0, 0], sizes = [2, 63], strides = [1, 1]} : vector<2x64xf32> to vector<2x63xf32>
    %37 = arith.subf %35, %36 : vector<2x63xf32>
    %38 = math.absf %37 : vector<2x63xf32>
    %39 = vector.extract_strided_slice %1 {offsets = [0, 1], sizes = [2, 63], strides = [1, 1]} : vector<2x64xf32> to vector<2x63xf32>
    %40 = vector.extract_strided_slice %1 {offsets = [0, 0], sizes = [2, 63], strides = [1, 1]} : vector<2x64xf32> to vector<2x63xf32>
    %41 = arith.subf %39, %40 : vector<2x63xf32>
    %42 = math.absf %41 : vector<2x63xf32>
    %43 = arith.subf %38, %42 : vector<2x63xf32>
    %44 = arith.mulf %43, %43 : vector<2x63xf32>
    %45 = vector.shape_cast %44 : vector<2x63xf32> to vector<1x2x63xf32>
    %cst_15 = arith.constant dense<0.000000e+00> : vector<1xf32>
    %46 = vector.multi_reduction <add>, %45, %cst_15 [1, 2] : vector<1x2x63xf32> to vector<1xf32>
    %47 = vector.shape_cast %46 : vector<1xf32> to vector<1x1x1xf32>
    %48 = vector.extract %47[0, 0, 0] : f32 from vector<1x1x1xf32>
    %cst_16 = arith.constant 1.260000e+02 : f32
    %49 = arith.divf %48, %cst_16 : f32
    %cst_17 = arith.constant 1.200000e-01 : f32
    %50 = vector.broadcast %cst_17 : f32 to vector<2x63xf32>
    %51 = arith.maximumf %42, %50 : vector<2x63xf32>
    %cst_18 = arith.constant 1.500000e+00 : f32
    %52 = vector.broadcast %cst_18 : f32 to vector<2x63xf32>
    %53 = arith.mulf %52, %51 : vector<2x63xf32>
    %54 = arith.subf %38, %53 : vector<2x63xf32>
    %cst_19 = arith.constant 0.000000e+00 : f32
    %55 = vector.broadcast %cst_19 : f32 to vector<2x63xf32>
    %56 = arith.maximumf %54, %55 : vector<2x63xf32>
    %57 = arith.mulf %56, %56 : vector<2x63xf32>
    %58 = arith.mulf %38, %38 : vector<2x63xf32>
    %59 = vector.extract_strided_slice %27 {offsets = [0, 1], sizes = [2, 63], strides = [1, 1]} : vector<2x64xf32> to vector<2x63xf32>
    %60 = vector.extract_strided_slice %1 {offsets = [0, 1], sizes = [2, 63], strides = [1, 1]} : vector<2x64xf32> to vector<2x63xf32>
    %61 = arith.subf %59, %60 : vector<2x63xf32>
    %62 = arith.mulf %61, %61 : vector<2x63xf32>
    %63 = vector.extract_strided_slice %1 {offsets = [0, 0], sizes = [2, 50], strides = [1, 1]} : vector<2x64xf32> to vector<2x50xf32>
    %64 = vector.extract_strided_slice %1 {offsets = [0, 1], sizes = [2, 50], strides = [1, 1]} : vector<2x64xf32> to vector<2x50xf32>
    %65 = vector.extract_strided_slice %1 {offsets = [0, 2], sizes = [2, 50], strides = [1, 1]} : vector<2x64xf32> to vector<2x50xf32>
    %66 = vector.extract_strided_slice %1 {offsets = [0, 3], sizes = [2, 50], strides = [1, 1]} : vector<2x64xf32> to vector<2x50xf32>
    %67 = vector.extract_strided_slice %1 {offsets = [0, 4], sizes = [2, 50], strides = [1, 1]} : vector<2x64xf32> to vector<2x50xf32>
    %68 = vector.extract_strided_slice %1 {offsets = [0, 5], sizes = [2, 50], strides = [1, 1]} : vector<2x64xf32> to vector<2x50xf32>
    %69 = vector.extract_strided_slice %1 {offsets = [0, 6], sizes = [2, 50], strides = [1, 1]} : vector<2x64xf32> to vector<2x50xf32>
    %70 = vector.extract_strided_slice %1 {offsets = [0, 7], sizes = [2, 50], strides = [1, 1]} : vector<2x64xf32> to vector<2x50xf32>
    %71 = vector.extract_strided_slice %1 {offsets = [0, 8], sizes = [2, 50], strides = [1, 1]} : vector<2x64xf32> to vector<2x50xf32>
    %72 = vector.extract_strided_slice %1 {offsets = [0, 9], sizes = [2, 50], strides = [1, 1]} : vector<2x64xf32> to vector<2x50xf32>
    %73 = vector.extract_strided_slice %1 {offsets = [0, 10], sizes = [2, 50], strides = [1, 1]} : vector<2x64xf32> to vector<2x50xf32>
    %74 = vector.extract_strided_slice %1 {offsets = [0, 11], sizes = [2, 50], strides = [1, 1]} : vector<2x64xf32> to vector<2x50xf32>
    %75 = vector.extract_strided_slice %1 {offsets = [0, 12], sizes = [2, 50], strides = [1, 1]} : vector<2x64xf32> to vector<2x50xf32>
    %76 = vector.extract_strided_slice %1 {offsets = [0, 13], sizes = [2, 50], strides = [1, 1]} : vector<2x64xf32> to vector<2x50xf32>
    %77 = vector.extract_strided_slice %1 {offsets = [0, 14], sizes = [2, 50], strides = [1, 1]} : vector<2x64xf32> to vector<2x50xf32>
    %78 = arith.addf %63, %64 : vector<2x50xf32>
    %79 = arith.addf %78, %65 : vector<2x50xf32>
    %80 = arith.addf %79, %66 : vector<2x50xf32>
    %81 = arith.addf %80, %67 : vector<2x50xf32>
    %82 = arith.addf %81, %68 : vector<2x50xf32>
    %83 = arith.addf %82, %69 : vector<2x50xf32>
    %84 = arith.addf %83, %70 : vector<2x50xf32>
    %85 = arith.addf %84, %71 : vector<2x50xf32>
    %86 = arith.addf %85, %72 : vector<2x50xf32>
    %87 = arith.addf %86, %73 : vector<2x50xf32>
    %88 = arith.addf %87, %74 : vector<2x50xf32>
    %89 = arith.addf %88, %75 : vector<2x50xf32>
    %90 = arith.addf %89, %76 : vector<2x50xf32>
    %91 = arith.addf %90, %77 : vector<2x50xf32>
    %cst_20 = arith.constant 1.500000e+01 : f32
    %92 = vector.broadcast %cst_20 : f32 to vector<2x50xf32>
    %93 = arith.divf %91, %92 : vector<2x50xf32>
    %cst_21 = arith.constant 0.000000e+00 : f32
    %94 = vector.broadcast %cst_21 : f32 to vector<2x50xf32>
    %95 = arith.subf %63, %93 : vector<2x50xf32>
    %96 = arith.mulf %95, %95 : vector<2x50xf32>
    %97 = arith.addf %94, %96 : vector<2x50xf32>
    %98 = arith.subf %64, %93 : vector<2x50xf32>
    %99 = arith.mulf %98, %98 : vector<2x50xf32>
    %100 = arith.addf %97, %99 : vector<2x50xf32>
    %101 = arith.subf %65, %93 : vector<2x50xf32>
    %102 = arith.mulf %101, %101 : vector<2x50xf32>
    %103 = arith.addf %100, %102 : vector<2x50xf32>
    %104 = arith.subf %66, %93 : vector<2x50xf32>
    %105 = arith.mulf %104, %104 : vector<2x50xf32>
    %106 = arith.addf %103, %105 : vector<2x50xf32>
    %107 = arith.subf %67, %93 : vector<2x50xf32>
    %108 = arith.mulf %107, %107 : vector<2x50xf32>
    %109 = arith.addf %106, %108 : vector<2x50xf32>
    %110 = arith.subf %68, %93 : vector<2x50xf32>
    %111 = arith.mulf %110, %110 : vector<2x50xf32>
    %112 = arith.addf %109, %111 : vector<2x50xf32>
    %113 = arith.subf %69, %93 : vector<2x50xf32>
    %114 = arith.mulf %113, %113 : vector<2x50xf32>
    %115 = arith.addf %112, %114 : vector<2x50xf32>
    %116 = arith.subf %70, %93 : vector<2x50xf32>
    %117 = arith.mulf %116, %116 : vector<2x50xf32>
    %118 = arith.addf %115, %117 : vector<2x50xf32>
    %119 = arith.subf %71, %93 : vector<2x50xf32>
    %120 = arith.mulf %119, %119 : vector<2x50xf32>
    %121 = arith.addf %118, %120 : vector<2x50xf32>
    %122 = arith.subf %72, %93 : vector<2x50xf32>
    %123 = arith.mulf %122, %122 : vector<2x50xf32>
    %124 = arith.addf %121, %123 : vector<2x50xf32>
    %125 = arith.subf %73, %93 : vector<2x50xf32>
    %126 = arith.mulf %125, %125 : vector<2x50xf32>
    %127 = arith.addf %124, %126 : vector<2x50xf32>
    %128 = arith.subf %74, %93 : vector<2x50xf32>
    %129 = arith.mulf %128, %128 : vector<2x50xf32>
    %130 = arith.addf %127, %129 : vector<2x50xf32>
    %131 = arith.subf %75, %93 : vector<2x50xf32>
    %132 = arith.mulf %131, %131 : vector<2x50xf32>
    %133 = arith.addf %130, %132 : vector<2x50xf32>
    %134 = arith.subf %76, %93 : vector<2x50xf32>
    %135 = arith.mulf %134, %134 : vector<2x50xf32>
    %136 = arith.addf %133, %135 : vector<2x50xf32>
    %137 = arith.subf %77, %93 : vector<2x50xf32>
    %138 = arith.mulf %137, %137 : vector<2x50xf32>
    %139 = arith.addf %136, %138 : vector<2x50xf32>
    %cst_22 = arith.constant 1.400000e+01 : f32
    %140 = vector.broadcast %cst_22 : f32 to vector<2x50xf32>
    %141 = arith.divf %139, %140 : vector<2x50xf32>
    %cst_23 = arith.constant dense<0xFF800000> : vector<2xf32>
    %142 = vector.multi_reduction <maximumf>, %141, %cst_23 [1] : vector<2x50xf32> to vector<2xf32>
    %143 = vector.shape_cast %142 : vector<2xf32> to vector<2x1xf32>
    %cst_24 = arith.constant 9.99999993E-9 : f32
    %144 = vector.broadcast %cst_24 : f32 to vector<2x1xf32>
    %145 = arith.addf %143, %144 : vector<2x1xf32>
    %146 = vector.broadcast %145 : vector<2x1xf32> to vector<2x50xf32>
    %147 = arith.divf %141, %146 : vector<2x50xf32>
    %cst_25 = arith.constant 5.000000e-02 : f32
    %148 = vector.broadcast %cst_25 : f32 to vector<2x50xf32>
    %149 = arith.cmpf olt, %147, %148 : vector<2x50xf32>
    %150 = arith.extui %149 : vector<2x50xi1> to vector<2x50xi32>
    %151 = arith.sitofp %150 : vector<2x50xi32> to vector<2x50xf32>
    %152 = vector.extract_strided_slice %151 {offsets = [0, 0], sizes = [2, 1], strides = [1, 1]} : vector<2x50xf32> to vector<2x1xf32>
    %153 = vector.shape_cast %152 : vector<2x1xf32> to vector<2x1xf32>
    %154 = vector.broadcast %153 : vector<2x1xf32> to vector<2x7xf32>
    %155 = vector.extract_strided_slice %151 {offsets = [0, 49], sizes = [2, 1], strides = [1, 1]} : vector<2x50xf32> to vector<2x1xf32>
    %156 = vector.shape_cast %155 : vector<2x1xf32> to vector<2x1xf32>
    %157 = vector.broadcast %156 : vector<2x1xf32> to vector<2x7xf32>
    %158 = tpu.concatenate %154, %151, %157 in 1 : vector<2x7xf32>, vector<2x50xf32>, vector<2x7xf32> -> vector<2x64xf32>
    %159 = vector.extract_strided_slice %158 {offsets = [0, 1], sizes = [2, 63], strides = [1, 1]} : vector<2x64xf32> to vector<2x63xf32>
    %cst_26 = arith.constant 1.000000e+00 : f32
    %160 = vector.broadcast %cst_26 : f32 to vector<2x63xf32>
    %161 = arith.subf %160, %159 : vector<2x63xf32>
    %162 = arith.mulf %159, %58 : vector<2x63xf32>
    %163 = vector.shape_cast %162 : vector<2x63xf32> to vector<1x2x63xf32>
    %cst_27 = arith.constant dense<0.000000e+00> : vector<1xf32>
    %164 = vector.multi_reduction <add>, %163, %cst_27 [1, 2] : vector<1x2x63xf32> to vector<1xf32>
    %165 = vector.shape_cast %164 : vector<1xf32> to vector<1x1x1xf32>
    %166 = vector.extract %165[0, 0, 0] : f32 from vector<1x1x1xf32>
    %cst_28 = arith.constant 1.260000e+02 : f32
    %167 = arith.divf %166, %cst_28 : f32
    %cst_29 = arith.constant 3.000000e+00 : f32
    %168 = arith.mulf %167, %cst_29 : f32
    %169 = arith.mulf %161, %57 : vector<2x63xf32>
    %170 = vector.shape_cast %169 : vector<2x63xf32> to vector<1x2x63xf32>
    %cst_30 = arith.constant dense<0.000000e+00> : vector<1xf32>
    %171 = vector.multi_reduction <add>, %170, %cst_30 [1, 2] : vector<1x2x63xf32> to vector<1xf32>
    %172 = vector.shape_cast %171 : vector<1xf32> to vector<1x1x1xf32>
    %173 = vector.extract %172[0, 0, 0] : f32 from vector<1x1x1xf32>
    %cst_31 = arith.constant 1.260000e+02 : f32
    %174 = arith.divf %173, %cst_31 : f32
    %cst_32 = arith.constant 4.000000e-01 : f32
    %175 = arith.mulf %174, %cst_32 : f32
    %176 = arith.addf %168, %175 : f32
    %177 = vector.shape_cast %161 : vector<2x63xf32> to vector<1x2x63xf32>
    %cst_33 = arith.constant dense<0.000000e+00> : vector<1xf32>
    %178 = vector.multi_reduction <add>, %177, %cst_33 [1, 2] : vector<1x2x63xf32> to vector<1xf32>
    %179 = vector.shape_cast %178 : vector<1xf32> to vector<1x1x1xf32>
    %180 = vector.extract %179[0, 0, 0] : f32 from vector<1x1x1xf32>
    %181 = arith.mulf %161, %62 : vector<2x63xf32>
    %182 = vector.shape_cast %181 : vector<2x63xf32> to vector<1x2x63xf32>
    %cst_34 = arith.constant dense<0.000000e+00> : vector<1xf32>
    %183 = vector.multi_reduction <add>, %182, %cst_34 [1, 2] : vector<1x2x63xf32> to vector<1xf32>
    %184 = vector.shape_cast %183 : vector<1xf32> to vector<1x1x1xf32>
    %185 = vector.extract %184[0, 0, 0] : f32 from vector<1x1x1xf32>
    %cst_35 = arith.constant 0.000000e+00 : f32
    %186 = arith.cmpf ogt, %180, %cst_35 : f32
    %cst_36 = arith.constant 1.000000e+00 : f32
    %187 = arith.maximumf %180, %cst_36 : f32
    %188 = arith.divf %185, %187 : f32
    %cst_37 = arith.constant 5.000000e-01 : f32
    %189 = arith.mulf %188, %cst_37 : f32
    %cst_38 = arith.constant 0.000000e+00 : f32
    %190 = arith.select %186, %189, %cst_38 : f32
    %191 = vector.extract_strided_slice %37 {offsets = [0, 1], sizes = [2, 62], strides = [1, 1]} : vector<2x63xf32> to vector<2x62xf32>
    %192 = vector.extract_strided_slice %37 {offsets = [0, 0], sizes = [2, 62], strides = [1, 1]} : vector<2x63xf32> to vector<2x62xf32>
    %193 = arith.subf %191, %192 : vector<2x62xf32>
    %194 = math.absf %193 : vector<2x62xf32>
    %195 = tpu.bitcast %194 : vector<2x62xf32> -> vector<2x62xi32>
    %c0_i32 = arith.constant 0 : i32
    %196 = vector.broadcast %c0_i32 : i32 to vector<2x1xi32>
    %cst_39 = arith.constant 3.000000e+01 : f32
    %197 = vector.broadcast %cst_39 : f32 to vector<2x1xf32>
    %c31_i32 = arith.constant 31 : i32
    %198 = vector.broadcast %c31_i32 : i32 to vector<2x62xi32>
    %199 = arith.shrsi %195, %198 : vector<2x62xi32>
    %c31_i32_40 = arith.constant 31 : i32
    %200 = vector.broadcast %c31_i32_40 : i32 to vector<2x1xi32>
    %201 = arith.shrsi %196, %200 : vector<2x1xi32>
    %202 = vector.broadcast %201 : vector<2x1xi32> to vector<2x62xi32>
    %203 = arith.cmpi eq, %199, %202 : vector<2x62xi32>
    %c30_i32 = arith.constant 30 : i32
    %204 = vector.broadcast %c30_i32 : i32 to vector<2x62xi32>
    %205 = arith.shrsi %195, %204 : vector<2x62xi32>
    %c1_i32 = arith.constant 1 : i32
    %206 = vector.broadcast %c1_i32 : i32 to vector<2x62xi32>
    %207 = arith.andi %205, %206 : vector<2x62xi32>
    %c0_i32_41 = arith.constant 0 : i32
    %208 = vector.broadcast %c0_i32_41 : i32 to vector<2x62xi32>
    %209 = arith.cmpi eq, %207, %208 : vector<2x62xi32>
    %210 = arith.andi %203, %209 : vector<2x62xi1>
    %211 = arith.extui %210 : vector<2x62xi1> to vector<2x62xi32>
    %212 = arith.sitofp %211 : vector<2x62xi32> to vector<2x62xf32>
    %cst_42 = arith.constant dense<0.000000e+00> : vector<2xf32>
    %213 = vector.multi_reduction <add>, %212, %cst_42 [1] : vector<2x62xf32> to vector<2xf32>
    %214 = vector.shape_cast %213 : vector<2xf32> to vector<2x1xf32>
    %215 = arith.cmpf oge, %197, %214 : vector<2x1xf32>
    %c1073741824_i32 = arith.constant 1073741824 : i32
    %216 = vector.broadcast %c1073741824_i32 : i32 to vector<2x1xi32>
    %217 = arith.ori %196, %216 : vector<2x1xi32>
    %218 = arith.select %215, %217, %196 : vector<2x1xi1>, vector<2x1xi32>
    %219 = arith.subf %197, %214 : vector<2x1xf32>
    %220 = arith.select %215, %219, %197 : vector<2x1xi1>, vector<2x1xf32>
    %c30_i32_43 = arith.constant 30 : i32
    %221 = vector.broadcast %c30_i32_43 : i32 to vector<2x62xi32>
    %222 = arith.shrsi %195, %221 : vector<2x62xi32>
    %c30_i32_44 = arith.constant 30 : i32
    %223 = vector.broadcast %c30_i32_44 : i32 to vector<2x1xi32>
    %224 = arith.shrsi %218, %223 : vector<2x1xi32>
    %225 = vector.broadcast %224 : vector<2x1xi32> to vector<2x62xi32>
    %226 = arith.cmpi eq, %222, %225 : vector<2x62xi32>
    %c29_i32 = arith.constant 29 : i32
    %227 = vector.broadcast %c29_i32 : i32 to vector<2x62xi32>
    %228 = arith.shrsi %195, %227 : vector<2x62xi32>
    %c1_i32_45 = arith.constant 1 : i32
    %229 = vector.broadcast %c1_i32_45 : i32 to vector<2x62xi32>
    %230 = arith.andi %228, %229 : vector<2x62xi32>
    %c0_i32_46 = arith.constant 0 : i32
    %231 = vector.broadcast %c0_i32_46 : i32 to vector<2x62xi32>
    %232 = arith.cmpi eq, %230, %231 : vector<2x62xi32>
    %233 = arith.andi %226, %232 : vector<2x62xi1>
    %234 = arith.extui %233 : vector<2x62xi1> to vector<2x62xi32>
    %235 = arith.sitofp %234 : vector<2x62xi32> to vector<2x62xf32>
    %cst_47 = arith.constant dense<0.000000e+00> : vector<2xf32>
    %236 = vector.multi_reduction <add>, %235, %cst_47 [1] : vector<2x62xf32> to vector<2xf32>
    %237 = vector.shape_cast %236 : vector<2xf32> to vector<2x1xf32>
    %238 = arith.cmpf oge, %220, %237 : vector<2x1xf32>
    %c536870912_i32 = arith.constant 536870912 : i32
    %239 = vector.broadcast %c536870912_i32 : i32 to vector<2x1xi32>
    %240 = arith.ori %218, %239 : vector<2x1xi32>
    %241 = arith.select %238, %240, %218 : vector<2x1xi1>, vector<2x1xi32>
    %242 = arith.subf %220, %237 : vector<2x1xf32>
    %243 = arith.select %238, %242, %220 : vector<2x1xi1>, vector<2x1xf32>
    %c29_i32_48 = arith.constant 29 : i32
    %244 = vector.broadcast %c29_i32_48 : i32 to vector<2x62xi32>
    %245 = arith.shrsi %195, %244 : vector<2x62xi32>
    %c29_i32_49 = arith.constant 29 : i32
    %246 = vector.broadcast %c29_i32_49 : i32 to vector<2x1xi32>
    %247 = arith.shrsi %241, %246 : vector<2x1xi32>
    %248 = vector.broadcast %247 : vector<2x1xi32> to vector<2x62xi32>
    %249 = arith.cmpi eq, %245, %248 : vector<2x62xi32>
    %c28_i32 = arith.constant 28 : i32
    %250 = vector.broadcast %c28_i32 : i32 to vector<2x62xi32>
    %251 = arith.shrsi %195, %250 : vector<2x62xi32>
    %c1_i32_50 = arith.constant 1 : i32
    %252 = vector.broadcast %c1_i32_50 : i32 to vector<2x62xi32>
    %253 = arith.andi %251, %252 : vector<2x62xi32>
    %c0_i32_51 = arith.constant 0 : i32
    %254 = vector.broadcast %c0_i32_51 : i32 to vector<2x62xi32>
    %255 = arith.cmpi eq, %253, %254 : vector<2x62xi32>
    %256 = arith.andi %249, %255 : vector<2x62xi1>
    %257 = arith.extui %256 : vector<2x62xi1> to vector<2x62xi32>
    %258 = arith.sitofp %257 : vector<2x62xi32> to vector<2x62xf32>
    %cst_52 = arith.constant dense<0.000000e+00> : vector<2xf32>
    %259 = vector.multi_reduction <add>, %258, %cst_52 [1] : vector<2x62xf32> to vector<2xf32>
    %260 = vector.shape_cast %259 : vector<2xf32> to vector<2x1xf32>
    %261 = arith.cmpf oge, %243, %260 : vector<2x1xf32>
    %c268435456_i32 = arith.constant 268435456 : i32
    %262 = vector.broadcast %c268435456_i32 : i32 to vector<2x1xi32>
    %263 = arith.ori %241, %262 : vector<2x1xi32>
    %264 = arith.select %261, %263, %241 : vector<2x1xi1>, vector<2x1xi32>
    %265 = arith.subf %243, %260 : vector<2x1xf32>
    %266 = arith.select %261, %265, %243 : vector<2x1xi1>, vector<2x1xf32>
    %c28_i32_53 = arith.constant 28 : i32
    %267 = vector.broadcast %c28_i32_53 : i32 to vector<2x62xi32>
    %268 = arith.shrsi %195, %267 : vector<2x62xi32>
    %c28_i32_54 = arith.constant 28 : i32
    %269 = vector.broadcast %c28_i32_54 : i32 to vector<2x1xi32>
    %270 = arith.shrsi %264, %269 : vector<2x1xi32>
    %271 = vector.broadcast %270 : vector<2x1xi32> to vector<2x62xi32>
    %272 = arith.cmpi eq, %268, %271 : vector<2x62xi32>
    %c27_i32 = arith.constant 27 : i32
    %273 = vector.broadcast %c27_i32 : i32 to vector<2x62xi32>
    %274 = arith.shrsi %195, %273 : vector<2x62xi32>
    %c1_i32_55 = arith.constant 1 : i32
    %275 = vector.broadcast %c1_i32_55 : i32 to vector<2x62xi32>
    %276 = arith.andi %274, %275 : vector<2x62xi32>
    %c0_i32_56 = arith.constant 0 : i32
    %277 = vector.broadcast %c0_i32_56 : i32 to vector<2x62xi32>
    %278 = arith.cmpi eq, %276, %277 : vector<2x62xi32>
    %279 = arith.andi %272, %278 : vector<2x62xi1>
    %280 = arith.extui %279 : vector<2x62xi1> to vector<2x62xi32>
    %281 = arith.sitofp %280 : vector<2x62xi32> to vector<2x62xf32>
    %cst_57 = arith.constant dense<0.000000e+00> : vector<2xf32>
    %282 = vector.multi_reduction <add>, %281, %cst_57 [1] : vector<2x62xf32> to vector<2xf32>
    %283 = vector.shape_cast %282 : vector<2xf32> to vector<2x1xf32>
    %284 = arith.cmpf oge, %266, %283 : vector<2x1xf32>
    %c134217728_i32 = arith.constant 134217728 : i32
    %285 = vector.broadcast %c134217728_i32 : i32 to vector<2x1xi32>
    %286 = arith.ori %264, %285 : vector<2x1xi32>
    %287 = arith.select %284, %286, %264 : vector<2x1xi1>, vector<2x1xi32>
    %288 = arith.subf %266, %283 : vector<2x1xf32>
    %289 = arith.select %284, %288, %266 : vector<2x1xi1>, vector<2x1xf32>
    %c27_i32_58 = arith.constant 27 : i32
    %290 = vector.broadcast %c27_i32_58 : i32 to vector<2x62xi32>
    %291 = arith.shrsi %195, %290 : vector<2x62xi32>
    %c27_i32_59 = arith.constant 27 : i32
    %292 = vector.broadcast %c27_i32_59 : i32 to vector<2x1xi32>
    %293 = arith.shrsi %287, %292 : vector<2x1xi32>
    %294 = vector.broadcast %293 : vector<2x1xi32> to vector<2x62xi32>
    %295 = arith.cmpi eq, %291, %294 : vector<2x62xi32>
    %c26_i32 = arith.constant 26 : i32
    %296 = vector.broadcast %c26_i32 : i32 to vector<2x62xi32>
    %297 = arith.shrsi %195, %296 : vector<2x62xi32>
    %c1_i32_60 = arith.constant 1 : i32
    %298 = vector.broadcast %c1_i32_60 : i32 to vector<2x62xi32>
    %299 = arith.andi %297, %298 : vector<2x62xi32>
    %c0_i32_61 = arith.constant 0 : i32
    %300 = vector.broadcast %c0_i32_61 : i32 to vector<2x62xi32>
    %301 = arith.cmpi eq, %299, %300 : vector<2x62xi32>
    %302 = arith.andi %295, %301 : vector<2x62xi1>
    %303 = arith.extui %302 : vector<2x62xi1> to vector<2x62xi32>
    %304 = arith.sitofp %303 : vector<2x62xi32> to vector<2x62xf32>
    %cst_62 = arith.constant dense<0.000000e+00> : vector<2xf32>
    %305 = vector.multi_reduction <add>, %304, %cst_62 [1] : vector<2x62xf32> to vector<2xf32>
    %306 = vector.shape_cast %305 : vector<2xf32> to vector<2x1xf32>
    %307 = arith.cmpf oge, %289, %306 : vector<2x1xf32>
    %c67108864_i32 = arith.constant 67108864 : i32
    %308 = vector.broadcast %c67108864_i32 : i32 to vector<2x1xi32>
    %309 = arith.ori %287, %308 : vector<2x1xi32>
    %310 = arith.select %307, %309, %287 : vector<2x1xi1>, vector<2x1xi32>
    %311 = arith.subf %289, %306 : vector<2x1xf32>
    %312 = arith.select %307, %311, %289 : vector<2x1xi1>, vector<2x1xf32>
    %c26_i32_63 = arith.constant 26 : i32
    %313 = vector.broadcast %c26_i32_63 : i32 to vector<2x62xi32>
    %314 = arith.shrsi %195, %313 : vector<2x62xi32>
    %c26_i32_64 = arith.constant 26 : i32
    %315 = vector.broadcast %c26_i32_64 : i32 to vector<2x1xi32>
    %316 = arith.shrsi %310, %315 : vector<2x1xi32>
    %317 = vector.broadcast %316 : vector<2x1xi32> to vector<2x62xi32>
    %318 = arith.cmpi eq, %314, %317 : vector<2x62xi32>
    %c25_i32 = arith.constant 25 : i32
    %319 = vector.broadcast %c25_i32 : i32 to vector<2x62xi32>
    %320 = arith.shrsi %195, %319 : vector<2x62xi32>
    %c1_i32_65 = arith.constant 1 : i32
    %321 = vector.broadcast %c1_i32_65 : i32 to vector<2x62xi32>
    %322 = arith.andi %320, %321 : vector<2x62xi32>
    %c0_i32_66 = arith.constant 0 : i32
    %323 = vector.broadcast %c0_i32_66 : i32 to vector<2x62xi32>
    %324 = arith.cmpi eq, %322, %323 : vector<2x62xi32>
    %325 = arith.andi %318, %324 : vector<2x62xi1>
    %326 = arith.extui %325 : vector<2x62xi1> to vector<2x62xi32>
    %327 = arith.sitofp %326 : vector<2x62xi32> to vector<2x62xf32>
    %cst_67 = arith.constant dense<0.000000e+00> : vector<2xf32>
    %328 = vector.multi_reduction <add>, %327, %cst_67 [1] : vector<2x62xf32> to vector<2xf32>
    %329 = vector.shape_cast %328 : vector<2xf32> to vector<2x1xf32>
    %330 = arith.cmpf oge, %312, %329 : vector<2x1xf32>
    %c33554432_i32 = arith.constant 33554432 : i32
    %331 = vector.broadcast %c33554432_i32 : i32 to vector<2x1xi32>
    %332 = arith.ori %310, %331 : vector<2x1xi32>
    %333 = arith.select %330, %332, %310 : vector<2x1xi1>, vector<2x1xi32>
    %334 = arith.subf %312, %329 : vector<2x1xf32>
    %335 = arith.select %330, %334, %312 : vector<2x1xi1>, vector<2x1xf32>
    %c25_i32_68 = arith.constant 25 : i32
    %336 = vector.broadcast %c25_i32_68 : i32 to vector<2x62xi32>
    %337 = arith.shrsi %195, %336 : vector<2x62xi32>
    %c25_i32_69 = arith.constant 25 : i32
    %338 = vector.broadcast %c25_i32_69 : i32 to vector<2x1xi32>
    %339 = arith.shrsi %333, %338 : vector<2x1xi32>
    %340 = vector.broadcast %339 : vector<2x1xi32> to vector<2x62xi32>
    %341 = arith.cmpi eq, %337, %340 : vector<2x62xi32>
    %c24_i32 = arith.constant 24 : i32
    %342 = vector.broadcast %c24_i32 : i32 to vector<2x62xi32>
    %343 = arith.shrsi %195, %342 : vector<2x62xi32>
    %c1_i32_70 = arith.constant 1 : i32
    %344 = vector.broadcast %c1_i32_70 : i32 to vector<2x62xi32>
    %345 = arith.andi %343, %344 : vector<2x62xi32>
    %c0_i32_71 = arith.constant 0 : i32
    %346 = vector.broadcast %c0_i32_71 : i32 to vector<2x62xi32>
    %347 = arith.cmpi eq, %345, %346 : vector<2x62xi32>
    %348 = arith.andi %341, %347 : vector<2x62xi1>
    %349 = arith.extui %348 : vector<2x62xi1> to vector<2x62xi32>
    %350 = arith.sitofp %349 : vector<2x62xi32> to vector<2x62xf32>
    %cst_72 = arith.constant dense<0.000000e+00> : vector<2xf32>
    %351 = vector.multi_reduction <add>, %350, %cst_72 [1] : vector<2x62xf32> to vector<2xf32>
    %352 = vector.shape_cast %351 : vector<2xf32> to vector<2x1xf32>
    %353 = arith.cmpf oge, %335, %352 : vector<2x1xf32>
    %c16777216_i32 = arith.constant 16777216 : i32
    %354 = vector.broadcast %c16777216_i32 : i32 to vector<2x1xi32>
    %355 = arith.ori %333, %354 : vector<2x1xi32>
    %356 = arith.select %353, %355, %333 : vector<2x1xi1>, vector<2x1xi32>
    %357 = arith.subf %335, %352 : vector<2x1xf32>
    %358 = arith.select %353, %357, %335 : vector<2x1xi1>, vector<2x1xf32>
    %c24_i32_73 = arith.constant 24 : i32
    %359 = vector.broadcast %c24_i32_73 : i32 to vector<2x62xi32>
    %360 = arith.shrsi %195, %359 : vector<2x62xi32>
    %c24_i32_74 = arith.constant 24 : i32
    %361 = vector.broadcast %c24_i32_74 : i32 to vector<2x1xi32>
    %362 = arith.shrsi %356, %361 : vector<2x1xi32>
    %363 = vector.broadcast %362 : vector<2x1xi32> to vector<2x62xi32>
    %364 = arith.cmpi eq, %360, %363 : vector<2x62xi32>
    %c23_i32 = arith.constant 23 : i32
    %365 = vector.broadcast %c23_i32 : i32 to vector<2x62xi32>
    %366 = arith.shrsi %195, %365 : vector<2x62xi32>
    %c1_i32_75 = arith.constant 1 : i32
    %367 = vector.broadcast %c1_i32_75 : i32 to vector<2x62xi32>
    %368 = arith.andi %366, %367 : vector<2x62xi32>
    %c0_i32_76 = arith.constant 0 : i32
    %369 = vector.broadcast %c0_i32_76 : i32 to vector<2x62xi32>
    %370 = arith.cmpi eq, %368, %369 : vector<2x62xi32>
    %371 = arith.andi %364, %370 : vector<2x62xi1>
    %372 = arith.extui %371 : vector<2x62xi1> to vector<2x62xi32>
    %373 = arith.sitofp %372 : vector<2x62xi32> to vector<2x62xf32>
    %cst_77 = arith.constant dense<0.000000e+00> : vector<2xf32>
    %374 = vector.multi_reduction <add>, %373, %cst_77 [1] : vector<2x62xf32> to vector<2xf32>
    %375 = vector.shape_cast %374 : vector<2xf32> to vector<2x1xf32>
    %376 = arith.cmpf oge, %358, %375 : vector<2x1xf32>
    %c8388608_i32 = arith.constant 8388608 : i32
    %377 = vector.broadcast %c8388608_i32 : i32 to vector<2x1xi32>
    %378 = arith.ori %356, %377 : vector<2x1xi32>
    %379 = arith.select %376, %378, %356 : vector<2x1xi1>, vector<2x1xi32>
    %380 = arith.subf %358, %375 : vector<2x1xf32>
    %381 = arith.select %376, %380, %358 : vector<2x1xi1>, vector<2x1xf32>
    %c23_i32_78 = arith.constant 23 : i32
    %382 = vector.broadcast %c23_i32_78 : i32 to vector<2x62xi32>
    %383 = arith.shrsi %195, %382 : vector<2x62xi32>
    %c23_i32_79 = arith.constant 23 : i32
    %384 = vector.broadcast %c23_i32_79 : i32 to vector<2x1xi32>
    %385 = arith.shrsi %379, %384 : vector<2x1xi32>
    %386 = vector.broadcast %385 : vector<2x1xi32> to vector<2x62xi32>
    %387 = arith.cmpi eq, %383, %386 : vector<2x62xi32>
    %c22_i32 = arith.constant 22 : i32
    %388 = vector.broadcast %c22_i32 : i32 to vector<2x62xi32>
    %389 = arith.shrsi %195, %388 : vector<2x62xi32>
    %c1_i32_80 = arith.constant 1 : i32
    %390 = vector.broadcast %c1_i32_80 : i32 to vector<2x62xi32>
    %391 = arith.andi %389, %390 : vector<2x62xi32>
    %c0_i32_81 = arith.constant 0 : i32
    %392 = vector.broadcast %c0_i32_81 : i32 to vector<2x62xi32>
    %393 = arith.cmpi eq, %391, %392 : vector<2x62xi32>
    %394 = arith.andi %387, %393 : vector<2x62xi1>
    %395 = arith.extui %394 : vector<2x62xi1> to vector<2x62xi32>
    %396 = arith.sitofp %395 : vector<2x62xi32> to vector<2x62xf32>
    %cst_82 = arith.constant dense<0.000000e+00> : vector<2xf32>
    %397 = vector.multi_reduction <add>, %396, %cst_82 [1] : vector<2x62xf32> to vector<2xf32>
    %398 = vector.shape_cast %397 : vector<2xf32> to vector<2x1xf32>
    %399 = arith.cmpf oge, %381, %398 : vector<2x1xf32>
    %c4194304_i32 = arith.constant 4194304 : i32
    %400 = vector.broadcast %c4194304_i32 : i32 to vector<2x1xi32>
    %401 = arith.ori %379, %400 : vector<2x1xi32>
    %402 = arith.select %399, %401, %379 : vector<2x1xi1>, vector<2x1xi32>
    %403 = arith.subf %381, %398 : vector<2x1xf32>
    %404 = arith.select %399, %403, %381 : vector<2x1xi1>, vector<2x1xf32>
    %c22_i32_83 = arith.constant 22 : i32
    %405 = vector.broadcast %c22_i32_83 : i32 to vector<2x62xi32>
    %406 = arith.shrsi %195, %405 : vector<2x62xi32>
    %c22_i32_84 = arith.constant 22 : i32
    %407 = vector.broadcast %c22_i32_84 : i32 to vector<2x1xi32>
    %408 = arith.shrsi %402, %407 : vector<2x1xi32>
    %409 = vector.broadcast %408 : vector<2x1xi32> to vector<2x62xi32>
    %410 = arith.cmpi eq, %406, %409 : vector<2x62xi32>
    %c21_i32 = arith.constant 21 : i32
    %411 = vector.broadcast %c21_i32 : i32 to vector<2x62xi32>
    %412 = arith.shrsi %195, %411 : vector<2x62xi32>
    %c1_i32_85 = arith.constant 1 : i32
    %413 = vector.broadcast %c1_i32_85 : i32 to vector<2x62xi32>
    %414 = arith.andi %412, %413 : vector<2x62xi32>
    %c0_i32_86 = arith.constant 0 : i32
    %415 = vector.broadcast %c0_i32_86 : i32 to vector<2x62xi32>
    %416 = arith.cmpi eq, %414, %415 : vector<2x62xi32>
    %417 = arith.andi %410, %416 : vector<2x62xi1>
    %418 = arith.extui %417 : vector<2x62xi1> to vector<2x62xi32>
    %419 = arith.sitofp %418 : vector<2x62xi32> to vector<2x62xf32>
    %cst_87 = arith.constant dense<0.000000e+00> : vector<2xf32>
    %420 = vector.multi_reduction <add>, %419, %cst_87 [1] : vector<2x62xf32> to vector<2xf32>
    %421 = vector.shape_cast %420 : vector<2xf32> to vector<2x1xf32>
    %422 = arith.cmpf oge, %404, %421 : vector<2x1xf32>
    %c2097152_i32 = arith.constant 2097152 : i32
    %423 = vector.broadcast %c2097152_i32 : i32 to vector<2x1xi32>
    %424 = arith.ori %402, %423 : vector<2x1xi32>
    %425 = arith.select %422, %424, %402 : vector<2x1xi1>, vector<2x1xi32>
    %426 = arith.subf %404, %421 : vector<2x1xf32>
    %427 = arith.select %422, %426, %404 : vector<2x1xi1>, vector<2x1xf32>
    %c21_i32_88 = arith.constant 21 : i32
    %428 = vector.broadcast %c21_i32_88 : i32 to vector<2x62xi32>
    %429 = arith.shrsi %195, %428 : vector<2x62xi32>
    %c21_i32_89 = arith.constant 21 : i32
    %430 = vector.broadcast %c21_i32_89 : i32 to vector<2x1xi32>
    %431 = arith.shrsi %425, %430 : vector<2x1xi32>
    %432 = vector.broadcast %431 : vector<2x1xi32> to vector<2x62xi32>
    %433 = arith.cmpi eq, %429, %432 : vector<2x62xi32>
    %c20_i32 = arith.constant 20 : i32
    %434 = vector.broadcast %c20_i32 : i32 to vector<2x62xi32>
    %435 = arith.shrsi %195, %434 : vector<2x62xi32>
    %c1_i32_90 = arith.constant 1 : i32
    %436 = vector.broadcast %c1_i32_90 : i32 to vector<2x62xi32>
    %437 = arith.andi %435, %436 : vector<2x62xi32>
    %c0_i32_91 = arith.constant 0 : i32
    %438 = vector.broadcast %c0_i32_91 : i32 to vector<2x62xi32>
    %439 = arith.cmpi eq, %437, %438 : vector<2x62xi32>
    %440 = arith.andi %433, %439 : vector<2x62xi1>
    %441 = arith.extui %440 : vector<2x62xi1> to vector<2x62xi32>
    %442 = arith.sitofp %441 : vector<2x62xi32> to vector<2x62xf32>
    %cst_92 = arith.constant dense<0.000000e+00> : vector<2xf32>
    %443 = vector.multi_reduction <add>, %442, %cst_92 [1] : vector<2x62xf32> to vector<2xf32>
    %444 = vector.shape_cast %443 : vector<2xf32> to vector<2x1xf32>
    %445 = arith.cmpf oge, %427, %444 : vector<2x1xf32>
    %c1048576_i32 = arith.constant 1048576 : i32
    %446 = vector.broadcast %c1048576_i32 : i32 to vector<2x1xi32>
    %447 = arith.ori %425, %446 : vector<2x1xi32>
    %448 = arith.select %445, %447, %425 : vector<2x1xi1>, vector<2x1xi32>
    %449 = arith.subf %427, %444 : vector<2x1xf32>
    %450 = arith.select %445, %449, %427 : vector<2x1xi1>, vector<2x1xf32>
    %c20_i32_93 = arith.constant 20 : i32
    %451 = vector.broadcast %c20_i32_93 : i32 to vector<2x62xi32>
    %452 = arith.shrsi %195, %451 : vector<2x62xi32>
    %c20_i32_94 = arith.constant 20 : i32
    %453 = vector.broadcast %c20_i32_94 : i32 to vector<2x1xi32>
    %454 = arith.shrsi %448, %453 : vector<2x1xi32>
    %455 = vector.broadcast %454 : vector<2x1xi32> to vector<2x62xi32>
    %456 = arith.cmpi eq, %452, %455 : vector<2x62xi32>
    %c19_i32 = arith.constant 19 : i32
    %457 = vector.broadcast %c19_i32 : i32 to vector<2x62xi32>
    %458 = arith.shrsi %195, %457 : vector<2x62xi32>
    %c1_i32_95 = arith.constant 1 : i32
    %459 = vector.broadcast %c1_i32_95 : i32 to vector<2x62xi32>
    %460 = arith.andi %458, %459 : vector<2x62xi32>
    %c0_i32_96 = arith.constant 0 : i32
    %461 = vector.broadcast %c0_i32_96 : i32 to vector<2x62xi32>
    %462 = arith.cmpi eq, %460, %461 : vector<2x62xi32>
    %463 = arith.andi %456, %462 : vector<2x62xi1>
    %464 = arith.extui %463 : vector<2x62xi1> to vector<2x62xi32>
    %465 = arith.sitofp %464 : vector<2x62xi32> to vector<2x62xf32>
    %cst_97 = arith.constant dense<0.000000e+00> : vector<2xf32>
    %466 = vector.multi_reduction <add>, %465, %cst_97 [1] : vector<2x62xf32> to vector<2xf32>
    %467 = vector.shape_cast %466 : vector<2xf32> to vector<2x1xf32>
    %468 = arith.cmpf oge, %450, %467 : vector<2x1xf32>
    %c524288_i32 = arith.constant 524288 : i32
    %469 = vector.broadcast %c524288_i32 : i32 to vector<2x1xi32>
    %470 = arith.ori %448, %469 : vector<2x1xi32>
    %471 = arith.select %468, %470, %448 : vector<2x1xi1>, vector<2x1xi32>
    %472 = arith.subf %450, %467 : vector<2x1xf32>
    %473 = arith.select %468, %472, %450 : vector<2x1xi1>, vector<2x1xf32>
    %c19_i32_98 = arith.constant 19 : i32
    %474 = vector.broadcast %c19_i32_98 : i32 to vector<2x62xi32>
    %475 = arith.shrsi %195, %474 : vector<2x62xi32>
    %c19_i32_99 = arith.constant 19 : i32
    %476 = vector.broadcast %c19_i32_99 : i32 to vector<2x1xi32>
    %477 = arith.shrsi %471, %476 : vector<2x1xi32>
    %478 = vector.broadcast %477 : vector<2x1xi32> to vector<2x62xi32>
    %479 = arith.cmpi eq, %475, %478 : vector<2x62xi32>
    %c18_i32 = arith.constant 18 : i32
    %480 = vector.broadcast %c18_i32 : i32 to vector<2x62xi32>
    %481 = arith.shrsi %195, %480 : vector<2x62xi32>
    %c1_i32_100 = arith.constant 1 : i32
    %482 = vector.broadcast %c1_i32_100 : i32 to vector<2x62xi32>
    %483 = arith.andi %481, %482 : vector<2x62xi32>
    %c0_i32_101 = arith.constant 0 : i32
    %484 = vector.broadcast %c0_i32_101 : i32 to vector<2x62xi32>
    %485 = arith.cmpi eq, %483, %484 : vector<2x62xi32>
    %486 = arith.andi %479, %485 : vector<2x62xi1>
    %487 = arith.extui %486 : vector<2x62xi1> to vector<2x62xi32>
    %488 = arith.sitofp %487 : vector<2x62xi32> to vector<2x62xf32>
    %cst_102 = arith.constant dense<0.000000e+00> : vector<2xf32>
    %489 = vector.multi_reduction <add>, %488, %cst_102 [1] : vector<2x62xf32> to vector<2xf32>
    %490 = vector.shape_cast %489 : vector<2xf32> to vector<2x1xf32>
    %491 = arith.cmpf oge, %473, %490 : vector<2x1xf32>
    %c262144_i32 = arith.constant 262144 : i32
    %492 = vector.broadcast %c262144_i32 : i32 to vector<2x1xi32>
    %493 = arith.ori %471, %492 : vector<2x1xi32>
    %494 = arith.select %491, %493, %471 : vector<2x1xi1>, vector<2x1xi32>
    %495 = arith.subf %473, %490 : vector<2x1xf32>
    %496 = arith.select %491, %495, %473 : vector<2x1xi1>, vector<2x1xf32>
    %c18_i32_103 = arith.constant 18 : i32
    %497 = vector.broadcast %c18_i32_103 : i32 to vector<2x62xi32>
    %498 = arith.shrsi %195, %497 : vector<2x62xi32>
    %c18_i32_104 = arith.constant 18 : i32
    %499 = vector.broadcast %c18_i32_104 : i32 to vector<2x1xi32>
    %500 = arith.shrsi %494, %499 : vector<2x1xi32>
    %501 = vector.broadcast %500 : vector<2x1xi32> to vector<2x62xi32>
    %502 = arith.cmpi eq, %498, %501 : vector<2x62xi32>
    %c17_i32 = arith.constant 17 : i32
    %503 = vector.broadcast %c17_i32 : i32 to vector<2x62xi32>
    %504 = arith.shrsi %195, %503 : vector<2x62xi32>
    %c1_i32_105 = arith.constant 1 : i32
    %505 = vector.broadcast %c1_i32_105 : i32 to vector<2x62xi32>
    %506 = arith.andi %504, %505 : vector<2x62xi32>
    %c0_i32_106 = arith.constant 0 : i32
    %507 = vector.broadcast %c0_i32_106 : i32 to vector<2x62xi32>
    %508 = arith.cmpi eq, %506, %507 : vector<2x62xi32>
    %509 = arith.andi %502, %508 : vector<2x62xi1>
    %510 = arith.extui %509 : vector<2x62xi1> to vector<2x62xi32>
    %511 = arith.sitofp %510 : vector<2x62xi32> to vector<2x62xf32>
    %cst_107 = arith.constant dense<0.000000e+00> : vector<2xf32>
    %512 = vector.multi_reduction <add>, %511, %cst_107 [1] : vector<2x62xf32> to vector<2xf32>
    %513 = vector.shape_cast %512 : vector<2xf32> to vector<2x1xf32>
    %514 = arith.cmpf oge, %496, %513 : vector<2x1xf32>
    %c131072_i32 = arith.constant 131072 : i32
    %515 = vector.broadcast %c131072_i32 : i32 to vector<2x1xi32>
    %516 = arith.ori %494, %515 : vector<2x1xi32>
    %517 = arith.select %514, %516, %494 : vector<2x1xi1>, vector<2x1xi32>
    %518 = arith.subf %496, %513 : vector<2x1xf32>
    %519 = arith.select %514, %518, %496 : vector<2x1xi1>, vector<2x1xf32>
    %c17_i32_108 = arith.constant 17 : i32
    %520 = vector.broadcast %c17_i32_108 : i32 to vector<2x62xi32>
    %521 = arith.shrsi %195, %520 : vector<2x62xi32>
    %c17_i32_109 = arith.constant 17 : i32
    %522 = vector.broadcast %c17_i32_109 : i32 to vector<2x1xi32>
    %523 = arith.shrsi %517, %522 : vector<2x1xi32>
    %524 = vector.broadcast %523 : vector<2x1xi32> to vector<2x62xi32>
    %525 = arith.cmpi eq, %521, %524 : vector<2x62xi32>
    %c16_i32 = arith.constant 16 : i32
    %526 = vector.broadcast %c16_i32 : i32 to vector<2x62xi32>
    %527 = arith.shrsi %195, %526 : vector<2x62xi32>
    %c1_i32_110 = arith.constant 1 : i32
    %528 = vector.broadcast %c1_i32_110 : i32 to vector<2x62xi32>
    %529 = arith.andi %527, %528 : vector<2x62xi32>
    %c0_i32_111 = arith.constant 0 : i32
    %530 = vector.broadcast %c0_i32_111 : i32 to vector<2x62xi32>
    %531 = arith.cmpi eq, %529, %530 : vector<2x62xi32>
    %532 = arith.andi %525, %531 : vector<2x62xi1>
    %533 = arith.extui %532 : vector<2x62xi1> to vector<2x62xi32>
    %534 = arith.sitofp %533 : vector<2x62xi32> to vector<2x62xf32>
    %cst_112 = arith.constant dense<0.000000e+00> : vector<2xf32>
    %535 = vector.multi_reduction <add>, %534, %cst_112 [1] : vector<2x62xf32> to vector<2xf32>
    %536 = vector.shape_cast %535 : vector<2xf32> to vector<2x1xf32>
    %537 = arith.cmpf oge, %519, %536 : vector<2x1xf32>
    %c65536_i32 = arith.constant 65536 : i32
    %538 = vector.broadcast %c65536_i32 : i32 to vector<2x1xi32>
    %539 = arith.ori %517, %538 : vector<2x1xi32>
    %540 = arith.select %537, %539, %517 : vector<2x1xi1>, vector<2x1xi32>
    %541 = arith.subf %519, %536 : vector<2x1xf32>
    %542 = arith.select %537, %541, %519 : vector<2x1xi1>, vector<2x1xf32>
    %c16_i32_113 = arith.constant 16 : i32
    %543 = vector.broadcast %c16_i32_113 : i32 to vector<2x62xi32>
    %544 = arith.shrsi %195, %543 : vector<2x62xi32>
    %c16_i32_114 = arith.constant 16 : i32
    %545 = vector.broadcast %c16_i32_114 : i32 to vector<2x1xi32>
    %546 = arith.shrsi %540, %545 : vector<2x1xi32>
    %547 = vector.broadcast %546 : vector<2x1xi32> to vector<2x62xi32>
    %548 = arith.cmpi eq, %544, %547 : vector<2x62xi32>
    %c15_i32 = arith.constant 15 : i32
    %549 = vector.broadcast %c15_i32 : i32 to vector<2x62xi32>
    %550 = arith.shrsi %195, %549 : vector<2x62xi32>
    %c1_i32_115 = arith.constant 1 : i32
    %551 = vector.broadcast %c1_i32_115 : i32 to vector<2x62xi32>
    %552 = arith.andi %550, %551 : vector<2x62xi32>
    %c0_i32_116 = arith.constant 0 : i32
    %553 = vector.broadcast %c0_i32_116 : i32 to vector<2x62xi32>
    %554 = arith.cmpi eq, %552, %553 : vector<2x62xi32>
    %555 = arith.andi %548, %554 : vector<2x62xi1>
    %556 = arith.extui %555 : vector<2x62xi1> to vector<2x62xi32>
    %557 = arith.sitofp %556 : vector<2x62xi32> to vector<2x62xf32>
    %cst_117 = arith.constant dense<0.000000e+00> : vector<2xf32>
    %558 = vector.multi_reduction <add>, %557, %cst_117 [1] : vector<2x62xf32> to vector<2xf32>
    %559 = vector.shape_cast %558 : vector<2xf32> to vector<2x1xf32>
    %560 = arith.cmpf oge, %542, %559 : vector<2x1xf32>
    %c32768_i32 = arith.constant 32768 : i32
    %561 = vector.broadcast %c32768_i32 : i32 to vector<2x1xi32>
    %562 = arith.ori %540, %561 : vector<2x1xi32>
    %563 = arith.select %560, %562, %540 : vector<2x1xi1>, vector<2x1xi32>
    %564 = arith.subf %542, %559 : vector<2x1xf32>
    %565 = arith.select %560, %564, %542 : vector<2x1xi1>, vector<2x1xf32>
    %c15_i32_118 = arith.constant 15 : i32
    %566 = vector.broadcast %c15_i32_118 : i32 to vector<2x62xi32>
    %567 = arith.shrsi %195, %566 : vector<2x62xi32>
    %c15_i32_119 = arith.constant 15 : i32
    %568 = vector.broadcast %c15_i32_119 : i32 to vector<2x1xi32>
    %569 = arith.shrsi %563, %568 : vector<2x1xi32>
    %570 = vector.broadcast %569 : vector<2x1xi32> to vector<2x62xi32>
    %571 = arith.cmpi eq, %567, %570 : vector<2x62xi32>
    %c14_i32 = arith.constant 14 : i32
    %572 = vector.broadcast %c14_i32 : i32 to vector<2x62xi32>
    %573 = arith.shrsi %195, %572 : vector<2x62xi32>
    %c1_i32_120 = arith.constant 1 : i32
    %574 = vector.broadcast %c1_i32_120 : i32 to vector<2x62xi32>
    %575 = arith.andi %573, %574 : vector<2x62xi32>
    %c0_i32_121 = arith.constant 0 : i32
    %576 = vector.broadcast %c0_i32_121 : i32 to vector<2x62xi32>
    %577 = arith.cmpi eq, %575, %576 : vector<2x62xi32>
    %578 = arith.andi %571, %577 : vector<2x62xi1>
    %579 = arith.extui %578 : vector<2x62xi1> to vector<2x62xi32>
    %580 = arith.sitofp %579 : vector<2x62xi32> to vector<2x62xf32>
    %cst_122 = arith.constant dense<0.000000e+00> : vector<2xf32>
    %581 = vector.multi_reduction <add>, %580, %cst_122 [1] : vector<2x62xf32> to vector<2xf32>
    %582 = vector.shape_cast %581 : vector<2xf32> to vector<2x1xf32>
    %583 = arith.cmpf oge, %565, %582 : vector<2x1xf32>
    %c16384_i32 = arith.constant 16384 : i32
    %584 = vector.broadcast %c16384_i32 : i32 to vector<2x1xi32>
    %585 = arith.ori %563, %584 : vector<2x1xi32>
    %586 = arith.select %583, %585, %563 : vector<2x1xi1>, vector<2x1xi32>
    %587 = arith.subf %565, %582 : vector<2x1xf32>
    %588 = arith.select %583, %587, %565 : vector<2x1xi1>, vector<2x1xf32>
    %c14_i32_123 = arith.constant 14 : i32
    %589 = vector.broadcast %c14_i32_123 : i32 to vector<2x62xi32>
    %590 = arith.shrsi %195, %589 : vector<2x62xi32>
    %c14_i32_124 = arith.constant 14 : i32
    %591 = vector.broadcast %c14_i32_124 : i32 to vector<2x1xi32>
    %592 = arith.shrsi %586, %591 : vector<2x1xi32>
    %593 = vector.broadcast %592 : vector<2x1xi32> to vector<2x62xi32>
    %594 = arith.cmpi eq, %590, %593 : vector<2x62xi32>
    %c13_i32 = arith.constant 13 : i32
    %595 = vector.broadcast %c13_i32 : i32 to vector<2x62xi32>
    %596 = arith.shrsi %195, %595 : vector<2x62xi32>
    %c1_i32_125 = arith.constant 1 : i32
    %597 = vector.broadcast %c1_i32_125 : i32 to vector<2x62xi32>
    %598 = arith.andi %596, %597 : vector<2x62xi32>
    %c0_i32_126 = arith.constant 0 : i32
    %599 = vector.broadcast %c0_i32_126 : i32 to vector<2x62xi32>
    %600 = arith.cmpi eq, %598, %599 : vector<2x62xi32>
    %601 = arith.andi %594, %600 : vector<2x62xi1>
    %602 = arith.extui %601 : vector<2x62xi1> to vector<2x62xi32>
    %603 = arith.sitofp %602 : vector<2x62xi32> to vector<2x62xf32>
    %cst_127 = arith.constant dense<0.000000e+00> : vector<2xf32>
    %604 = vector.multi_reduction <add>, %603, %cst_127 [1] : vector<2x62xf32> to vector<2xf32>
    %605 = vector.shape_cast %604 : vector<2xf32> to vector<2x1xf32>
    %606 = arith.cmpf oge, %588, %605 : vector<2x1xf32>
    %c8192_i32 = arith.constant 8192 : i32
    %607 = vector.broadcast %c8192_i32 : i32 to vector<2x1xi32>
    %608 = arith.ori %586, %607 : vector<2x1xi32>
    %609 = arith.select %606, %608, %586 : vector<2x1xi1>, vector<2x1xi32>
    %610 = arith.subf %588, %605 : vector<2x1xf32>
    %611 = arith.select %606, %610, %588 : vector<2x1xi1>, vector<2x1xf32>
    %c13_i32_128 = arith.constant 13 : i32
    %612 = vector.broadcast %c13_i32_128 : i32 to vector<2x62xi32>
    %613 = arith.shrsi %195, %612 : vector<2x62xi32>
    %c13_i32_129 = arith.constant 13 : i32
    %614 = vector.broadcast %c13_i32_129 : i32 to vector<2x1xi32>
    %615 = arith.shrsi %609, %614 : vector<2x1xi32>
    %616 = vector.broadcast %615 : vector<2x1xi32> to vector<2x62xi32>
    %617 = arith.cmpi eq, %613, %616 : vector<2x62xi32>
    %c12_i32 = arith.constant 12 : i32
    %618 = vector.broadcast %c12_i32 : i32 to vector<2x62xi32>
    %619 = arith.shrsi %195, %618 : vector<2x62xi32>
    %c1_i32_130 = arith.constant 1 : i32
    %620 = vector.broadcast %c1_i32_130 : i32 to vector<2x62xi32>
    %621 = arith.andi %619, %620 : vector<2x62xi32>
    %c0_i32_131 = arith.constant 0 : i32
    %622 = vector.broadcast %c0_i32_131 : i32 to vector<2x62xi32>
    %623 = arith.cmpi eq, %621, %622 : vector<2x62xi32>
    %624 = arith.andi %617, %623 : vector<2x62xi1>
    %625 = arith.extui %624 : vector<2x62xi1> to vector<2x62xi32>
    %626 = arith.sitofp %625 : vector<2x62xi32> to vector<2x62xf32>
    %cst_132 = arith.constant dense<0.000000e+00> : vector<2xf32>
    %627 = vector.multi_reduction <add>, %626, %cst_132 [1] : vector<2x62xf32> to vector<2xf32>
    %628 = vector.shape_cast %627 : vector<2xf32> to vector<2x1xf32>
    %629 = arith.cmpf oge, %611, %628 : vector<2x1xf32>
    %c4096_i32 = arith.constant 4096 : i32
    %630 = vector.broadcast %c4096_i32 : i32 to vector<2x1xi32>
    %631 = arith.ori %609, %630 : vector<2x1xi32>
    %632 = arith.select %629, %631, %609 : vector<2x1xi1>, vector<2x1xi32>
    %633 = arith.subf %611, %628 : vector<2x1xf32>
    %634 = arith.select %629, %633, %611 : vector<2x1xi1>, vector<2x1xf32>
    %c12_i32_133 = arith.constant 12 : i32
    %635 = vector.broadcast %c12_i32_133 : i32 to vector<2x62xi32>
    %636 = arith.shrsi %195, %635 : vector<2x62xi32>
    %c12_i32_134 = arith.constant 12 : i32
    %637 = vector.broadcast %c12_i32_134 : i32 to vector<2x1xi32>
    %638 = arith.shrsi %632, %637 : vector<2x1xi32>
    %639 = vector.broadcast %638 : vector<2x1xi32> to vector<2x62xi32>
    %640 = arith.cmpi eq, %636, %639 : vector<2x62xi32>
    %c11_i32 = arith.constant 11 : i32
    %641 = vector.broadcast %c11_i32 : i32 to vector<2x62xi32>
    %642 = arith.shrsi %195, %641 : vector<2x62xi32>
    %c1_i32_135 = arith.constant 1 : i32
    %643 = vector.broadcast %c1_i32_135 : i32 to vector<2x62xi32>
    %644 = arith.andi %642, %643 : vector<2x62xi32>
    %c0_i32_136 = arith.constant 0 : i32
    %645 = vector.broadcast %c0_i32_136 : i32 to vector<2x62xi32>
    %646 = arith.cmpi eq, %644, %645 : vector<2x62xi32>
    %647 = arith.andi %640, %646 : vector<2x62xi1>
    %648 = arith.extui %647 : vector<2x62xi1> to vector<2x62xi32>
    %649 = arith.sitofp %648 : vector<2x62xi32> to vector<2x62xf32>
    %cst_137 = arith.constant dense<0.000000e+00> : vector<2xf32>
    %650 = vector.multi_reduction <add>, %649, %cst_137 [1] : vector<2x62xf32> to vector<2xf32>
    %651 = vector.shape_cast %650 : vector<2xf32> to vector<2x1xf32>
    %652 = arith.cmpf oge, %634, %651 : vector<2x1xf32>
    %c2048_i32 = arith.constant 2048 : i32
    %653 = vector.broadcast %c2048_i32 : i32 to vector<2x1xi32>
    %654 = arith.ori %632, %653 : vector<2x1xi32>
    %655 = arith.select %652, %654, %632 : vector<2x1xi1>, vector<2x1xi32>
    %656 = arith.subf %634, %651 : vector<2x1xf32>
    %657 = arith.select %652, %656, %634 : vector<2x1xi1>, vector<2x1xf32>
    %c11_i32_138 = arith.constant 11 : i32
    %658 = vector.broadcast %c11_i32_138 : i32 to vector<2x62xi32>
    %659 = arith.shrsi %195, %658 : vector<2x62xi32>
    %c11_i32_139 = arith.constant 11 : i32
    %660 = vector.broadcast %c11_i32_139 : i32 to vector<2x1xi32>
    %661 = arith.shrsi %655, %660 : vector<2x1xi32>
    %662 = vector.broadcast %661 : vector<2x1xi32> to vector<2x62xi32>
    %663 = arith.cmpi eq, %659, %662 : vector<2x62xi32>
    %c10_i32 = arith.constant 10 : i32
    %664 = vector.broadcast %c10_i32 : i32 to vector<2x62xi32>
    %665 = arith.shrsi %195, %664 : vector<2x62xi32>
    %c1_i32_140 = arith.constant 1 : i32
    %666 = vector.broadcast %c1_i32_140 : i32 to vector<2x62xi32>
    %667 = arith.andi %665, %666 : vector<2x62xi32>
    %c0_i32_141 = arith.constant 0 : i32
    %668 = vector.broadcast %c0_i32_141 : i32 to vector<2x62xi32>
    %669 = arith.cmpi eq, %667, %668 : vector<2x62xi32>
    %670 = arith.andi %663, %669 : vector<2x62xi1>
    %671 = arith.extui %670 : vector<2x62xi1> to vector<2x62xi32>
    %672 = arith.sitofp %671 : vector<2x62xi32> to vector<2x62xf32>
    %cst_142 = arith.constant dense<0.000000e+00> : vector<2xf32>
    %673 = vector.multi_reduction <add>, %672, %cst_142 [1] : vector<2x62xf32> to vector<2xf32>
    %674 = vector.shape_cast %673 : vector<2xf32> to vector<2x1xf32>
    %675 = arith.cmpf oge, %657, %674 : vector<2x1xf32>
    %c1024_i32 = arith.constant 1024 : i32
    %676 = vector.broadcast %c1024_i32 : i32 to vector<2x1xi32>
    %677 = arith.ori %655, %676 : vector<2x1xi32>
    %678 = arith.select %675, %677, %655 : vector<2x1xi1>, vector<2x1xi32>
    %679 = arith.subf %657, %674 : vector<2x1xf32>
    %680 = arith.select %675, %679, %657 : vector<2x1xi1>, vector<2x1xf32>
    %c10_i32_143 = arith.constant 10 : i32
    %681 = vector.broadcast %c10_i32_143 : i32 to vector<2x62xi32>
    %682 = arith.shrsi %195, %681 : vector<2x62xi32>
    %c10_i32_144 = arith.constant 10 : i32
    %683 = vector.broadcast %c10_i32_144 : i32 to vector<2x1xi32>
    %684 = arith.shrsi %678, %683 : vector<2x1xi32>
    %685 = vector.broadcast %684 : vector<2x1xi32> to vector<2x62xi32>
    %686 = arith.cmpi eq, %682, %685 : vector<2x62xi32>
    %c9_i32 = arith.constant 9 : i32
    %687 = vector.broadcast %c9_i32 : i32 to vector<2x62xi32>
    %688 = arith.shrsi %195, %687 : vector<2x62xi32>
    %c1_i32_145 = arith.constant 1 : i32
    %689 = vector.broadcast %c1_i32_145 : i32 to vector<2x62xi32>
    %690 = arith.andi %688, %689 : vector<2x62xi32>
    %c0_i32_146 = arith.constant 0 : i32
    %691 = vector.broadcast %c0_i32_146 : i32 to vector<2x62xi32>
    %692 = arith.cmpi eq, %690, %691 : vector<2x62xi32>
    %693 = arith.andi %686, %692 : vector<2x62xi1>
    %694 = arith.extui %693 : vector<2x62xi1> to vector<2x62xi32>
    %695 = arith.sitofp %694 : vector<2x62xi32> to vector<2x62xf32>
    %cst_147 = arith.constant dense<0.000000e+00> : vector<2xf32>
    %696 = vector.multi_reduction <add>, %695, %cst_147 [1] : vector<2x62xf32> to vector<2xf32>
    %697 = vector.shape_cast %696 : vector<2xf32> to vector<2x1xf32>
    %698 = arith.cmpf oge, %680, %697 : vector<2x1xf32>
    %c512_i32 = arith.constant 512 : i32
    %699 = vector.broadcast %c512_i32 : i32 to vector<2x1xi32>
    %700 = arith.ori %678, %699 : vector<2x1xi32>
    %701 = arith.select %698, %700, %678 : vector<2x1xi1>, vector<2x1xi32>
    %702 = arith.subf %680, %697 : vector<2x1xf32>
    %703 = arith.select %698, %702, %680 : vector<2x1xi1>, vector<2x1xf32>
    %c9_i32_148 = arith.constant 9 : i32
    %704 = vector.broadcast %c9_i32_148 : i32 to vector<2x62xi32>
    %705 = arith.shrsi %195, %704 : vector<2x62xi32>
    %c9_i32_149 = arith.constant 9 : i32
    %706 = vector.broadcast %c9_i32_149 : i32 to vector<2x1xi32>
    %707 = arith.shrsi %701, %706 : vector<2x1xi32>
    %708 = vector.broadcast %707 : vector<2x1xi32> to vector<2x62xi32>
    %709 = arith.cmpi eq, %705, %708 : vector<2x62xi32>
    %c8_i32 = arith.constant 8 : i32
    %710 = vector.broadcast %c8_i32 : i32 to vector<2x62xi32>
    %711 = arith.shrsi %195, %710 : vector<2x62xi32>
    %c1_i32_150 = arith.constant 1 : i32
    %712 = vector.broadcast %c1_i32_150 : i32 to vector<2x62xi32>
    %713 = arith.andi %711, %712 : vector<2x62xi32>
    %c0_i32_151 = arith.constant 0 : i32
    %714 = vector.broadcast %c0_i32_151 : i32 to vector<2x62xi32>
    %715 = arith.cmpi eq, %713, %714 : vector<2x62xi32>
    %716 = arith.andi %709, %715 : vector<2x62xi1>
    %717 = arith.extui %716 : vector<2x62xi1> to vector<2x62xi32>
    %718 = arith.sitofp %717 : vector<2x62xi32> to vector<2x62xf32>
    %cst_152 = arith.constant dense<0.000000e+00> : vector<2xf32>
    %719 = vector.multi_reduction <add>, %718, %cst_152 [1] : vector<2x62xf32> to vector<2xf32>
    %720 = vector.shape_cast %719 : vector<2xf32> to vector<2x1xf32>
    %721 = arith.cmpf oge, %703, %720 : vector<2x1xf32>
    %c256_i32 = arith.constant 256 : i32
    %722 = vector.broadcast %c256_i32 : i32 to vector<2x1xi32>
    %723 = arith.ori %701, %722 : vector<2x1xi32>
    %724 = arith.select %721, %723, %701 : vector<2x1xi1>, vector<2x1xi32>
    %725 = arith.subf %703, %720 : vector<2x1xf32>
    %726 = arith.select %721, %725, %703 : vector<2x1xi1>, vector<2x1xf32>
    %c8_i32_153 = arith.constant 8 : i32
    %727 = vector.broadcast %c8_i32_153 : i32 to vector<2x62xi32>
    %728 = arith.shrsi %195, %727 : vector<2x62xi32>
    %c8_i32_154 = arith.constant 8 : i32
    %729 = vector.broadcast %c8_i32_154 : i32 to vector<2x1xi32>
    %730 = arith.shrsi %724, %729 : vector<2x1xi32>
    %731 = vector.broadcast %730 : vector<2x1xi32> to vector<2x62xi32>
    %732 = arith.cmpi eq, %728, %731 : vector<2x62xi32>
    %c7_i32 = arith.constant 7 : i32
    %733 = vector.broadcast %c7_i32 : i32 to vector<2x62xi32>
    %734 = arith.shrsi %195, %733 : vector<2x62xi32>
    %c1_i32_155 = arith.constant 1 : i32
    %735 = vector.broadcast %c1_i32_155 : i32 to vector<2x62xi32>
    %736 = arith.andi %734, %735 : vector<2x62xi32>
    %c0_i32_156 = arith.constant 0 : i32
    %737 = vector.broadcast %c0_i32_156 : i32 to vector<2x62xi32>
    %738 = arith.cmpi eq, %736, %737 : vector<2x62xi32>
    %739 = arith.andi %732, %738 : vector<2x62xi1>
    %740 = arith.extui %739 : vector<2x62xi1> to vector<2x62xi32>
    %741 = arith.sitofp %740 : vector<2x62xi32> to vector<2x62xf32>
    %cst_157 = arith.constant dense<0.000000e+00> : vector<2xf32>
    %742 = vector.multi_reduction <add>, %741, %cst_157 [1] : vector<2x62xf32> to vector<2xf32>
    %743 = vector.shape_cast %742 : vector<2xf32> to vector<2x1xf32>
    %744 = arith.cmpf oge, %726, %743 : vector<2x1xf32>
    %c128_i32 = arith.constant 128 : i32
    %745 = vector.broadcast %c128_i32 : i32 to vector<2x1xi32>
    %746 = arith.ori %724, %745 : vector<2x1xi32>
    %747 = arith.select %744, %746, %724 : vector<2x1xi1>, vector<2x1xi32>
    %748 = arith.subf %726, %743 : vector<2x1xf32>
    %749 = arith.select %744, %748, %726 : vector<2x1xi1>, vector<2x1xf32>
    %c7_i32_158 = arith.constant 7 : i32
    %750 = vector.broadcast %c7_i32_158 : i32 to vector<2x62xi32>
    %751 = arith.shrsi %195, %750 : vector<2x62xi32>
    %c7_i32_159 = arith.constant 7 : i32
    %752 = vector.broadcast %c7_i32_159 : i32 to vector<2x1xi32>
    %753 = arith.shrsi %747, %752 : vector<2x1xi32>
    %754 = vector.broadcast %753 : vector<2x1xi32> to vector<2x62xi32>
    %755 = arith.cmpi eq, %751, %754 : vector<2x62xi32>
    %c6_i32 = arith.constant 6 : i32
    %756 = vector.broadcast %c6_i32 : i32 to vector<2x62xi32>
    %757 = arith.shrsi %195, %756 : vector<2x62xi32>
    %c1_i32_160 = arith.constant 1 : i32
    %758 = vector.broadcast %c1_i32_160 : i32 to vector<2x62xi32>
    %759 = arith.andi %757, %758 : vector<2x62xi32>
    %c0_i32_161 = arith.constant 0 : i32
    %760 = vector.broadcast %c0_i32_161 : i32 to vector<2x62xi32>
    %761 = arith.cmpi eq, %759, %760 : vector<2x62xi32>
    %762 = arith.andi %755, %761 : vector<2x62xi1>
    %763 = arith.extui %762 : vector<2x62xi1> to vector<2x62xi32>
    %764 = arith.sitofp %763 : vector<2x62xi32> to vector<2x62xf32>
    %cst_162 = arith.constant dense<0.000000e+00> : vector<2xf32>
    %765 = vector.multi_reduction <add>, %764, %cst_162 [1] : vector<2x62xf32> to vector<2xf32>
    %766 = vector.shape_cast %765 : vector<2xf32> to vector<2x1xf32>
    %767 = arith.cmpf oge, %749, %766 : vector<2x1xf32>
    %c64_i32 = arith.constant 64 : i32
    %768 = vector.broadcast %c64_i32 : i32 to vector<2x1xi32>
    %769 = arith.ori %747, %768 : vector<2x1xi32>
    %770 = arith.select %767, %769, %747 : vector<2x1xi1>, vector<2x1xi32>
    %771 = arith.subf %749, %766 : vector<2x1xf32>
    %772 = arith.select %767, %771, %749 : vector<2x1xi1>, vector<2x1xf32>
    %c6_i32_163 = arith.constant 6 : i32
    %773 = vector.broadcast %c6_i32_163 : i32 to vector<2x62xi32>
    %774 = arith.shrsi %195, %773 : vector<2x62xi32>
    %c6_i32_164 = arith.constant 6 : i32
    %775 = vector.broadcast %c6_i32_164 : i32 to vector<2x1xi32>
    %776 = arith.shrsi %770, %775 : vector<2x1xi32>
    %777 = vector.broadcast %776 : vector<2x1xi32> to vector<2x62xi32>
    %778 = arith.cmpi eq, %774, %777 : vector<2x62xi32>
    %c5_i32 = arith.constant 5 : i32
    %779 = vector.broadcast %c5_i32 : i32 to vector<2x62xi32>
    %780 = arith.shrsi %195, %779 : vector<2x62xi32>
    %c1_i32_165 = arith.constant 1 : i32
    %781 = vector.broadcast %c1_i32_165 : i32 to vector<2x62xi32>
    %782 = arith.andi %780, %781 : vector<2x62xi32>
    %c0_i32_166 = arith.constant 0 : i32
    %783 = vector.broadcast %c0_i32_166 : i32 to vector<2x62xi32>
    %784 = arith.cmpi eq, %782, %783 : vector<2x62xi32>
    %785 = arith.andi %778, %784 : vector<2x62xi1>
    %786 = arith.extui %785 : vector<2x62xi1> to vector<2x62xi32>
    %787 = arith.sitofp %786 : vector<2x62xi32> to vector<2x62xf32>
    %cst_167 = arith.constant dense<0.000000e+00> : vector<2xf32>
    %788 = vector.multi_reduction <add>, %787, %cst_167 [1] : vector<2x62xf32> to vector<2xf32>
    %789 = vector.shape_cast %788 : vector<2xf32> to vector<2x1xf32>
    %790 = arith.cmpf oge, %772, %789 : vector<2x1xf32>
    %c32_i32 = arith.constant 32 : i32
    %791 = vector.broadcast %c32_i32 : i32 to vector<2x1xi32>
    %792 = arith.ori %770, %791 : vector<2x1xi32>
    %793 = arith.select %790, %792, %770 : vector<2x1xi1>, vector<2x1xi32>
    %794 = arith.subf %772, %789 : vector<2x1xf32>
    %795 = arith.select %790, %794, %772 : vector<2x1xi1>, vector<2x1xf32>
    %c5_i32_168 = arith.constant 5 : i32
    %796 = vector.broadcast %c5_i32_168 : i32 to vector<2x62xi32>
    %797 = arith.shrsi %195, %796 : vector<2x62xi32>
    %c5_i32_169 = arith.constant 5 : i32
    %798 = vector.broadcast %c5_i32_169 : i32 to vector<2x1xi32>
    %799 = arith.shrsi %793, %798 : vector<2x1xi32>
    %800 = vector.broadcast %799 : vector<2x1xi32> to vector<2x62xi32>
    %801 = arith.cmpi eq, %797, %800 : vector<2x62xi32>
    %c4_i32 = arith.constant 4 : i32
    %802 = vector.broadcast %c4_i32 : i32 to vector<2x62xi32>
    %803 = arith.shrsi %195, %802 : vector<2x62xi32>
    %c1_i32_170 = arith.constant 1 : i32
    %804 = vector.broadcast %c1_i32_170 : i32 to vector<2x62xi32>
    %805 = arith.andi %803, %804 : vector<2x62xi32>
    %c0_i32_171 = arith.constant 0 : i32
    %806 = vector.broadcast %c0_i32_171 : i32 to vector<2x62xi32>
    %807 = arith.cmpi eq, %805, %806 : vector<2x62xi32>
    %808 = arith.andi %801, %807 : vector<2x62xi1>
    %809 = arith.extui %808 : vector<2x62xi1> to vector<2x62xi32>
    %810 = arith.sitofp %809 : vector<2x62xi32> to vector<2x62xf32>
    %cst_172 = arith.constant dense<0.000000e+00> : vector<2xf32>
    %811 = vector.multi_reduction <add>, %810, %cst_172 [1] : vector<2x62xf32> to vector<2xf32>
    %812 = vector.shape_cast %811 : vector<2xf32> to vector<2x1xf32>
    %813 = arith.cmpf oge, %795, %812 : vector<2x1xf32>
    %c16_i32_173 = arith.constant 16 : i32
    %814 = vector.broadcast %c16_i32_173 : i32 to vector<2x1xi32>
    %815 = arith.ori %793, %814 : vector<2x1xi32>
    %816 = arith.select %813, %815, %793 : vector<2x1xi1>, vector<2x1xi32>
    %817 = arith.subf %795, %812 : vector<2x1xf32>
    %818 = arith.select %813, %817, %795 : vector<2x1xi1>, vector<2x1xf32>
    %c4_i32_174 = arith.constant 4 : i32
    %819 = vector.broadcast %c4_i32_174 : i32 to vector<2x62xi32>
    %820 = arith.shrsi %195, %819 : vector<2x62xi32>
    %c4_i32_175 = arith.constant 4 : i32
    %821 = vector.broadcast %c4_i32_175 : i32 to vector<2x1xi32>
    %822 = arith.shrsi %816, %821 : vector<2x1xi32>
    %823 = vector.broadcast %822 : vector<2x1xi32> to vector<2x62xi32>
    %824 = arith.cmpi eq, %820, %823 : vector<2x62xi32>
    %c3_i32 = arith.constant 3 : i32
    %825 = vector.broadcast %c3_i32 : i32 to vector<2x62xi32>
    %826 = arith.shrsi %195, %825 : vector<2x62xi32>
    %c1_i32_176 = arith.constant 1 : i32
    %827 = vector.broadcast %c1_i32_176 : i32 to vector<2x62xi32>
    %828 = arith.andi %826, %827 : vector<2x62xi32>
    %c0_i32_177 = arith.constant 0 : i32
    %829 = vector.broadcast %c0_i32_177 : i32 to vector<2x62xi32>
    %830 = arith.cmpi eq, %828, %829 : vector<2x62xi32>
    %831 = arith.andi %824, %830 : vector<2x62xi1>
    %832 = arith.extui %831 : vector<2x62xi1> to vector<2x62xi32>
    %833 = arith.sitofp %832 : vector<2x62xi32> to vector<2x62xf32>
    %cst_178 = arith.constant dense<0.000000e+00> : vector<2xf32>
    %834 = vector.multi_reduction <add>, %833, %cst_178 [1] : vector<2x62xf32> to vector<2xf32>
    %835 = vector.shape_cast %834 : vector<2xf32> to vector<2x1xf32>
    %836 = arith.cmpf oge, %818, %835 : vector<2x1xf32>
    %c8_i32_179 = arith.constant 8 : i32
    %837 = vector.broadcast %c8_i32_179 : i32 to vector<2x1xi32>
    %838 = arith.ori %816, %837 : vector<2x1xi32>
    %839 = arith.select %836, %838, %816 : vector<2x1xi1>, vector<2x1xi32>
    %840 = arith.subf %818, %835 : vector<2x1xf32>
    %841 = arith.select %836, %840, %818 : vector<2x1xi1>, vector<2x1xf32>
    %c3_i32_180 = arith.constant 3 : i32
    %842 = vector.broadcast %c3_i32_180 : i32 to vector<2x62xi32>
    %843 = arith.shrsi %195, %842 : vector<2x62xi32>
    %c3_i32_181 = arith.constant 3 : i32
    %844 = vector.broadcast %c3_i32_181 : i32 to vector<2x1xi32>
    %845 = arith.shrsi %839, %844 : vector<2x1xi32>
    %846 = vector.broadcast %845 : vector<2x1xi32> to vector<2x62xi32>
    %847 = arith.cmpi eq, %843, %846 : vector<2x62xi32>
    %c2_i32 = arith.constant 2 : i32
    %848 = vector.broadcast %c2_i32 : i32 to vector<2x62xi32>
    %849 = arith.shrsi %195, %848 : vector<2x62xi32>
    %c1_i32_182 = arith.constant 1 : i32
    %850 = vector.broadcast %c1_i32_182 : i32 to vector<2x62xi32>
    %851 = arith.andi %849, %850 : vector<2x62xi32>
    %c0_i32_183 = arith.constant 0 : i32
    %852 = vector.broadcast %c0_i32_183 : i32 to vector<2x62xi32>
    %853 = arith.cmpi eq, %851, %852 : vector<2x62xi32>
    %854 = arith.andi %847, %853 : vector<2x62xi1>
    %855 = arith.extui %854 : vector<2x62xi1> to vector<2x62xi32>
    %856 = arith.sitofp %855 : vector<2x62xi32> to vector<2x62xf32>
    %cst_184 = arith.constant dense<0.000000e+00> : vector<2xf32>
    %857 = vector.multi_reduction <add>, %856, %cst_184 [1] : vector<2x62xf32> to vector<2xf32>
    %858 = vector.shape_cast %857 : vector<2xf32> to vector<2x1xf32>
    %859 = arith.cmpf oge, %841, %858 : vector<2x1xf32>
    %c4_i32_185 = arith.constant 4 : i32
    %860 = vector.broadcast %c4_i32_185 : i32 to vector<2x1xi32>
    %861 = arith.ori %839, %860 : vector<2x1xi32>
    %862 = arith.select %859, %861, %839 : vector<2x1xi1>, vector<2x1xi32>
    %863 = arith.subf %841, %858 : vector<2x1xf32>
    %864 = arith.select %859, %863, %841 : vector<2x1xi1>, vector<2x1xf32>
    %c2_i32_186 = arith.constant 2 : i32
    %865 = vector.broadcast %c2_i32_186 : i32 to vector<2x62xi32>
    %866 = arith.shrsi %195, %865 : vector<2x62xi32>
    %c2_i32_187 = arith.constant 2 : i32
    %867 = vector.broadcast %c2_i32_187 : i32 to vector<2x1xi32>
    %868 = arith.shrsi %862, %867 : vector<2x1xi32>
    %869 = vector.broadcast %868 : vector<2x1xi32> to vector<2x62xi32>
    %870 = arith.cmpi eq, %866, %869 : vector<2x62xi32>
    %c1_i32_188 = arith.constant 1 : i32
    %871 = vector.broadcast %c1_i32_188 : i32 to vector<2x62xi32>
    %872 = arith.shrsi %195, %871 : vector<2x62xi32>
    %c1_i32_189 = arith.constant 1 : i32
    %873 = vector.broadcast %c1_i32_189 : i32 to vector<2x62xi32>
    %874 = arith.andi %872, %873 : vector<2x62xi32>
    %c0_i32_190 = arith.constant 0 : i32
    %875 = vector.broadcast %c0_i32_190 : i32 to vector<2x62xi32>
    %876 = arith.cmpi eq, %874, %875 : vector<2x62xi32>
    %877 = arith.andi %870, %876 : vector<2x62xi1>
    %878 = arith.extui %877 : vector<2x62xi1> to vector<2x62xi32>
    %879 = arith.sitofp %878 : vector<2x62xi32> to vector<2x62xf32>
    %cst_191 = arith.constant dense<0.000000e+00> : vector<2xf32>
    %880 = vector.multi_reduction <add>, %879, %cst_191 [1] : vector<2x62xf32> to vector<2xf32>
    %881 = vector.shape_cast %880 : vector<2xf32> to vector<2x1xf32>
    %882 = arith.cmpf oge, %864, %881 : vector<2x1xf32>
    %c2_i32_192 = arith.constant 2 : i32
    %883 = vector.broadcast %c2_i32_192 : i32 to vector<2x1xi32>
    %884 = arith.ori %862, %883 : vector<2x1xi32>
    %885 = arith.select %882, %884, %862 : vector<2x1xi1>, vector<2x1xi32>
    %886 = arith.subf %864, %881 : vector<2x1xf32>
    %887 = arith.select %882, %886, %864 : vector<2x1xi1>, vector<2x1xf32>
    %c1_i32_193 = arith.constant 1 : i32
    %888 = vector.broadcast %c1_i32_193 : i32 to vector<2x62xi32>
    %889 = arith.shrsi %195, %888 : vector<2x62xi32>
    %c1_i32_194 = arith.constant 1 : i32
    %890 = vector.broadcast %c1_i32_194 : i32 to vector<2x1xi32>
    %891 = arith.shrsi %885, %890 : vector<2x1xi32>
    %892 = vector.broadcast %891 : vector<2x1xi32> to vector<2x62xi32>
    %893 = arith.cmpi eq, %889, %892 : vector<2x62xi32>
    %c0_i32_195 = arith.constant 0 : i32
    %894 = vector.broadcast %c0_i32_195 : i32 to vector<2x62xi32>
    %895 = arith.shrsi %195, %894 : vector<2x62xi32>
    %c1_i32_196 = arith.constant 1 : i32
    %896 = vector.broadcast %c1_i32_196 : i32 to vector<2x62xi32>
    %897 = arith.andi %895, %896 : vector<2x62xi32>
    %c0_i32_197 = arith.constant 0 : i32
    %898 = vector.broadcast %c0_i32_197 : i32 to vector<2x62xi32>
    %899 = arith.cmpi eq, %897, %898 : vector<2x62xi32>
    %900 = arith.andi %893, %899 : vector<2x62xi1>
    %901 = arith.extui %900 : vector<2x62xi1> to vector<2x62xi32>
    %902 = arith.sitofp %901 : vector<2x62xi32> to vector<2x62xf32>
    %cst_198 = arith.constant dense<0.000000e+00> : vector<2xf32>
    %903 = vector.multi_reduction <add>, %902, %cst_198 [1] : vector<2x62xf32> to vector<2xf32>
    %904 = vector.shape_cast %903 : vector<2xf32> to vector<2x1xf32>
    %905 = arith.cmpf oge, %887, %904 : vector<2x1xf32>
    %c1_i32_199 = arith.constant 1 : i32
    %906 = vector.broadcast %c1_i32_199 : i32 to vector<2x1xi32>
    %907 = arith.ori %885, %906 : vector<2x1xi32>
    %908 = arith.select %905, %907, %885 : vector<2x1xi1>, vector<2x1xi32>
    %909 = tpu.bitcast %908 : vector<2x1xi32> -> vector<2x1xf32>
    %910 = vector.broadcast %909 : vector<2x1xf32> to vector<2x62xf32>
    %911 = arith.subf %193, %910 : vector<2x62xf32>
    %912 = math.absf %911 : vector<2x62xf32>
    %913 = tpu.bitcast %912 : vector<2x62xf32> -> vector<2x62xi32>
    %c0_i32_200 = arith.constant 0 : i32
    %914 = vector.broadcast %c0_i32_200 : i32 to vector<2x1xi32>
    %cst_201 = arith.constant 3.000000e+01 : f32
    %915 = vector.broadcast %cst_201 : f32 to vector<2x1xf32>
    %c31_i32_202 = arith.constant 31 : i32
    %916 = vector.broadcast %c31_i32_202 : i32 to vector<2x62xi32>
    %917 = arith.shrsi %913, %916 : vector<2x62xi32>
    %c31_i32_203 = arith.constant 31 : i32
    %918 = vector.broadcast %c31_i32_203 : i32 to vector<2x1xi32>
    %919 = arith.shrsi %914, %918 : vector<2x1xi32>
    %920 = vector.broadcast %919 : vector<2x1xi32> to vector<2x62xi32>
    %921 = arith.cmpi eq, %917, %920 : vector<2x62xi32>
    %c30_i32_204 = arith.constant 30 : i32
    %922 = vector.broadcast %c30_i32_204 : i32 to vector<2x62xi32>
    %923 = arith.shrsi %913, %922 : vector<2x62xi32>
    %c1_i32_205 = arith.constant 1 : i32
    %924 = vector.broadcast %c1_i32_205 : i32 to vector<2x62xi32>
    %925 = arith.andi %923, %924 : vector<2x62xi32>
    %c0_i32_206 = arith.constant 0 : i32
    %926 = vector.broadcast %c0_i32_206 : i32 to vector<2x62xi32>
    %927 = arith.cmpi eq, %925, %926 : vector<2x62xi32>
    %928 = arith.andi %921, %927 : vector<2x62xi1>
    %929 = arith.extui %928 : vector<2x62xi1> to vector<2x62xi32>
    %930 = arith.sitofp %929 : vector<2x62xi32> to vector<2x62xf32>
    %cst_207 = arith.constant dense<0.000000e+00> : vector<2xf32>
    %931 = vector.multi_reduction <add>, %930, %cst_207 [1] : vector<2x62xf32> to vector<2xf32>
    %932 = vector.shape_cast %931 : vector<2xf32> to vector<2x1xf32>
    %933 = arith.cmpf oge, %915, %932 : vector<2x1xf32>
    %c1073741824_i32_208 = arith.constant 1073741824 : i32
    %934 = vector.broadcast %c1073741824_i32_208 : i32 to vector<2x1xi32>
    %935 = arith.ori %914, %934 : vector<2x1xi32>
    %936 = arith.select %933, %935, %914 : vector<2x1xi1>, vector<2x1xi32>
    %937 = arith.subf %915, %932 : vector<2x1xf32>
    %938 = arith.select %933, %937, %915 : vector<2x1xi1>, vector<2x1xf32>
    %c30_i32_209 = arith.constant 30 : i32
    %939 = vector.broadcast %c30_i32_209 : i32 to vector<2x62xi32>
    %940 = arith.shrsi %913, %939 : vector<2x62xi32>
    %c30_i32_210 = arith.constant 30 : i32
    %941 = vector.broadcast %c30_i32_210 : i32 to vector<2x1xi32>
    %942 = arith.shrsi %936, %941 : vector<2x1xi32>
    %943 = vector.broadcast %942 : vector<2x1xi32> to vector<2x62xi32>
    %944 = arith.cmpi eq, %940, %943 : vector<2x62xi32>
    %c29_i32_211 = arith.constant 29 : i32
    %945 = vector.broadcast %c29_i32_211 : i32 to vector<2x62xi32>
    %946 = arith.shrsi %913, %945 : vector<2x62xi32>
    %c1_i32_212 = arith.constant 1 : i32
    %947 = vector.broadcast %c1_i32_212 : i32 to vector<2x62xi32>
    %948 = arith.andi %946, %947 : vector<2x62xi32>
    %c0_i32_213 = arith.constant 0 : i32
    %949 = vector.broadcast %c0_i32_213 : i32 to vector<2x62xi32>
    %950 = arith.cmpi eq, %948, %949 : vector<2x62xi32>
    %951 = arith.andi %944, %950 : vector<2x62xi1>
    %952 = arith.extui %951 : vector<2x62xi1> to vector<2x62xi32>
    %953 = arith.sitofp %952 : vector<2x62xi32> to vector<2x62xf32>
    %cst_214 = arith.constant dense<0.000000e+00> : vector<2xf32>
    %954 = vector.multi_reduction <add>, %953, %cst_214 [1] : vector<2x62xf32> to vector<2xf32>
    %955 = vector.shape_cast %954 : vector<2xf32> to vector<2x1xf32>
    %956 = arith.cmpf oge, %938, %955 : vector<2x1xf32>
    %c536870912_i32_215 = arith.constant 536870912 : i32
    %957 = vector.broadcast %c536870912_i32_215 : i32 to vector<2x1xi32>
    %958 = arith.ori %936, %957 : vector<2x1xi32>
    %959 = arith.select %956, %958, %936 : vector<2x1xi1>, vector<2x1xi32>
    %960 = arith.subf %938, %955 : vector<2x1xf32>
    %961 = arith.select %956, %960, %938 : vector<2x1xi1>, vector<2x1xf32>
    %c29_i32_216 = arith.constant 29 : i32
    %962 = vector.broadcast %c29_i32_216 : i32 to vector<2x62xi32>
    %963 = arith.shrsi %913, %962 : vector<2x62xi32>
    %c29_i32_217 = arith.constant 29 : i32
    %964 = vector.broadcast %c29_i32_217 : i32 to vector<2x1xi32>
    %965 = arith.shrsi %959, %964 : vector<2x1xi32>
    %966 = vector.broadcast %965 : vector<2x1xi32> to vector<2x62xi32>
    %967 = arith.cmpi eq, %963, %966 : vector<2x62xi32>
    %c28_i32_218 = arith.constant 28 : i32
    %968 = vector.broadcast %c28_i32_218 : i32 to vector<2x62xi32>
    %969 = arith.shrsi %913, %968 : vector<2x62xi32>
    %c1_i32_219 = arith.constant 1 : i32
    %970 = vector.broadcast %c1_i32_219 : i32 to vector<2x62xi32>
    %971 = arith.andi %969, %970 : vector<2x62xi32>
    %c0_i32_220 = arith.constant 0 : i32
    %972 = vector.broadcast %c0_i32_220 : i32 to vector<2x62xi32>
    %973 = arith.cmpi eq, %971, %972 : vector<2x62xi32>
    %974 = arith.andi %967, %973 : vector<2x62xi1>
    %975 = arith.extui %974 : vector<2x62xi1> to vector<2x62xi32>
    %976 = arith.sitofp %975 : vector<2x62xi32> to vector<2x62xf32>
    %cst_221 = arith.constant dense<0.000000e+00> : vector<2xf32>
    %977 = vector.multi_reduction <add>, %976, %cst_221 [1] : vector<2x62xf32> to vector<2xf32>
    %978 = vector.shape_cast %977 : vector<2xf32> to vector<2x1xf32>
    %979 = arith.cmpf oge, %961, %978 : vector<2x1xf32>
    %c268435456_i32_222 = arith.constant 268435456 : i32
    %980 = vector.broadcast %c268435456_i32_222 : i32 to vector<2x1xi32>
    %981 = arith.ori %959, %980 : vector<2x1xi32>
    %982 = arith.select %979, %981, %959 : vector<2x1xi1>, vector<2x1xi32>
    %983 = arith.subf %961, %978 : vector<2x1xf32>
    %984 = arith.select %979, %983, %961 : vector<2x1xi1>, vector<2x1xf32>
    %c28_i32_223 = arith.constant 28 : i32
    %985 = vector.broadcast %c28_i32_223 : i32 to vector<2x62xi32>
    %986 = arith.shrsi %913, %985 : vector<2x62xi32>
    %c28_i32_224 = arith.constant 28 : i32
    %987 = vector.broadcast %c28_i32_224 : i32 to vector<2x1xi32>
    %988 = arith.shrsi %982, %987 : vector<2x1xi32>
    %989 = vector.broadcast %988 : vector<2x1xi32> to vector<2x62xi32>
    %990 = arith.cmpi eq, %986, %989 : vector<2x62xi32>
    %c27_i32_225 = arith.constant 27 : i32
    %991 = vector.broadcast %c27_i32_225 : i32 to vector<2x62xi32>
    %992 = arith.shrsi %913, %991 : vector<2x62xi32>
    %c1_i32_226 = arith.constant 1 : i32
    %993 = vector.broadcast %c1_i32_226 : i32 to vector<2x62xi32>
    %994 = arith.andi %992, %993 : vector<2x62xi32>
    %c0_i32_227 = arith.constant 0 : i32
    %995 = vector.broadcast %c0_i32_227 : i32 to vector<2x62xi32>
    %996 = arith.cmpi eq, %994, %995 : vector<2x62xi32>
    %997 = arith.andi %990, %996 : vector<2x62xi1>
    %998 = arith.extui %997 : vector<2x62xi1> to vector<2x62xi32>
    %999 = arith.sitofp %998 : vector<2x62xi32> to vector<2x62xf32>
    %cst_228 = arith.constant dense<0.000000e+00> : vector<2xf32>
    %1000 = vector.multi_reduction <add>, %999, %cst_228 [1] : vector<2x62xf32> to vector<2xf32>
    %1001 = vector.shape_cast %1000 : vector<2xf32> to vector<2x1xf32>
    %1002 = arith.cmpf oge, %984, %1001 : vector<2x1xf32>
    %c134217728_i32_229 = arith.constant 134217728 : i32
    %1003 = vector.broadcast %c134217728_i32_229 : i32 to vector<2x1xi32>
    %1004 = arith.ori %982, %1003 : vector<2x1xi32>
    %1005 = arith.select %1002, %1004, %982 : vector<2x1xi1>, vector<2x1xi32>
    %1006 = arith.subf %984, %1001 : vector<2x1xf32>
    %1007 = arith.select %1002, %1006, %984 : vector<2x1xi1>, vector<2x1xf32>
    %c27_i32_230 = arith.constant 27 : i32
    %1008 = vector.broadcast %c27_i32_230 : i32 to vector<2x62xi32>
    %1009 = arith.shrsi %913, %1008 : vector<2x62xi32>
    %c27_i32_231 = arith.constant 27 : i32
    %1010 = vector.broadcast %c27_i32_231 : i32 to vector<2x1xi32>
    %1011 = arith.shrsi %1005, %1010 : vector<2x1xi32>
    %1012 = vector.broadcast %1011 : vector<2x1xi32> to vector<2x62xi32>
    %1013 = arith.cmpi eq, %1009, %1012 : vector<2x62xi32>
    %c26_i32_232 = arith.constant 26 : i32
    %1014 = vector.broadcast %c26_i32_232 : i32 to vector<2x62xi32>
    %1015 = arith.shrsi %913, %1014 : vector<2x62xi32>
    %c1_i32_233 = arith.constant 1 : i32
    %1016 = vector.broadcast %c1_i32_233 : i32 to vector<2x62xi32>
    %1017 = arith.andi %1015, %1016 : vector<2x62xi32>
    %c0_i32_234 = arith.constant 0 : i32
    %1018 = vector.broadcast %c0_i32_234 : i32 to vector<2x62xi32>
    %1019 = arith.cmpi eq, %1017, %1018 : vector<2x62xi32>
    %1020 = arith.andi %1013, %1019 : vector<2x62xi1>
    %1021 = arith.extui %1020 : vector<2x62xi1> to vector<2x62xi32>
    %1022 = arith.sitofp %1021 : vector<2x62xi32> to vector<2x62xf32>
    %cst_235 = arith.constant dense<0.000000e+00> : vector<2xf32>
    %1023 = vector.multi_reduction <add>, %1022, %cst_235 [1] : vector<2x62xf32> to vector<2xf32>
    %1024 = vector.shape_cast %1023 : vector<2xf32> to vector<2x1xf32>
    %1025 = arith.cmpf oge, %1007, %1024 : vector<2x1xf32>
    %c67108864_i32_236 = arith.constant 67108864 : i32
    %1026 = vector.broadcast %c67108864_i32_236 : i32 to vector<2x1xi32>
    %1027 = arith.ori %1005, %1026 : vector<2x1xi32>
    %1028 = arith.select %1025, %1027, %1005 : vector<2x1xi1>, vector<2x1xi32>
    %1029 = arith.subf %1007, %1024 : vector<2x1xf32>
    %1030 = arith.select %1025, %1029, %1007 : vector<2x1xi1>, vector<2x1xf32>
    %c26_i32_237 = arith.constant 26 : i32
    %1031 = vector.broadcast %c26_i32_237 : i32 to vector<2x62xi32>
    %1032 = arith.shrsi %913, %1031 : vector<2x62xi32>
    %c26_i32_238 = arith.constant 26 : i32
    %1033 = vector.broadcast %c26_i32_238 : i32 to vector<2x1xi32>
    %1034 = arith.shrsi %1028, %1033 : vector<2x1xi32>
    %1035 = vector.broadcast %1034 : vector<2x1xi32> to vector<2x62xi32>
    %1036 = arith.cmpi eq, %1032, %1035 : vector<2x62xi32>
    %c25_i32_239 = arith.constant 25 : i32
    %1037 = vector.broadcast %c25_i32_239 : i32 to vector<2x62xi32>
    %1038 = arith.shrsi %913, %1037 : vector<2x62xi32>
    %c1_i32_240 = arith.constant 1 : i32
    %1039 = vector.broadcast %c1_i32_240 : i32 to vector<2x62xi32>
    %1040 = arith.andi %1038, %1039 : vector<2x62xi32>
    %c0_i32_241 = arith.constant 0 : i32
    %1041 = vector.broadcast %c0_i32_241 : i32 to vector<2x62xi32>
    %1042 = arith.cmpi eq, %1040, %1041 : vector<2x62xi32>
    %1043 = arith.andi %1036, %1042 : vector<2x62xi1>
    %1044 = arith.extui %1043 : vector<2x62xi1> to vector<2x62xi32>
    %1045 = arith.sitofp %1044 : vector<2x62xi32> to vector<2x62xf32>
    %cst_242 = arith.constant dense<0.000000e+00> : vector<2xf32>
    %1046 = vector.multi_reduction <add>, %1045, %cst_242 [1] : vector<2x62xf32> to vector<2xf32>
    %1047 = vector.shape_cast %1046 : vector<2xf32> to vector<2x1xf32>
    %1048 = arith.cmpf oge, %1030, %1047 : vector<2x1xf32>
    %c33554432_i32_243 = arith.constant 33554432 : i32
    %1049 = vector.broadcast %c33554432_i32_243 : i32 to vector<2x1xi32>
    %1050 = arith.ori %1028, %1049 : vector<2x1xi32>
    %1051 = arith.select %1048, %1050, %1028 : vector<2x1xi1>, vector<2x1xi32>
    %1052 = arith.subf %1030, %1047 : vector<2x1xf32>
    %1053 = arith.select %1048, %1052, %1030 : vector<2x1xi1>, vector<2x1xf32>
    %c25_i32_244 = arith.constant 25 : i32
    %1054 = vector.broadcast %c25_i32_244 : i32 to vector<2x62xi32>
    %1055 = arith.shrsi %913, %1054 : vector<2x62xi32>
    %c25_i32_245 = arith.constant 25 : i32
    %1056 = vector.broadcast %c25_i32_245 : i32 to vector<2x1xi32>
    %1057 = arith.shrsi %1051, %1056 : vector<2x1xi32>
    %1058 = vector.broadcast %1057 : vector<2x1xi32> to vector<2x62xi32>
    %1059 = arith.cmpi eq, %1055, %1058 : vector<2x62xi32>
    %c24_i32_246 = arith.constant 24 : i32
    %1060 = vector.broadcast %c24_i32_246 : i32 to vector<2x62xi32>
    %1061 = arith.shrsi %913, %1060 : vector<2x62xi32>
    %c1_i32_247 = arith.constant 1 : i32
    %1062 = vector.broadcast %c1_i32_247 : i32 to vector<2x62xi32>
    %1063 = arith.andi %1061, %1062 : vector<2x62xi32>
    %c0_i32_248 = arith.constant 0 : i32
    %1064 = vector.broadcast %c0_i32_248 : i32 to vector<2x62xi32>
    %1065 = arith.cmpi eq, %1063, %1064 : vector<2x62xi32>
    %1066 = arith.andi %1059, %1065 : vector<2x62xi1>
    %1067 = arith.extui %1066 : vector<2x62xi1> to vector<2x62xi32>
    %1068 = arith.sitofp %1067 : vector<2x62xi32> to vector<2x62xf32>
    %cst_249 = arith.constant dense<0.000000e+00> : vector<2xf32>
    %1069 = vector.multi_reduction <add>, %1068, %cst_249 [1] : vector<2x62xf32> to vector<2xf32>
    %1070 = vector.shape_cast %1069 : vector<2xf32> to vector<2x1xf32>
    %1071 = arith.cmpf oge, %1053, %1070 : vector<2x1xf32>
    %c16777216_i32_250 = arith.constant 16777216 : i32
    %1072 = vector.broadcast %c16777216_i32_250 : i32 to vector<2x1xi32>
    %1073 = arith.ori %1051, %1072 : vector<2x1xi32>
    %1074 = arith.select %1071, %1073, %1051 : vector<2x1xi1>, vector<2x1xi32>
    %1075 = arith.subf %1053, %1070 : vector<2x1xf32>
    %1076 = arith.select %1071, %1075, %1053 : vector<2x1xi1>, vector<2x1xf32>
    %c24_i32_251 = arith.constant 24 : i32
    %1077 = vector.broadcast %c24_i32_251 : i32 to vector<2x62xi32>
    %1078 = arith.shrsi %913, %1077 : vector<2x62xi32>
    %c24_i32_252 = arith.constant 24 : i32
    %1079 = vector.broadcast %c24_i32_252 : i32 to vector<2x1xi32>
    %1080 = arith.shrsi %1074, %1079 : vector<2x1xi32>
    %1081 = vector.broadcast %1080 : vector<2x1xi32> to vector<2x62xi32>
    %1082 = arith.cmpi eq, %1078, %1081 : vector<2x62xi32>
    %c23_i32_253 = arith.constant 23 : i32
    %1083 = vector.broadcast %c23_i32_253 : i32 to vector<2x62xi32>
    %1084 = arith.shrsi %913, %1083 : vector<2x62xi32>
    %c1_i32_254 = arith.constant 1 : i32
    %1085 = vector.broadcast %c1_i32_254 : i32 to vector<2x62xi32>
    %1086 = arith.andi %1084, %1085 : vector<2x62xi32>
    %c0_i32_255 = arith.constant 0 : i32
    %1087 = vector.broadcast %c0_i32_255 : i32 to vector<2x62xi32>
    %1088 = arith.cmpi eq, %1086, %1087 : vector<2x62xi32>
    %1089 = arith.andi %1082, %1088 : vector<2x62xi1>
    %1090 = arith.extui %1089 : vector<2x62xi1> to vector<2x62xi32>
    %1091 = arith.sitofp %1090 : vector<2x62xi32> to vector<2x62xf32>
    %cst_256 = arith.constant dense<0.000000e+00> : vector<2xf32>
    %1092 = vector.multi_reduction <add>, %1091, %cst_256 [1] : vector<2x62xf32> to vector<2xf32>
    %1093 = vector.shape_cast %1092 : vector<2xf32> to vector<2x1xf32>
    %1094 = arith.cmpf oge, %1076, %1093 : vector<2x1xf32>
    %c8388608_i32_257 = arith.constant 8388608 : i32
    %1095 = vector.broadcast %c8388608_i32_257 : i32 to vector<2x1xi32>
    %1096 = arith.ori %1074, %1095 : vector<2x1xi32>
    %1097 = arith.select %1094, %1096, %1074 : vector<2x1xi1>, vector<2x1xi32>
    %1098 = arith.subf %1076, %1093 : vector<2x1xf32>
    %1099 = arith.select %1094, %1098, %1076 : vector<2x1xi1>, vector<2x1xf32>
    %c23_i32_258 = arith.constant 23 : i32
    %1100 = vector.broadcast %c23_i32_258 : i32 to vector<2x62xi32>
    %1101 = arith.shrsi %913, %1100 : vector<2x62xi32>
    %c23_i32_259 = arith.constant 23 : i32
    %1102 = vector.broadcast %c23_i32_259 : i32 to vector<2x1xi32>
    %1103 = arith.shrsi %1097, %1102 : vector<2x1xi32>
    %1104 = vector.broadcast %1103 : vector<2x1xi32> to vector<2x62xi32>
    %1105 = arith.cmpi eq, %1101, %1104 : vector<2x62xi32>
    %c22_i32_260 = arith.constant 22 : i32
    %1106 = vector.broadcast %c22_i32_260 : i32 to vector<2x62xi32>
    %1107 = arith.shrsi %913, %1106 : vector<2x62xi32>
    %c1_i32_261 = arith.constant 1 : i32
    %1108 = vector.broadcast %c1_i32_261 : i32 to vector<2x62xi32>
    %1109 = arith.andi %1107, %1108 : vector<2x62xi32>
    %c0_i32_262 = arith.constant 0 : i32
    %1110 = vector.broadcast %c0_i32_262 : i32 to vector<2x62xi32>
    %1111 = arith.cmpi eq, %1109, %1110 : vector<2x62xi32>
    %1112 = arith.andi %1105, %1111 : vector<2x62xi1>
    %1113 = arith.extui %1112 : vector<2x62xi1> to vector<2x62xi32>
    %1114 = arith.sitofp %1113 : vector<2x62xi32> to vector<2x62xf32>
    %cst_263 = arith.constant dense<0.000000e+00> : vector<2xf32>
    %1115 = vector.multi_reduction <add>, %1114, %cst_263 [1] : vector<2x62xf32> to vector<2xf32>
    %1116 = vector.shape_cast %1115 : vector<2xf32> to vector<2x1xf32>
    %1117 = arith.cmpf oge, %1099, %1116 : vector<2x1xf32>
    %c4194304_i32_264 = arith.constant 4194304 : i32
    %1118 = vector.broadcast %c4194304_i32_264 : i32 to vector<2x1xi32>
    %1119 = arith.ori %1097, %1118 : vector<2x1xi32>
    %1120 = arith.select %1117, %1119, %1097 : vector<2x1xi1>, vector<2x1xi32>
    %1121 = arith.subf %1099, %1116 : vector<2x1xf32>
    %1122 = arith.select %1117, %1121, %1099 : vector<2x1xi1>, vector<2x1xf32>
    %c22_i32_265 = arith.constant 22 : i32
    %1123 = vector.broadcast %c22_i32_265 : i32 to vector<2x62xi32>
    %1124 = arith.shrsi %913, %1123 : vector<2x62xi32>
    %c22_i32_266 = arith.constant 22 : i32
    %1125 = vector.broadcast %c22_i32_266 : i32 to vector<2x1xi32>
    %1126 = arith.shrsi %1120, %1125 : vector<2x1xi32>
    %1127 = vector.broadcast %1126 : vector<2x1xi32> to vector<2x62xi32>
    %1128 = arith.cmpi eq, %1124, %1127 : vector<2x62xi32>
    %c21_i32_267 = arith.constant 21 : i32
    %1129 = vector.broadcast %c21_i32_267 : i32 to vector<2x62xi32>
    %1130 = arith.shrsi %913, %1129 : vector<2x62xi32>
    %c1_i32_268 = arith.constant 1 : i32
    %1131 = vector.broadcast %c1_i32_268 : i32 to vector<2x62xi32>
    %1132 = arith.andi %1130, %1131 : vector<2x62xi32>
    %c0_i32_269 = arith.constant 0 : i32
    %1133 = vector.broadcast %c0_i32_269 : i32 to vector<2x62xi32>
    %1134 = arith.cmpi eq, %1132, %1133 : vector<2x62xi32>
    %1135 = arith.andi %1128, %1134 : vector<2x62xi1>
    %1136 = arith.extui %1135 : vector<2x62xi1> to vector<2x62xi32>
    %1137 = arith.sitofp %1136 : vector<2x62xi32> to vector<2x62xf32>
    %cst_270 = arith.constant dense<0.000000e+00> : vector<2xf32>
    %1138 = vector.multi_reduction <add>, %1137, %cst_270 [1] : vector<2x62xf32> to vector<2xf32>
    %1139 = vector.shape_cast %1138 : vector<2xf32> to vector<2x1xf32>
    %1140 = arith.cmpf oge, %1122, %1139 : vector<2x1xf32>
    %c2097152_i32_271 = arith.constant 2097152 : i32
    %1141 = vector.broadcast %c2097152_i32_271 : i32 to vector<2x1xi32>
    %1142 = arith.ori %1120, %1141 : vector<2x1xi32>
    %1143 = arith.select %1140, %1142, %1120 : vector<2x1xi1>, vector<2x1xi32>
    %1144 = arith.subf %1122, %1139 : vector<2x1xf32>
    %1145 = arith.select %1140, %1144, %1122 : vector<2x1xi1>, vector<2x1xf32>
    %c21_i32_272 = arith.constant 21 : i32
    %1146 = vector.broadcast %c21_i32_272 : i32 to vector<2x62xi32>
    %1147 = arith.shrsi %913, %1146 : vector<2x62xi32>
    %c21_i32_273 = arith.constant 21 : i32
    %1148 = vector.broadcast %c21_i32_273 : i32 to vector<2x1xi32>
    %1149 = arith.shrsi %1143, %1148 : vector<2x1xi32>
    %1150 = vector.broadcast %1149 : vector<2x1xi32> to vector<2x62xi32>
    %1151 = arith.cmpi eq, %1147, %1150 : vector<2x62xi32>
    %c20_i32_274 = arith.constant 20 : i32
    %1152 = vector.broadcast %c20_i32_274 : i32 to vector<2x62xi32>
    %1153 = arith.shrsi %913, %1152 : vector<2x62xi32>
    %c1_i32_275 = arith.constant 1 : i32
    %1154 = vector.broadcast %c1_i32_275 : i32 to vector<2x62xi32>
    %1155 = arith.andi %1153, %1154 : vector<2x62xi32>
    %c0_i32_276 = arith.constant 0 : i32
    %1156 = vector.broadcast %c0_i32_276 : i32 to vector<2x62xi32>
    %1157 = arith.cmpi eq, %1155, %1156 : vector<2x62xi32>
    %1158 = arith.andi %1151, %1157 : vector<2x62xi1>
    %1159 = arith.extui %1158 : vector<2x62xi1> to vector<2x62xi32>
    %1160 = arith.sitofp %1159 : vector<2x62xi32> to vector<2x62xf32>
    %cst_277 = arith.constant dense<0.000000e+00> : vector<2xf32>
    %1161 = vector.multi_reduction <add>, %1160, %cst_277 [1] : vector<2x62xf32> to vector<2xf32>
    %1162 = vector.shape_cast %1161 : vector<2xf32> to vector<2x1xf32>
    %1163 = arith.cmpf oge, %1145, %1162 : vector<2x1xf32>
    %c1048576_i32_278 = arith.constant 1048576 : i32
    %1164 = vector.broadcast %c1048576_i32_278 : i32 to vector<2x1xi32>
    %1165 = arith.ori %1143, %1164 : vector<2x1xi32>
    %1166 = arith.select %1163, %1165, %1143 : vector<2x1xi1>, vector<2x1xi32>
    %1167 = arith.subf %1145, %1162 : vector<2x1xf32>
    %1168 = arith.select %1163, %1167, %1145 : vector<2x1xi1>, vector<2x1xf32>
    %c20_i32_279 = arith.constant 20 : i32
    %1169 = vector.broadcast %c20_i32_279 : i32 to vector<2x62xi32>
    %1170 = arith.shrsi %913, %1169 : vector<2x62xi32>
    %c20_i32_280 = arith.constant 20 : i32
    %1171 = vector.broadcast %c20_i32_280 : i32 to vector<2x1xi32>
    %1172 = arith.shrsi %1166, %1171 : vector<2x1xi32>
    %1173 = vector.broadcast %1172 : vector<2x1xi32> to vector<2x62xi32>
    %1174 = arith.cmpi eq, %1170, %1173 : vector<2x62xi32>
    %c19_i32_281 = arith.constant 19 : i32
    %1175 = vector.broadcast %c19_i32_281 : i32 to vector<2x62xi32>
    %1176 = arith.shrsi %913, %1175 : vector<2x62xi32>
    %c1_i32_282 = arith.constant 1 : i32
    %1177 = vector.broadcast %c1_i32_282 : i32 to vector<2x62xi32>
    %1178 = arith.andi %1176, %1177 : vector<2x62xi32>
    %c0_i32_283 = arith.constant 0 : i32
    %1179 = vector.broadcast %c0_i32_283 : i32 to vector<2x62xi32>
    %1180 = arith.cmpi eq, %1178, %1179 : vector<2x62xi32>
    %1181 = arith.andi %1174, %1180 : vector<2x62xi1>
    %1182 = arith.extui %1181 : vector<2x62xi1> to vector<2x62xi32>
    %1183 = arith.sitofp %1182 : vector<2x62xi32> to vector<2x62xf32>
    %cst_284 = arith.constant dense<0.000000e+00> : vector<2xf32>
    %1184 = vector.multi_reduction <add>, %1183, %cst_284 [1] : vector<2x62xf32> to vector<2xf32>
    %1185 = vector.shape_cast %1184 : vector<2xf32> to vector<2x1xf32>
    %1186 = arith.cmpf oge, %1168, %1185 : vector<2x1xf32>
    %c524288_i32_285 = arith.constant 524288 : i32
    %1187 = vector.broadcast %c524288_i32_285 : i32 to vector<2x1xi32>
    %1188 = arith.ori %1166, %1187 : vector<2x1xi32>
    %1189 = arith.select %1186, %1188, %1166 : vector<2x1xi1>, vector<2x1xi32>
    %1190 = arith.subf %1168, %1185 : vector<2x1xf32>
    %1191 = arith.select %1186, %1190, %1168 : vector<2x1xi1>, vector<2x1xf32>
    %c19_i32_286 = arith.constant 19 : i32
    %1192 = vector.broadcast %c19_i32_286 : i32 to vector<2x62xi32>
    %1193 = arith.shrsi %913, %1192 : vector<2x62xi32>
    %c19_i32_287 = arith.constant 19 : i32
    %1194 = vector.broadcast %c19_i32_287 : i32 to vector<2x1xi32>
    %1195 = arith.shrsi %1189, %1194 : vector<2x1xi32>
    %1196 = vector.broadcast %1195 : vector<2x1xi32> to vector<2x62xi32>
    %1197 = arith.cmpi eq, %1193, %1196 : vector<2x62xi32>
    %c18_i32_288 = arith.constant 18 : i32
    %1198 = vector.broadcast %c18_i32_288 : i32 to vector<2x62xi32>
    %1199 = arith.shrsi %913, %1198 : vector<2x62xi32>
    %c1_i32_289 = arith.constant 1 : i32
    %1200 = vector.broadcast %c1_i32_289 : i32 to vector<2x62xi32>
    %1201 = arith.andi %1199, %1200 : vector<2x62xi32>
    %c0_i32_290 = arith.constant 0 : i32
    %1202 = vector.broadcast %c0_i32_290 : i32 to vector<2x62xi32>
    %1203 = arith.cmpi eq, %1201, %1202 : vector<2x62xi32>
    %1204 = arith.andi %1197, %1203 : vector<2x62xi1>
    %1205 = arith.extui %1204 : vector<2x62xi1> to vector<2x62xi32>
    %1206 = arith.sitofp %1205 : vector<2x62xi32> to vector<2x62xf32>
    %cst_291 = arith.constant dense<0.000000e+00> : vector<2xf32>
    %1207 = vector.multi_reduction <add>, %1206, %cst_291 [1] : vector<2x62xf32> to vector<2xf32>
    %1208 = vector.shape_cast %1207 : vector<2xf32> to vector<2x1xf32>
    %1209 = arith.cmpf oge, %1191, %1208 : vector<2x1xf32>
    %c262144_i32_292 = arith.constant 262144 : i32
    %1210 = vector.broadcast %c262144_i32_292 : i32 to vector<2x1xi32>
    %1211 = arith.ori %1189, %1210 : vector<2x1xi32>
    %1212 = arith.select %1209, %1211, %1189 : vector<2x1xi1>, vector<2x1xi32>
    %1213 = arith.subf %1191, %1208 : vector<2x1xf32>
    %1214 = arith.select %1209, %1213, %1191 : vector<2x1xi1>, vector<2x1xf32>
    %c18_i32_293 = arith.constant 18 : i32
    %1215 = vector.broadcast %c18_i32_293 : i32 to vector<2x62xi32>
    %1216 = arith.shrsi %913, %1215 : vector<2x62xi32>
    %c18_i32_294 = arith.constant 18 : i32
    %1217 = vector.broadcast %c18_i32_294 : i32 to vector<2x1xi32>
    %1218 = arith.shrsi %1212, %1217 : vector<2x1xi32>
    %1219 = vector.broadcast %1218 : vector<2x1xi32> to vector<2x62xi32>
    %1220 = arith.cmpi eq, %1216, %1219 : vector<2x62xi32>
    %c17_i32_295 = arith.constant 17 : i32
    %1221 = vector.broadcast %c17_i32_295 : i32 to vector<2x62xi32>
    %1222 = arith.shrsi %913, %1221 : vector<2x62xi32>
    %c1_i32_296 = arith.constant 1 : i32
    %1223 = vector.broadcast %c1_i32_296 : i32 to vector<2x62xi32>
    %1224 = arith.andi %1222, %1223 : vector<2x62xi32>
    %c0_i32_297 = arith.constant 0 : i32
    %1225 = vector.broadcast %c0_i32_297 : i32 to vector<2x62xi32>
    %1226 = arith.cmpi eq, %1224, %1225 : vector<2x62xi32>
    %1227 = arith.andi %1220, %1226 : vector<2x62xi1>
    %1228 = arith.extui %1227 : vector<2x62xi1> to vector<2x62xi32>
    %1229 = arith.sitofp %1228 : vector<2x62xi32> to vector<2x62xf32>
    %cst_298 = arith.constant dense<0.000000e+00> : vector<2xf32>
    %1230 = vector.multi_reduction <add>, %1229, %cst_298 [1] : vector<2x62xf32> to vector<2xf32>
    %1231 = vector.shape_cast %1230 : vector<2xf32> to vector<2x1xf32>
    %1232 = arith.cmpf oge, %1214, %1231 : vector<2x1xf32>
    %c131072_i32_299 = arith.constant 131072 : i32
    %1233 = vector.broadcast %c131072_i32_299 : i32 to vector<2x1xi32>
    %1234 = arith.ori %1212, %1233 : vector<2x1xi32>
    %1235 = arith.select %1232, %1234, %1212 : vector<2x1xi1>, vector<2x1xi32>
    %1236 = arith.subf %1214, %1231 : vector<2x1xf32>
    %1237 = arith.select %1232, %1236, %1214 : vector<2x1xi1>, vector<2x1xf32>
    %c17_i32_300 = arith.constant 17 : i32
    %1238 = vector.broadcast %c17_i32_300 : i32 to vector<2x62xi32>
    %1239 = arith.shrsi %913, %1238 : vector<2x62xi32>
    %c17_i32_301 = arith.constant 17 : i32
    %1240 = vector.broadcast %c17_i32_301 : i32 to vector<2x1xi32>
    %1241 = arith.shrsi %1235, %1240 : vector<2x1xi32>
    %1242 = vector.broadcast %1241 : vector<2x1xi32> to vector<2x62xi32>
    %1243 = arith.cmpi eq, %1239, %1242 : vector<2x62xi32>
    %c16_i32_302 = arith.constant 16 : i32
    %1244 = vector.broadcast %c16_i32_302 : i32 to vector<2x62xi32>
    %1245 = arith.shrsi %913, %1244 : vector<2x62xi32>
    %c1_i32_303 = arith.constant 1 : i32
    %1246 = vector.broadcast %c1_i32_303 : i32 to vector<2x62xi32>
    %1247 = arith.andi %1245, %1246 : vector<2x62xi32>
    %c0_i32_304 = arith.constant 0 : i32
    %1248 = vector.broadcast %c0_i32_304 : i32 to vector<2x62xi32>
    %1249 = arith.cmpi eq, %1247, %1248 : vector<2x62xi32>
    %1250 = arith.andi %1243, %1249 : vector<2x62xi1>
    %1251 = arith.extui %1250 : vector<2x62xi1> to vector<2x62xi32>
    %1252 = arith.sitofp %1251 : vector<2x62xi32> to vector<2x62xf32>
    %cst_305 = arith.constant dense<0.000000e+00> : vector<2xf32>
    %1253 = vector.multi_reduction <add>, %1252, %cst_305 [1] : vector<2x62xf32> to vector<2xf32>
    %1254 = vector.shape_cast %1253 : vector<2xf32> to vector<2x1xf32>
    %1255 = arith.cmpf oge, %1237, %1254 : vector<2x1xf32>
    %c65536_i32_306 = arith.constant 65536 : i32
    %1256 = vector.broadcast %c65536_i32_306 : i32 to vector<2x1xi32>
    %1257 = arith.ori %1235, %1256 : vector<2x1xi32>
    %1258 = arith.select %1255, %1257, %1235 : vector<2x1xi1>, vector<2x1xi32>
    %1259 = arith.subf %1237, %1254 : vector<2x1xf32>
    %1260 = arith.select %1255, %1259, %1237 : vector<2x1xi1>, vector<2x1xf32>
    %c16_i32_307 = arith.constant 16 : i32
    %1261 = vector.broadcast %c16_i32_307 : i32 to vector<2x62xi32>
    %1262 = arith.shrsi %913, %1261 : vector<2x62xi32>
    %c16_i32_308 = arith.constant 16 : i32
    %1263 = vector.broadcast %c16_i32_308 : i32 to vector<2x1xi32>
    %1264 = arith.shrsi %1258, %1263 : vector<2x1xi32>
    %1265 = vector.broadcast %1264 : vector<2x1xi32> to vector<2x62xi32>
    %1266 = arith.cmpi eq, %1262, %1265 : vector<2x62xi32>
    %c15_i32_309 = arith.constant 15 : i32
    %1267 = vector.broadcast %c15_i32_309 : i32 to vector<2x62xi32>
    %1268 = arith.shrsi %913, %1267 : vector<2x62xi32>
    %c1_i32_310 = arith.constant 1 : i32
    %1269 = vector.broadcast %c1_i32_310 : i32 to vector<2x62xi32>
    %1270 = arith.andi %1268, %1269 : vector<2x62xi32>
    %c0_i32_311 = arith.constant 0 : i32
    %1271 = vector.broadcast %c0_i32_311 : i32 to vector<2x62xi32>
    %1272 = arith.cmpi eq, %1270, %1271 : vector<2x62xi32>
    %1273 = arith.andi %1266, %1272 : vector<2x62xi1>
    %1274 = arith.extui %1273 : vector<2x62xi1> to vector<2x62xi32>
    %1275 = arith.sitofp %1274 : vector<2x62xi32> to vector<2x62xf32>
    %cst_312 = arith.constant dense<0.000000e+00> : vector<2xf32>
    %1276 = vector.multi_reduction <add>, %1275, %cst_312 [1] : vector<2x62xf32> to vector<2xf32>
    %1277 = vector.shape_cast %1276 : vector<2xf32> to vector<2x1xf32>
    %1278 = arith.cmpf oge, %1260, %1277 : vector<2x1xf32>
    %c32768_i32_313 = arith.constant 32768 : i32
    %1279 = vector.broadcast %c32768_i32_313 : i32 to vector<2x1xi32>
    %1280 = arith.ori %1258, %1279 : vector<2x1xi32>
    %1281 = arith.select %1278, %1280, %1258 : vector<2x1xi1>, vector<2x1xi32>
    %1282 = arith.subf %1260, %1277 : vector<2x1xf32>
    %1283 = arith.select %1278, %1282, %1260 : vector<2x1xi1>, vector<2x1xf32>
    %c15_i32_314 = arith.constant 15 : i32
    %1284 = vector.broadcast %c15_i32_314 : i32 to vector<2x62xi32>
    %1285 = arith.shrsi %913, %1284 : vector<2x62xi32>
    %c15_i32_315 = arith.constant 15 : i32
    %1286 = vector.broadcast %c15_i32_315 : i32 to vector<2x1xi32>
    %1287 = arith.shrsi %1281, %1286 : vector<2x1xi32>
    %1288 = vector.broadcast %1287 : vector<2x1xi32> to vector<2x62xi32>
    %1289 = arith.cmpi eq, %1285, %1288 : vector<2x62xi32>
    %c14_i32_316 = arith.constant 14 : i32
    %1290 = vector.broadcast %c14_i32_316 : i32 to vector<2x62xi32>
    %1291 = arith.shrsi %913, %1290 : vector<2x62xi32>
    %c1_i32_317 = arith.constant 1 : i32
    %1292 = vector.broadcast %c1_i32_317 : i32 to vector<2x62xi32>
    %1293 = arith.andi %1291, %1292 : vector<2x62xi32>
    %c0_i32_318 = arith.constant 0 : i32
    %1294 = vector.broadcast %c0_i32_318 : i32 to vector<2x62xi32>
    %1295 = arith.cmpi eq, %1293, %1294 : vector<2x62xi32>
    %1296 = arith.andi %1289, %1295 : vector<2x62xi1>
    %1297 = arith.extui %1296 : vector<2x62xi1> to vector<2x62xi32>
    %1298 = arith.sitofp %1297 : vector<2x62xi32> to vector<2x62xf32>
    %cst_319 = arith.constant dense<0.000000e+00> : vector<2xf32>
    %1299 = vector.multi_reduction <add>, %1298, %cst_319 [1] : vector<2x62xf32> to vector<2xf32>
    %1300 = vector.shape_cast %1299 : vector<2xf32> to vector<2x1xf32>
    %1301 = arith.cmpf oge, %1283, %1300 : vector<2x1xf32>
    %c16384_i32_320 = arith.constant 16384 : i32
    %1302 = vector.broadcast %c16384_i32_320 : i32 to vector<2x1xi32>
    %1303 = arith.ori %1281, %1302 : vector<2x1xi32>
    %1304 = arith.select %1301, %1303, %1281 : vector<2x1xi1>, vector<2x1xi32>
    %1305 = arith.subf %1283, %1300 : vector<2x1xf32>
    %1306 = arith.select %1301, %1305, %1283 : vector<2x1xi1>, vector<2x1xf32>
    %c14_i32_321 = arith.constant 14 : i32
    %1307 = vector.broadcast %c14_i32_321 : i32 to vector<2x62xi32>
    %1308 = arith.shrsi %913, %1307 : vector<2x62xi32>
    %c14_i32_322 = arith.constant 14 : i32
    %1309 = vector.broadcast %c14_i32_322 : i32 to vector<2x1xi32>
    %1310 = arith.shrsi %1304, %1309 : vector<2x1xi32>
    %1311 = vector.broadcast %1310 : vector<2x1xi32> to vector<2x62xi32>
    %1312 = arith.cmpi eq, %1308, %1311 : vector<2x62xi32>
    %c13_i32_323 = arith.constant 13 : i32
    %1313 = vector.broadcast %c13_i32_323 : i32 to vector<2x62xi32>
    %1314 = arith.shrsi %913, %1313 : vector<2x62xi32>
    %c1_i32_324 = arith.constant 1 : i32
    %1315 = vector.broadcast %c1_i32_324 : i32 to vector<2x62xi32>
    %1316 = arith.andi %1314, %1315 : vector<2x62xi32>
    %c0_i32_325 = arith.constant 0 : i32
    %1317 = vector.broadcast %c0_i32_325 : i32 to vector<2x62xi32>
    %1318 = arith.cmpi eq, %1316, %1317 : vector<2x62xi32>
    %1319 = arith.andi %1312, %1318 : vector<2x62xi1>
    %1320 = arith.extui %1319 : vector<2x62xi1> to vector<2x62xi32>
    %1321 = arith.sitofp %1320 : vector<2x62xi32> to vector<2x62xf32>
    %cst_326 = arith.constant dense<0.000000e+00> : vector<2xf32>
    %1322 = vector.multi_reduction <add>, %1321, %cst_326 [1] : vector<2x62xf32> to vector<2xf32>
    %1323 = vector.shape_cast %1322 : vector<2xf32> to vector<2x1xf32>
    %1324 = arith.cmpf oge, %1306, %1323 : vector<2x1xf32>
    %c8192_i32_327 = arith.constant 8192 : i32
    %1325 = vector.broadcast %c8192_i32_327 : i32 to vector<2x1xi32>
    %1326 = arith.ori %1304, %1325 : vector<2x1xi32>
    %1327 = arith.select %1324, %1326, %1304 : vector<2x1xi1>, vector<2x1xi32>
    %1328 = arith.subf %1306, %1323 : vector<2x1xf32>
    %1329 = arith.select %1324, %1328, %1306 : vector<2x1xi1>, vector<2x1xf32>
    %c13_i32_328 = arith.constant 13 : i32
    %1330 = vector.broadcast %c13_i32_328 : i32 to vector<2x62xi32>
    %1331 = arith.shrsi %913, %1330 : vector<2x62xi32>
    %c13_i32_329 = arith.constant 13 : i32
    %1332 = vector.broadcast %c13_i32_329 : i32 to vector<2x1xi32>
    %1333 = arith.shrsi %1327, %1332 : vector<2x1xi32>
    %1334 = vector.broadcast %1333 : vector<2x1xi32> to vector<2x62xi32>
    %1335 = arith.cmpi eq, %1331, %1334 : vector<2x62xi32>
    %c12_i32_330 = arith.constant 12 : i32
    %1336 = vector.broadcast %c12_i32_330 : i32 to vector<2x62xi32>
    %1337 = arith.shrsi %913, %1336 : vector<2x62xi32>
    %c1_i32_331 = arith.constant 1 : i32
    %1338 = vector.broadcast %c1_i32_331 : i32 to vector<2x62xi32>
    %1339 = arith.andi %1337, %1338 : vector<2x62xi32>
    %c0_i32_332 = arith.constant 0 : i32
    %1340 = vector.broadcast %c0_i32_332 : i32 to vector<2x62xi32>
    %1341 = arith.cmpi eq, %1339, %1340 : vector<2x62xi32>
    %1342 = arith.andi %1335, %1341 : vector<2x62xi1>
    %1343 = arith.extui %1342 : vector<2x62xi1> to vector<2x62xi32>
    %1344 = arith.sitofp %1343 : vector<2x62xi32> to vector<2x62xf32>
    %cst_333 = arith.constant dense<0.000000e+00> : vector<2xf32>
    %1345 = vector.multi_reduction <add>, %1344, %cst_333 [1] : vector<2x62xf32> to vector<2xf32>
    %1346 = vector.shape_cast %1345 : vector<2xf32> to vector<2x1xf32>
    %1347 = arith.cmpf oge, %1329, %1346 : vector<2x1xf32>
    %c4096_i32_334 = arith.constant 4096 : i32
    %1348 = vector.broadcast %c4096_i32_334 : i32 to vector<2x1xi32>
    %1349 = arith.ori %1327, %1348 : vector<2x1xi32>
    %1350 = arith.select %1347, %1349, %1327 : vector<2x1xi1>, vector<2x1xi32>
    %1351 = arith.subf %1329, %1346 : vector<2x1xf32>
    %1352 = arith.select %1347, %1351, %1329 : vector<2x1xi1>, vector<2x1xf32>
    %c12_i32_335 = arith.constant 12 : i32
    %1353 = vector.broadcast %c12_i32_335 : i32 to vector<2x62xi32>
    %1354 = arith.shrsi %913, %1353 : vector<2x62xi32>
    %c12_i32_336 = arith.constant 12 : i32
    %1355 = vector.broadcast %c12_i32_336 : i32 to vector<2x1xi32>
    %1356 = arith.shrsi %1350, %1355 : vector<2x1xi32>
    %1357 = vector.broadcast %1356 : vector<2x1xi32> to vector<2x62xi32>
    %1358 = arith.cmpi eq, %1354, %1357 : vector<2x62xi32>
    %c11_i32_337 = arith.constant 11 : i32
    %1359 = vector.broadcast %c11_i32_337 : i32 to vector<2x62xi32>
    %1360 = arith.shrsi %913, %1359 : vector<2x62xi32>
    %c1_i32_338 = arith.constant 1 : i32
    %1361 = vector.broadcast %c1_i32_338 : i32 to vector<2x62xi32>
    %1362 = arith.andi %1360, %1361 : vector<2x62xi32>
    %c0_i32_339 = arith.constant 0 : i32
    %1363 = vector.broadcast %c0_i32_339 : i32 to vector<2x62xi32>
    %1364 = arith.cmpi eq, %1362, %1363 : vector<2x62xi32>
    %1365 = arith.andi %1358, %1364 : vector<2x62xi1>
    %1366 = arith.extui %1365 : vector<2x62xi1> to vector<2x62xi32>
    %1367 = arith.sitofp %1366 : vector<2x62xi32> to vector<2x62xf32>
    %cst_340 = arith.constant dense<0.000000e+00> : vector<2xf32>
    %1368 = vector.multi_reduction <add>, %1367, %cst_340 [1] : vector<2x62xf32> to vector<2xf32>
    %1369 = vector.shape_cast %1368 : vector<2xf32> to vector<2x1xf32>
    %1370 = arith.cmpf oge, %1352, %1369 : vector<2x1xf32>
    %c2048_i32_341 = arith.constant 2048 : i32
    %1371 = vector.broadcast %c2048_i32_341 : i32 to vector<2x1xi32>
    %1372 = arith.ori %1350, %1371 : vector<2x1xi32>
    %1373 = arith.select %1370, %1372, %1350 : vector<2x1xi1>, vector<2x1xi32>
    %1374 = arith.subf %1352, %1369 : vector<2x1xf32>
    %1375 = arith.select %1370, %1374, %1352 : vector<2x1xi1>, vector<2x1xf32>
    %c11_i32_342 = arith.constant 11 : i32
    %1376 = vector.broadcast %c11_i32_342 : i32 to vector<2x62xi32>
    %1377 = arith.shrsi %913, %1376 : vector<2x62xi32>
    %c11_i32_343 = arith.constant 11 : i32
    %1378 = vector.broadcast %c11_i32_343 : i32 to vector<2x1xi32>
    %1379 = arith.shrsi %1373, %1378 : vector<2x1xi32>
    %1380 = vector.broadcast %1379 : vector<2x1xi32> to vector<2x62xi32>
    %1381 = arith.cmpi eq, %1377, %1380 : vector<2x62xi32>
    %c10_i32_344 = arith.constant 10 : i32
    %1382 = vector.broadcast %c10_i32_344 : i32 to vector<2x62xi32>
    %1383 = arith.shrsi %913, %1382 : vector<2x62xi32>
    %c1_i32_345 = arith.constant 1 : i32
    %1384 = vector.broadcast %c1_i32_345 : i32 to vector<2x62xi32>
    %1385 = arith.andi %1383, %1384 : vector<2x62xi32>
    %c0_i32_346 = arith.constant 0 : i32
    %1386 = vector.broadcast %c0_i32_346 : i32 to vector<2x62xi32>
    %1387 = arith.cmpi eq, %1385, %1386 : vector<2x62xi32>
    %1388 = arith.andi %1381, %1387 : vector<2x62xi1>
    %1389 = arith.extui %1388 : vector<2x62xi1> to vector<2x62xi32>
    %1390 = arith.sitofp %1389 : vector<2x62xi32> to vector<2x62xf32>
    %cst_347 = arith.constant dense<0.000000e+00> : vector<2xf32>
    %1391 = vector.multi_reduction <add>, %1390, %cst_347 [1] : vector<2x62xf32> to vector<2xf32>
    %1392 = vector.shape_cast %1391 : vector<2xf32> to vector<2x1xf32>
    %1393 = arith.cmpf oge, %1375, %1392 : vector<2x1xf32>
    %c1024_i32_348 = arith.constant 1024 : i32
    %1394 = vector.broadcast %c1024_i32_348 : i32 to vector<2x1xi32>
    %1395 = arith.ori %1373, %1394 : vector<2x1xi32>
    %1396 = arith.select %1393, %1395, %1373 : vector<2x1xi1>, vector<2x1xi32>
    %1397 = arith.subf %1375, %1392 : vector<2x1xf32>
    %1398 = arith.select %1393, %1397, %1375 : vector<2x1xi1>, vector<2x1xf32>
    %c10_i32_349 = arith.constant 10 : i32
    %1399 = vector.broadcast %c10_i32_349 : i32 to vector<2x62xi32>
    %1400 = arith.shrsi %913, %1399 : vector<2x62xi32>
    %c10_i32_350 = arith.constant 10 : i32
    %1401 = vector.broadcast %c10_i32_350 : i32 to vector<2x1xi32>
    %1402 = arith.shrsi %1396, %1401 : vector<2x1xi32>
    %1403 = vector.broadcast %1402 : vector<2x1xi32> to vector<2x62xi32>
    %1404 = arith.cmpi eq, %1400, %1403 : vector<2x62xi32>
    %c9_i32_351 = arith.constant 9 : i32
    %1405 = vector.broadcast %c9_i32_351 : i32 to vector<2x62xi32>
    %1406 = arith.shrsi %913, %1405 : vector<2x62xi32>
    %c1_i32_352 = arith.constant 1 : i32
    %1407 = vector.broadcast %c1_i32_352 : i32 to vector<2x62xi32>
    %1408 = arith.andi %1406, %1407 : vector<2x62xi32>
    %c0_i32_353 = arith.constant 0 : i32
    %1409 = vector.broadcast %c0_i32_353 : i32 to vector<2x62xi32>
    %1410 = arith.cmpi eq, %1408, %1409 : vector<2x62xi32>
    %1411 = arith.andi %1404, %1410 : vector<2x62xi1>
    %1412 = arith.extui %1411 : vector<2x62xi1> to vector<2x62xi32>
    %1413 = arith.sitofp %1412 : vector<2x62xi32> to vector<2x62xf32>
    %cst_354 = arith.constant dense<0.000000e+00> : vector<2xf32>
    %1414 = vector.multi_reduction <add>, %1413, %cst_354 [1] : vector<2x62xf32> to vector<2xf32>
    %1415 = vector.shape_cast %1414 : vector<2xf32> to vector<2x1xf32>
    %1416 = arith.cmpf oge, %1398, %1415 : vector<2x1xf32>
    %c512_i32_355 = arith.constant 512 : i32
    %1417 = vector.broadcast %c512_i32_355 : i32 to vector<2x1xi32>
    %1418 = arith.ori %1396, %1417 : vector<2x1xi32>
    %1419 = arith.select %1416, %1418, %1396 : vector<2x1xi1>, vector<2x1xi32>
    %1420 = arith.subf %1398, %1415 : vector<2x1xf32>
    %1421 = arith.select %1416, %1420, %1398 : vector<2x1xi1>, vector<2x1xf32>
    %c9_i32_356 = arith.constant 9 : i32
    %1422 = vector.broadcast %c9_i32_356 : i32 to vector<2x62xi32>
    %1423 = arith.shrsi %913, %1422 : vector<2x62xi32>
    %c9_i32_357 = arith.constant 9 : i32
    %1424 = vector.broadcast %c9_i32_357 : i32 to vector<2x1xi32>
    %1425 = arith.shrsi %1419, %1424 : vector<2x1xi32>
    %1426 = vector.broadcast %1425 : vector<2x1xi32> to vector<2x62xi32>
    %1427 = arith.cmpi eq, %1423, %1426 : vector<2x62xi32>
    %c8_i32_358 = arith.constant 8 : i32
    %1428 = vector.broadcast %c8_i32_358 : i32 to vector<2x62xi32>
    %1429 = arith.shrsi %913, %1428 : vector<2x62xi32>
    %c1_i32_359 = arith.constant 1 : i32
    %1430 = vector.broadcast %c1_i32_359 : i32 to vector<2x62xi32>
    %1431 = arith.andi %1429, %1430 : vector<2x62xi32>
    %c0_i32_360 = arith.constant 0 : i32
    %1432 = vector.broadcast %c0_i32_360 : i32 to vector<2x62xi32>
    %1433 = arith.cmpi eq, %1431, %1432 : vector<2x62xi32>
    %1434 = arith.andi %1427, %1433 : vector<2x62xi1>
    %1435 = arith.extui %1434 : vector<2x62xi1> to vector<2x62xi32>
    %1436 = arith.sitofp %1435 : vector<2x62xi32> to vector<2x62xf32>
    %cst_361 = arith.constant dense<0.000000e+00> : vector<2xf32>
    %1437 = vector.multi_reduction <add>, %1436, %cst_361 [1] : vector<2x62xf32> to vector<2xf32>
    %1438 = vector.shape_cast %1437 : vector<2xf32> to vector<2x1xf32>
    %1439 = arith.cmpf oge, %1421, %1438 : vector<2x1xf32>
    %c256_i32_362 = arith.constant 256 : i32
    %1440 = vector.broadcast %c256_i32_362 : i32 to vector<2x1xi32>
    %1441 = arith.ori %1419, %1440 : vector<2x1xi32>
    %1442 = arith.select %1439, %1441, %1419 : vector<2x1xi1>, vector<2x1xi32>
    %1443 = arith.subf %1421, %1438 : vector<2x1xf32>
    %1444 = arith.select %1439, %1443, %1421 : vector<2x1xi1>, vector<2x1xf32>
    %c8_i32_363 = arith.constant 8 : i32
    %1445 = vector.broadcast %c8_i32_363 : i32 to vector<2x62xi32>
    %1446 = arith.shrsi %913, %1445 : vector<2x62xi32>
    %c8_i32_364 = arith.constant 8 : i32
    %1447 = vector.broadcast %c8_i32_364 : i32 to vector<2x1xi32>
    %1448 = arith.shrsi %1442, %1447 : vector<2x1xi32>
    %1449 = vector.broadcast %1448 : vector<2x1xi32> to vector<2x62xi32>
    %1450 = arith.cmpi eq, %1446, %1449 : vector<2x62xi32>
    %c7_i32_365 = arith.constant 7 : i32
    %1451 = vector.broadcast %c7_i32_365 : i32 to vector<2x62xi32>
    %1452 = arith.shrsi %913, %1451 : vector<2x62xi32>
    %c1_i32_366 = arith.constant 1 : i32
    %1453 = vector.broadcast %c1_i32_366 : i32 to vector<2x62xi32>
    %1454 = arith.andi %1452, %1453 : vector<2x62xi32>
    %c0_i32_367 = arith.constant 0 : i32
    %1455 = vector.broadcast %c0_i32_367 : i32 to vector<2x62xi32>
    %1456 = arith.cmpi eq, %1454, %1455 : vector<2x62xi32>
    %1457 = arith.andi %1450, %1456 : vector<2x62xi1>
    %1458 = arith.extui %1457 : vector<2x62xi1> to vector<2x62xi32>
    %1459 = arith.sitofp %1458 : vector<2x62xi32> to vector<2x62xf32>
    %cst_368 = arith.constant dense<0.000000e+00> : vector<2xf32>
    %1460 = vector.multi_reduction <add>, %1459, %cst_368 [1] : vector<2x62xf32> to vector<2xf32>
    %1461 = vector.shape_cast %1460 : vector<2xf32> to vector<2x1xf32>
    %1462 = arith.cmpf oge, %1444, %1461 : vector<2x1xf32>
    %c128_i32_369 = arith.constant 128 : i32
    %1463 = vector.broadcast %c128_i32_369 : i32 to vector<2x1xi32>
    %1464 = arith.ori %1442, %1463 : vector<2x1xi32>
    %1465 = arith.select %1462, %1464, %1442 : vector<2x1xi1>, vector<2x1xi32>
    %1466 = arith.subf %1444, %1461 : vector<2x1xf32>
    %1467 = arith.select %1462, %1466, %1444 : vector<2x1xi1>, vector<2x1xf32>
    %c7_i32_370 = arith.constant 7 : i32
    %1468 = vector.broadcast %c7_i32_370 : i32 to vector<2x62xi32>
    %1469 = arith.shrsi %913, %1468 : vector<2x62xi32>
    %c7_i32_371 = arith.constant 7 : i32
    %1470 = vector.broadcast %c7_i32_371 : i32 to vector<2x1xi32>
    %1471 = arith.shrsi %1465, %1470 : vector<2x1xi32>
    %1472 = vector.broadcast %1471 : vector<2x1xi32> to vector<2x62xi32>
    %1473 = arith.cmpi eq, %1469, %1472 : vector<2x62xi32>
    %c6_i32_372 = arith.constant 6 : i32
    %1474 = vector.broadcast %c6_i32_372 : i32 to vector<2x62xi32>
    %1475 = arith.shrsi %913, %1474 : vector<2x62xi32>
    %c1_i32_373 = arith.constant 1 : i32
    %1476 = vector.broadcast %c1_i32_373 : i32 to vector<2x62xi32>
    %1477 = arith.andi %1475, %1476 : vector<2x62xi32>
    %c0_i32_374 = arith.constant 0 : i32
    %1478 = vector.broadcast %c0_i32_374 : i32 to vector<2x62xi32>
    %1479 = arith.cmpi eq, %1477, %1478 : vector<2x62xi32>
    %1480 = arith.andi %1473, %1479 : vector<2x62xi1>
    %1481 = arith.extui %1480 : vector<2x62xi1> to vector<2x62xi32>
    %1482 = arith.sitofp %1481 : vector<2x62xi32> to vector<2x62xf32>
    %cst_375 = arith.constant dense<0.000000e+00> : vector<2xf32>
    %1483 = vector.multi_reduction <add>, %1482, %cst_375 [1] : vector<2x62xf32> to vector<2xf32>
    %1484 = vector.shape_cast %1483 : vector<2xf32> to vector<2x1xf32>
    %1485 = arith.cmpf oge, %1467, %1484 : vector<2x1xf32>
    %c64_i32_376 = arith.constant 64 : i32
    %1486 = vector.broadcast %c64_i32_376 : i32 to vector<2x1xi32>
    %1487 = arith.ori %1465, %1486 : vector<2x1xi32>
    %1488 = arith.select %1485, %1487, %1465 : vector<2x1xi1>, vector<2x1xi32>
    %1489 = arith.subf %1467, %1484 : vector<2x1xf32>
    %1490 = arith.select %1485, %1489, %1467 : vector<2x1xi1>, vector<2x1xf32>
    %c6_i32_377 = arith.constant 6 : i32
    %1491 = vector.broadcast %c6_i32_377 : i32 to vector<2x62xi32>
    %1492 = arith.shrsi %913, %1491 : vector<2x62xi32>
    %c6_i32_378 = arith.constant 6 : i32
    %1493 = vector.broadcast %c6_i32_378 : i32 to vector<2x1xi32>
    %1494 = arith.shrsi %1488, %1493 : vector<2x1xi32>
    %1495 = vector.broadcast %1494 : vector<2x1xi32> to vector<2x62xi32>
    %1496 = arith.cmpi eq, %1492, %1495 : vector<2x62xi32>
    %c5_i32_379 = arith.constant 5 : i32
    %1497 = vector.broadcast %c5_i32_379 : i32 to vector<2x62xi32>
    %1498 = arith.shrsi %913, %1497 : vector<2x62xi32>
    %c1_i32_380 = arith.constant 1 : i32
    %1499 = vector.broadcast %c1_i32_380 : i32 to vector<2x62xi32>
    %1500 = arith.andi %1498, %1499 : vector<2x62xi32>
    %c0_i32_381 = arith.constant 0 : i32
    %1501 = vector.broadcast %c0_i32_381 : i32 to vector<2x62xi32>
    %1502 = arith.cmpi eq, %1500, %1501 : vector<2x62xi32>
    %1503 = arith.andi %1496, %1502 : vector<2x62xi1>
    %1504 = arith.extui %1503 : vector<2x62xi1> to vector<2x62xi32>
    %1505 = arith.sitofp %1504 : vector<2x62xi32> to vector<2x62xf32>
    %cst_382 = arith.constant dense<0.000000e+00> : vector<2xf32>
    %1506 = vector.multi_reduction <add>, %1505, %cst_382 [1] : vector<2x62xf32> to vector<2xf32>
    %1507 = vector.shape_cast %1506 : vector<2xf32> to vector<2x1xf32>
    %1508 = arith.cmpf oge, %1490, %1507 : vector<2x1xf32>
    %c32_i32_383 = arith.constant 32 : i32
    %1509 = vector.broadcast %c32_i32_383 : i32 to vector<2x1xi32>
    %1510 = arith.ori %1488, %1509 : vector<2x1xi32>
    %1511 = arith.select %1508, %1510, %1488 : vector<2x1xi1>, vector<2x1xi32>
    %1512 = arith.subf %1490, %1507 : vector<2x1xf32>
    %1513 = arith.select %1508, %1512, %1490 : vector<2x1xi1>, vector<2x1xf32>
    %c5_i32_384 = arith.constant 5 : i32
    %1514 = vector.broadcast %c5_i32_384 : i32 to vector<2x62xi32>
    %1515 = arith.shrsi %913, %1514 : vector<2x62xi32>
    %c5_i32_385 = arith.constant 5 : i32
    %1516 = vector.broadcast %c5_i32_385 : i32 to vector<2x1xi32>
    %1517 = arith.shrsi %1511, %1516 : vector<2x1xi32>
    %1518 = vector.broadcast %1517 : vector<2x1xi32> to vector<2x62xi32>
    %1519 = arith.cmpi eq, %1515, %1518 : vector<2x62xi32>
    %c4_i32_386 = arith.constant 4 : i32
    %1520 = vector.broadcast %c4_i32_386 : i32 to vector<2x62xi32>
    %1521 = arith.shrsi %913, %1520 : vector<2x62xi32>
    %c1_i32_387 = arith.constant 1 : i32
    %1522 = vector.broadcast %c1_i32_387 : i32 to vector<2x62xi32>
    %1523 = arith.andi %1521, %1522 : vector<2x62xi32>
    %c0_i32_388 = arith.constant 0 : i32
    %1524 = vector.broadcast %c0_i32_388 : i32 to vector<2x62xi32>
    %1525 = arith.cmpi eq, %1523, %1524 : vector<2x62xi32>
    %1526 = arith.andi %1519, %1525 : vector<2x62xi1>
    %1527 = arith.extui %1526 : vector<2x62xi1> to vector<2x62xi32>
    %1528 = arith.sitofp %1527 : vector<2x62xi32> to vector<2x62xf32>
    %cst_389 = arith.constant dense<0.000000e+00> : vector<2xf32>
    %1529 = vector.multi_reduction <add>, %1528, %cst_389 [1] : vector<2x62xf32> to vector<2xf32>
    %1530 = vector.shape_cast %1529 : vector<2xf32> to vector<2x1xf32>
    %1531 = arith.cmpf oge, %1513, %1530 : vector<2x1xf32>
    %c16_i32_390 = arith.constant 16 : i32
    %1532 = vector.broadcast %c16_i32_390 : i32 to vector<2x1xi32>
    %1533 = arith.ori %1511, %1532 : vector<2x1xi32>
    %1534 = arith.select %1531, %1533, %1511 : vector<2x1xi1>, vector<2x1xi32>
    %1535 = arith.subf %1513, %1530 : vector<2x1xf32>
    %1536 = arith.select %1531, %1535, %1513 : vector<2x1xi1>, vector<2x1xf32>
    %c4_i32_391 = arith.constant 4 : i32
    %1537 = vector.broadcast %c4_i32_391 : i32 to vector<2x62xi32>
    %1538 = arith.shrsi %913, %1537 : vector<2x62xi32>
    %c4_i32_392 = arith.constant 4 : i32
    %1539 = vector.broadcast %c4_i32_392 : i32 to vector<2x1xi32>
    %1540 = arith.shrsi %1534, %1539 : vector<2x1xi32>
    %1541 = vector.broadcast %1540 : vector<2x1xi32> to vector<2x62xi32>
    %1542 = arith.cmpi eq, %1538, %1541 : vector<2x62xi32>
    %c3_i32_393 = arith.constant 3 : i32
    %1543 = vector.broadcast %c3_i32_393 : i32 to vector<2x62xi32>
    %1544 = arith.shrsi %913, %1543 : vector<2x62xi32>
    %c1_i32_394 = arith.constant 1 : i32
    %1545 = vector.broadcast %c1_i32_394 : i32 to vector<2x62xi32>
    %1546 = arith.andi %1544, %1545 : vector<2x62xi32>
    %c0_i32_395 = arith.constant 0 : i32
    %1547 = vector.broadcast %c0_i32_395 : i32 to vector<2x62xi32>
    %1548 = arith.cmpi eq, %1546, %1547 : vector<2x62xi32>
    %1549 = arith.andi %1542, %1548 : vector<2x62xi1>
    %1550 = arith.extui %1549 : vector<2x62xi1> to vector<2x62xi32>
    %1551 = arith.sitofp %1550 : vector<2x62xi32> to vector<2x62xf32>
    %cst_396 = arith.constant dense<0.000000e+00> : vector<2xf32>
    %1552 = vector.multi_reduction <add>, %1551, %cst_396 [1] : vector<2x62xf32> to vector<2xf32>
    %1553 = vector.shape_cast %1552 : vector<2xf32> to vector<2x1xf32>
    %1554 = arith.cmpf oge, %1536, %1553 : vector<2x1xf32>
    %c8_i32_397 = arith.constant 8 : i32
    %1555 = vector.broadcast %c8_i32_397 : i32 to vector<2x1xi32>
    %1556 = arith.ori %1534, %1555 : vector<2x1xi32>
    %1557 = arith.select %1554, %1556, %1534 : vector<2x1xi1>, vector<2x1xi32>
    %1558 = arith.subf %1536, %1553 : vector<2x1xf32>
    %1559 = arith.select %1554, %1558, %1536 : vector<2x1xi1>, vector<2x1xf32>
    %c3_i32_398 = arith.constant 3 : i32
    %1560 = vector.broadcast %c3_i32_398 : i32 to vector<2x62xi32>
    %1561 = arith.shrsi %913, %1560 : vector<2x62xi32>
    %c3_i32_399 = arith.constant 3 : i32
    %1562 = vector.broadcast %c3_i32_399 : i32 to vector<2x1xi32>
    %1563 = arith.shrsi %1557, %1562 : vector<2x1xi32>
    %1564 = vector.broadcast %1563 : vector<2x1xi32> to vector<2x62xi32>
    %1565 = arith.cmpi eq, %1561, %1564 : vector<2x62xi32>
    %c2_i32_400 = arith.constant 2 : i32
    %1566 = vector.broadcast %c2_i32_400 : i32 to vector<2x62xi32>
    %1567 = arith.shrsi %913, %1566 : vector<2x62xi32>
    %c1_i32_401 = arith.constant 1 : i32
    %1568 = vector.broadcast %c1_i32_401 : i32 to vector<2x62xi32>
    %1569 = arith.andi %1567, %1568 : vector<2x62xi32>
    %c0_i32_402 = arith.constant 0 : i32
    %1570 = vector.broadcast %c0_i32_402 : i32 to vector<2x62xi32>
    %1571 = arith.cmpi eq, %1569, %1570 : vector<2x62xi32>
    %1572 = arith.andi %1565, %1571 : vector<2x62xi1>
    %1573 = arith.extui %1572 : vector<2x62xi1> to vector<2x62xi32>
    %1574 = arith.sitofp %1573 : vector<2x62xi32> to vector<2x62xf32>
    %cst_403 = arith.constant dense<0.000000e+00> : vector<2xf32>
    %1575 = vector.multi_reduction <add>, %1574, %cst_403 [1] : vector<2x62xf32> to vector<2xf32>
    %1576 = vector.shape_cast %1575 : vector<2xf32> to vector<2x1xf32>
    %1577 = arith.cmpf oge, %1559, %1576 : vector<2x1xf32>
    %c4_i32_404 = arith.constant 4 : i32
    %1578 = vector.broadcast %c4_i32_404 : i32 to vector<2x1xi32>
    %1579 = arith.ori %1557, %1578 : vector<2x1xi32>
    %1580 = arith.select %1577, %1579, %1557 : vector<2x1xi1>, vector<2x1xi32>
    %1581 = arith.subf %1559, %1576 : vector<2x1xf32>
    %1582 = arith.select %1577, %1581, %1559 : vector<2x1xi1>, vector<2x1xf32>
    %c2_i32_405 = arith.constant 2 : i32
    %1583 = vector.broadcast %c2_i32_405 : i32 to vector<2x62xi32>
    %1584 = arith.shrsi %913, %1583 : vector<2x62xi32>
    %c2_i32_406 = arith.constant 2 : i32
    %1585 = vector.broadcast %c2_i32_406 : i32 to vector<2x1xi32>
    %1586 = arith.shrsi %1580, %1585 : vector<2x1xi32>
    %1587 = vector.broadcast %1586 : vector<2x1xi32> to vector<2x62xi32>
    %1588 = arith.cmpi eq, %1584, %1587 : vector<2x62xi32>
    %c1_i32_407 = arith.constant 1 : i32
    %1589 = vector.broadcast %c1_i32_407 : i32 to vector<2x62xi32>
    %1590 = arith.shrsi %913, %1589 : vector<2x62xi32>
    %c1_i32_408 = arith.constant 1 : i32
    %1591 = vector.broadcast %c1_i32_408 : i32 to vector<2x62xi32>
    %1592 = arith.andi %1590, %1591 : vector<2x62xi32>
    %c0_i32_409 = arith.constant 0 : i32
    %1593 = vector.broadcast %c0_i32_409 : i32 to vector<2x62xi32>
    %1594 = arith.cmpi eq, %1592, %1593 : vector<2x62xi32>
    %1595 = arith.andi %1588, %1594 : vector<2x62xi1>
    %1596 = arith.extui %1595 : vector<2x62xi1> to vector<2x62xi32>
    %1597 = arith.sitofp %1596 : vector<2x62xi32> to vector<2x62xf32>
    %cst_410 = arith.constant dense<0.000000e+00> : vector<2xf32>
    %1598 = vector.multi_reduction <add>, %1597, %cst_410 [1] : vector<2x62xf32> to vector<2xf32>
    %1599 = vector.shape_cast %1598 : vector<2xf32> to vector<2x1xf32>
    %1600 = arith.cmpf oge, %1582, %1599 : vector<2x1xf32>
    %c2_i32_411 = arith.constant 2 : i32
    %1601 = vector.broadcast %c2_i32_411 : i32 to vector<2x1xi32>
    %1602 = arith.ori %1580, %1601 : vector<2x1xi32>
    %1603 = arith.select %1600, %1602, %1580 : vector<2x1xi1>, vector<2x1xi32>
    %1604 = arith.subf %1582, %1599 : vector<2x1xf32>
    %1605 = arith.select %1600, %1604, %1582 : vector<2x1xi1>, vector<2x1xf32>
    %c1_i32_412 = arith.constant 1 : i32
    %1606 = vector.broadcast %c1_i32_412 : i32 to vector<2x62xi32>
    %1607 = arith.shrsi %913, %1606 : vector<2x62xi32>
    %c1_i32_413 = arith.constant 1 : i32
    %1608 = vector.broadcast %c1_i32_413 : i32 to vector<2x1xi32>
    %1609 = arith.shrsi %1603, %1608 : vector<2x1xi32>
    %1610 = vector.broadcast %1609 : vector<2x1xi32> to vector<2x62xi32>
    %1611 = arith.cmpi eq, %1607, %1610 : vector<2x62xi32>
    %c0_i32_414 = arith.constant 0 : i32
    %1612 = vector.broadcast %c0_i32_414 : i32 to vector<2x62xi32>
    %1613 = arith.shrsi %913, %1612 : vector<2x62xi32>
    %c1_i32_415 = arith.constant 1 : i32
    %1614 = vector.broadcast %c1_i32_415 : i32 to vector<2x62xi32>
    %1615 = arith.andi %1613, %1614 : vector<2x62xi32>
    %c0_i32_416 = arith.constant 0 : i32
    %1616 = vector.broadcast %c0_i32_416 : i32 to vector<2x62xi32>
    %1617 = arith.cmpi eq, %1615, %1616 : vector<2x62xi32>
    %1618 = arith.andi %1611, %1617 : vector<2x62xi1>
    %1619 = arith.extui %1618 : vector<2x62xi1> to vector<2x62xi32>
    %1620 = arith.sitofp %1619 : vector<2x62xi32> to vector<2x62xf32>
    %cst_417 = arith.constant dense<0.000000e+00> : vector<2xf32>
    %1621 = vector.multi_reduction <add>, %1620, %cst_417 [1] : vector<2x62xf32> to vector<2xf32>
    %1622 = vector.shape_cast %1621 : vector<2xf32> to vector<2x1xf32>
    %1623 = arith.cmpf oge, %1605, %1622 : vector<2x1xf32>
    %c1_i32_418 = arith.constant 1 : i32
    %1624 = vector.broadcast %c1_i32_418 : i32 to vector<2x1xi32>
    %1625 = arith.ori %1603, %1624 : vector<2x1xi32>
    %1626 = arith.select %1623, %1625, %1603 : vector<2x1xi1>, vector<2x1xi32>
    %1627 = tpu.bitcast %1626 : vector<2x1xi32> -> vector<2x1xf32>
    %cst_419 = arith.constant 2.500000e+00 : f32
    %1628 = vector.broadcast %cst_419 : f32 to vector<2x1xf32>
    %1629 = arith.mulf %1628, %1627 : vector<2x1xf32>
    %1630 = arith.addf %909, %1629 : vector<2x1xf32>
    %1631 = vector.broadcast %1630 : vector<2x1xf32> to vector<2x62xf32>
    %1632 = arith.cmpf ogt, %194, %1631 : vector<2x62xf32>
    %1633 = arith.extui %1632 : vector<2x62xi1> to vector<2x62xi32>
    %1634 = arith.sitofp %1633 : vector<2x62xi32> to vector<2x62xf32>
    %cst_420 = arith.constant 0.000000e+00 : f32
    %1635 = vector.broadcast %cst_420 : f32 to vector<2x1xf32>
    %1636 = vector.extract_strided_slice %1634 {offsets = [0, 1], sizes = [2, 61], strides = [1, 1]} : vector<2x62xf32> to vector<2x61xf32>
    %1637 = tpu.concatenate %1636, %1635 in 1 : vector<2x61xf32>, vector<2x1xf32> -> vector<2x62xf32>
    %1638 = vector.extract_strided_slice %1634 {offsets = [0, 0], sizes = [2, 61], strides = [1, 1]} : vector<2x62xf32> to vector<2x61xf32>
    %1639 = tpu.concatenate %1635, %1638 in 1 : vector<2x1xf32>, vector<2x61xf32> -> vector<2x62xf32>
    %1640 = arith.maximumf %1637, %1639 : vector<2x62xf32>
    %1641 = arith.maximumf %1634, %1640 : vector<2x62xf32>
    %1642 = vector.extract_strided_slice %62 {offsets = [0, 0], sizes = [2, 62], strides = [1, 1]} : vector<2x63xf32> to vector<2x62xf32>
    %1643 = vector.shape_cast %1641 : vector<2x62xf32> to vector<1x2x62xf32>
    %cst_421 = arith.constant dense<0.000000e+00> : vector<1xf32>
    %1644 = vector.multi_reduction <add>, %1643, %cst_421 [1, 2] : vector<1x2x62xf32> to vector<1xf32>
    %1645 = vector.shape_cast %1644 : vector<1xf32> to vector<1x1x1xf32>
    %1646 = vector.extract %1645[0, 0, 0] : f32 from vector<1x1x1xf32>
    %1647 = arith.mulf %1641, %1642 : vector<2x62xf32>
    %1648 = vector.shape_cast %1647 : vector<2x62xf32> to vector<1x2x62xf32>
    %cst_422 = arith.constant dense<0.000000e+00> : vector<1xf32>
    %1649 = vector.multi_reduction <add>, %1648, %cst_422 [1, 2] : vector<1x2x62xf32> to vector<1xf32>
    %1650 = vector.shape_cast %1649 : vector<1xf32> to vector<1x1x1xf32>
    %1651 = vector.extract %1650[0, 0, 0] : f32 from vector<1x1x1xf32>
    %cst_423 = arith.constant 0.000000e+00 : f32
    %1652 = arith.cmpf ogt, %1646, %cst_423 : f32
    %cst_424 = arith.constant 1.000000e+00 : f32
    %1653 = arith.maximumf %1646, %cst_424 : f32
    %1654 = arith.divf %1651, %1653 : f32
    %cst_425 = arith.constant 5.000000e+00 : f32
    %1655 = arith.mulf %1654, %cst_425 : f32
    %cst_426 = arith.constant 0.000000e+00 : f32
    %1656 = arith.select %1652, %1655, %cst_426 : f32
    %1657 = arith.mulf %193, %193 : vector<2x62xf32>
    %1658 = vector.shape_cast %1657 : vector<2x62xf32> to vector<1x2x62xf32>
    %cst_427 = arith.constant dense<0.000000e+00> : vector<1xf32>
    %1659 = vector.multi_reduction <add>, %1658, %cst_427 [1, 2] : vector<1x2x62xf32> to vector<1xf32>
    %1660 = vector.shape_cast %1659 : vector<1xf32> to vector<1x1x1xf32>
    %1661 = vector.extract %1660[0, 0, 0] : f32 from vector<1x1x1xf32>
    %cst_428 = arith.constant 1.240000e+02 : f32
    %1662 = arith.divf %1661, %cst_428 : f32
    %cst_429 = arith.constant 8.000000e-02 : f32
    %1663 = arith.mulf %1662, %cst_429 : f32
    %cst_430 = arith.constant 3.000000e-01 : f32
    %1664 = arith.mulf %49, %cst_430 : f32
    %1665 = arith.addf %34, %1664 : f32
    %cst_431 = arith.constant 2.500000e-01 : f32
    %1666 = arith.mulf %176, %cst_431 : f32
    %1667 = arith.addf %1665, %1666 : f32
    %cst_432 = arith.constant 8.000000e-01 : f32
    %1668 = arith.mulf %1656, %cst_432 : f32
    %1669 = arith.addf %1667, %1668 : f32
    %1670 = arith.addf %1669, %1663 : f32
    %1671 = arith.addf %1670, %190 : f32
    %c0_433 = arith.constant 0 : index
    %c0_434 = arith.constant 0 : index
    %1672 = memref.load %arg2[%c0_433, %c0_434] : memref<1x1xf32, #tpu.memory_space<smem>>
    memref.store %1671, %arg2[%c0_433, %c0_434] : memref<1x1xf32, #tpu.memory_space<smem>>
    return
  }
}

</mosaic_0001>

<llo_original>
// kernel: enhanced_spike_control_loss.1
$region0: #{enhanced_spike_control_loss.1}
  #allocation0 [shape = 'u32[]', space=smem, size = 0x4, offset = 0x4, fixed_abs, tag = 'smem constant byte address 0x4 - core index']
  #allocation1 [shape = 'u32[144,128]{1,0:T(1,128)}', space=vmem, size = 0x12000, scoped, tag = 'internal scratch']
  %s0 = inlined_call_operand.hbm [shape: f32[2,64], index: 0, kind: input, shape index: {}]
  %s1 = inlined_call_operand.vmem [shape: f32[2,64], index: 1, kind: input, shape index: {}]
  %s2 = inlined_call_operand.hbm [shape: f32[1,1], index: 2, kind: output, shape index: {}]
  %s3 = sld [smem:[#allocation0]]
  $region22: #{enhanced_spike_control_loss.1} parent=0
    _
  %s5 = ssub.s32 1, %s3
  %s6 = scalar_select 0, %s5, %s3
  $region1: #{enhanced_spike_control_loss.1} parent=0
    #allocation2 [shape = 'u8[1024]{0}', space=vmem, size = 0x400, scoped, tag = 'input window, operand 0, single buffered']
    #allocation3 [shape = 's32[1]{0}', space=sflag, size = 0x4, scoped, tag = 'scoped memory for enhanced_spike_control_loss.1']
    #allocation4 [shape = 's32[1]{0}', space=sflag, size = 0x4, scoped, tag = 'scoped memory for enhanced_spike_control_loss.1']
    #allocation5 [shape = 'u8[512]{0}', space=smem, size = 0x200, scoped, tag = 'output window, operand 0, single buffered']
    %7 = vsyncpa [#allocation3], 0
    %8 = vsyncpa [#allocation4], 0
    // Predicated region
    $region2: #{enhanced_spike_control_loss.1} parent=1 // pred_check
      _
    $region3: #{enhanced_spike_control_loss.1} parent=1 // pred_check_branch
      %10 = sbr.rel (0) target = $region5
    $region4: #{enhanced_spike_control_loss.1} parent=1 // pred_region
      %s12 = ssub.s32 32, 32
      %13 = vsyncadd [#allocation3], %s12
      %s15 = sshll.u32 [#allocation2], 4
      %s16 = int_to_ptr.vmem [resolvable:$true] %s15
      %18 = dma.hbm_to_vmem [thread:$0]  %s0, 32, %s16, [#allocation3]
    $region5: #{enhanced_spike_control_loss.1} parent=1 // pred_fallthru
      _
    // Predicated region
    $region6: #{enhanced_spike_control_loss.1} parent=1 // pred_check
      _
    $region7: #{enhanced_spike_control_loss.1} parent=1 // pred_check_branch
      %20 = sbr.rel (0) target = $region9
    $region8: #{enhanced_spike_control_loss.1} parent=1 // pred_region
      _
    $region9: #{enhanced_spike_control_loss.1} parent=1 // pred_fallthru
      _
    // Predicated region
    $region10: #{enhanced_spike_control_loss.1} parent=1 // pred_check
      _
    $region11: #{enhanced_spike_control_loss.1} parent=1 // pred_check_branch
      %22 = sbr.rel (0) target = $region13
    $region12: #{enhanced_spike_control_loss.1} parent=1 // pred_region
      %23 = dma.done [#allocation3], 32
    $region13: #{enhanced_spike_control_loss.1} parent=1 // pred_fallthru
      _
    %v24 = vld [vmem:[#allocation2] sm:$0x3]
    %v25 = vld [vmem:[%s1] sm:$0x3]
    %vm26 = vcmask 517120
    %v27 = vsel %vm26, %v25, -inf
    %28 = vmax.xlane.f32.xlu0 %v27
    %v29 = vpop.xlane.xlu0 %28
    %v30 = vrot.slane %v29, 4
    %v31 = vmax.f32 %v29, %v30
    %v32 = vrot.slane %v31, 2
    %v33 = vmax.f32 %v31, %v32
    %v34 = vrot.slane %v33, 1
    %v35 = vmax.f32 %v33, %v34
    %s36 = vtos %v35
    %p37 = scmp.gt.f32.partialorder %s36, 50000.0
    %vm38 = vcmp.gt.f32.partialorder %v25, 50000.0
    %vm39 = vcmp.gt.f32.partialorder %v25, 40000.0
    %vm40 = vcmp.le.f32.partialorder %v25, 50000.0
    %vm41 = vmand %vm39, %vm40
    %v42 = vsub.f32 %v25, 40000.0
    %v43 = vrcp.pop 10000.0
    %v44 = vmul.f32 %v42, %v43
    %v45 = vmul.f32 %v44, 0.2
    %v46 = vadd.f32 %v45, 1.0
    %v47 = vsel %vm41, %v46, 1.0
    %v48 = vsel %vm38, 1.2, %v47
    %v49 = vmul.f32 %v24, %v48
    %s50 = scalar_select %p37, 1, 0
    %v51 = vstv %s50
    %vm52 = vcmp.eq.s32.totalorder %v51, 1
    %v53 = vsel %vm52, %v49, %v24
    %v54 = vsub.f32 %v53, %v25
    %v55 = vmul.f32 %v54, %v54
    %v56 = vsel %vm26, %v55, 0.0
    %57 = vadd.xlane.f32.xlu0 %v56
    %v58 = vpop.xlane.xlu0 %57
    %v59 = vrot.slane %v58, 4
    %v60 = vadd.f32 %v58, %v59
    %v61 = vrot.slane %v60, 2
    %v62 = vadd.f32 %v60, %v61
    %v63 = vrot.slane %v62, 1
    %v64 = vadd.f32 %v62, %v63
    %s65 = vtos %v64
    %v66 = vrcp.pop 128.0
    %s67 = vtos %v66
    %s68 = smul.f32 %s65, %s67
    %70 = vrot.lane.b32.xlu0 %v53, 1
    %v71 = vpop.permute.xlu0 %70
    %v73 = vsub.f32 %v53, %v71
    %v74 = vand.u32 2147483647, %v73
    %76 = vrot.lane.b32.xlu0 %v25, 1
    %v77 = vpop.permute.xlu0 %76
    %v79 = vsub.f32 %v25, %v77
    %v80 = vand.u32 2147483647, %v79
    %v81 = vsub.f32 %v74, %v80
    %v82 = vmul.f32 %v81, %v81
    %84 = vrot.lane.b32.xlu0 %v82, 127
    %v85 = vpop.permute.xlu0 %84
    %vm87 = vcmask 508928
    %v88 = vsel %vm87, %v85, 0.0
    %89 = vadd.xlane.f32.xlu0 %v88
    %v90 = vpop.xlane.xlu0 %89
    %v91 = vrot.slane %v90, 4
    %v92 = vadd.f32 %v90, %v91
    %v93 = vrot.slane %v92, 2
    %v94 = vadd.f32 %v92, %v93
    %v95 = vrot.slane %v94, 1
    %v96 = vadd.f32 %v94, %v95
    %s97 = vtos %v96
    %v98 = vrcp.pop 126.0
    %s99 = vtos %v98
    %s100 = smul.f32 %s97, %s99
    %v101 = vmax.f32 %v80, 0.12
    %v102 = vmul.f32 %v101, 1.5
    %v103 = vsub.f32 %v74, %v102
    %v104 = vmax.f32 %v103, 0.0
    %v105 = vmul.f32 %v104, %v104
    %v106 = vmul.f32 %v74, %v74
    %107 = vrot.lane.b32.xlu0 %v25, 127
    %v108 = vpop.permute.xlu0 %107
    %v110 = vadd.f32 %v25, %v108
    %111 = vrot.lane.b32.xlu0 %v25, 126
    %v112 = vpop.permute.xlu0 %111
    %v114 = vadd.f32 %v110, %v112
    %115 = vrot.lane.b32.xlu0 %v25, 125
    %v116 = vpop.permute.xlu0 %115
    %v118 = vadd.f32 %v114, %v116
    %119 = vrot.lane.b32.xlu0 %v25, 124
    %v120 = vpop.permute.xlu0 %119
    %v122 = vadd.f32 %v118, %v120
    %123 = vrot.lane.b32.xlu0 %v25, 123
    %v124 = vpop.permute.xlu0 %123
    %v126 = vadd.f32 %v122, %v124
    %127 = vrot.lane.b32.xlu0 %v25, 122
    %v128 = vpop.permute.xlu0 %127
    %v130 = vadd.f32 %v126, %v128
    %131 = vrot.lane.b32.xlu0 %v25, 121
    %v132 = vpop.permute.xlu0 %131
    %v134 = vadd.f32 %v130, %v132
    %135 = vrot.lane.b32.xlu0 %v25, 120
    %v136 = vpop.permute.xlu0 %135
    %v138 = vadd.f32 %v134, %v136
    %139 = vrot.lane.b32.xlu0 %v25, 119
    %v140 = vpop.permute.xlu0 %139
    %v142 = vadd.f32 %v138, %v140
    %143 = vrot.lane.b32.xlu0 %v25, 118
    %v144 = vpop.permute.xlu0 %143
    %v146 = vadd.f32 %v142, %v144
    %147 = vrot.lane.b32.xlu0 %v25, 117
    %v148 = vpop.permute.xlu0 %147
    %v150 = vadd.f32 %v146, %v148
    %151 = vrot.lane.b32.xlu0 %v25, 116
    %v152 = vpop.permute.xlu0 %151
    %v154 = vadd.f32 %v150, %v152
    %155 = vrot.lane.b32.xlu0 %v25, 115
    %v156 = vpop.permute.xlu0 %155
    %v158 = vadd.f32 %v154, %v156
    %159 = vrot.lane.b32.xlu0 %v25, 114
    %v160 = vpop.permute.xlu0 %159
    %v162 = vadd.f32 %v158, %v160
    %v163 = vrcp.pop 15.0
    %v164 = vmul.f32 %v162, %v163
    %v165 = vsub.f32 %v25, %v164
    %v166 = vmul.f32 %v165, %v165
    %v167 = vadd.f32 %v166, 0.0
    %169 = vrot.lane.b32.xlu0 %v164, 1
    %v170 = vpop.permute.xlu0 %169
    %v172 = vsub.f32 %v25, %v170
    %v173 = vmul.f32 %v172, %v172
    %175 = vrot.lane.b32.xlu0 %v173, 127
    %v176 = vpop.permute.xlu0 %175
    %v178 = vadd.f32 %v167, %v176
    %179 = vrot.lane.b32.xlu0 %v164, 2
    %v180 = vpop.permute.xlu0 %179
    %v182 = vsub.f32 %v25, %v180
    %v183 = vmul.f32 %v182, %v182
    %185 = vrot.lane.b32.xlu0 %v183, 126
    %v186 = vpop.permute.xlu0 %185
    %v188 = vadd.f32 %v178, %v186
    %189 = vrot.lane.b32.xlu0 %v164, 3
    %v190 = vpop.permute.xlu0 %189
    %v192 = vsub.f32 %v25, %v190
    %v193 = vmul.f32 %v192, %v192
    %195 = vrot.lane.b32.xlu0 %v193, 125
    %v196 = vpop.permute.xlu0 %195
    %v198 = vadd.f32 %v188, %v196
    %199 = vrot.lane.b32.xlu0 %v164, 4
    %v200 = vpop.permute.xlu0 %199
    %v202 = vsub.f32 %v25, %v200
    %v203 = vmul.f32 %v202, %v202
    %205 = vrot.lane.b32.xlu0 %v203, 124
    %v206 = vpop.permute.xlu0 %205
    %v208 = vadd.f32 %v198, %v206
    %209 = vrot.lane.b32.xlu0 %v164, 5
    %v210 = vpop.permute.xlu0 %209
    %v212 = vsub.f32 %v25, %v210
    %v213 = vmul.f32 %v212, %v212
    %215 = vrot.lane.b32.xlu0 %v213, 123
    %v216 = vpop.permute.xlu0 %215
    %v218 = vadd.f32 %v208, %v216
    %219 = vrot.lane.b32.xlu0 %v164, 6
    %v220 = vpop.permute.xlu0 %219
    %v222 = vsub.f32 %v25, %v220
    %v223 = vmul.f32 %v222, %v222
    %225 = vrot.lane.b32.xlu0 %v223, 122
    %v226 = vpop.permute.xlu0 %225
    %v228 = vadd.f32 %v218, %v226
    %229 = vrot.lane.b32.xlu0 %v164, 7
    %v230 = vpop.permute.xlu0 %229
    %v232 = vsub.f32 %v25, %v230
    %v233 = vmul.f32 %v232, %v232
    %235 = vrot.lane.b32.xlu0 %v233, 121
    %v236 = vpop.permute.xlu0 %235
    %v238 = vadd.f32 %v228, %v236
    %239 = vrot.lane.b32.xlu0 %v164, 8
    %v240 = vpop.permute.xlu0 %239
    %v242 = vsub.f32 %v25, %v240
    %v243 = vmul.f32 %v242, %v242
    %245 = vrot.lane.b32.xlu0 %v243, 120
    %v246 = vpop.permute.xlu0 %245
    %v248 = vadd.f32 %v238, %v246
    %249 = vrot.lane.b32.xlu0 %v164, 9
    %v250 = vpop.permute.xlu0 %249
    %v252 = vsub.f32 %v25, %v250
    %v253 = vmul.f32 %v252, %v252
    %255 = vrot.lane.b32.xlu0 %v253, 119
    %v256 = vpop.permute.xlu0 %255
    %v258 = vadd.f32 %v248, %v256
    %259 = vrot.lane.b32.xlu0 %v164, 10
    %v260 = vpop.permute.xlu0 %259
    %v262 = vsub.f32 %v25, %v260
    %v263 = vmul.f32 %v262, %v262
    %265 = vrot.lane.b32.xlu0 %v263, 118
    %v266 = vpop.permute.xlu0 %265
    %v268 = vadd.f32 %v258, %v266
    %269 = vrot.lane.b32.xlu0 %v164, 11
    %v270 = vpop.permute.xlu0 %269
    %v272 = vsub.f32 %v25, %v270
    %v273 = vmul.f32 %v272, %v272
    %275 = vrot.lane.b32.xlu0 %v273, 117
    %v276 = vpop.permute.xlu0 %275
    %v278 = vadd.f32 %v268, %v276
    %279 = vrot.lane.b32.xlu0 %v164, 12
    %v280 = vpop.permute.xlu0 %279
    %v282 = vsub.f32 %v25, %v280
    %v283 = vmul.f32 %v282, %v282
    %285 = vrot.lane.b32.xlu0 %v283, 116
    %v286 = vpop.permute.xlu0 %285
    %v288 = vadd.f32 %v278, %v286
    %289 = vrot.lane.b32.xlu0 %v164, 13
    %v290 = vpop.permute.xlu0 %289
    %v292 = vsub.f32 %v25, %v290
    %v293 = vmul.f32 %v292, %v292
    %295 = vrot.lane.b32.xlu0 %v293, 115
    %v296 = vpop.permute.xlu0 %295
    %v298 = vadd.f32 %v288, %v296
    %299 = vrot.lane.b32.xlu0 %v164, 14
    %v300 = vpop.permute.xlu0 %299
    %v302 = vsub.f32 %v25, %v300
    %v303 = vmul.f32 %v302, %v302
    %305 = vrot.lane.b32.xlu0 %v303, 114
    %v306 = vpop.permute.xlu0 %305
    %v308 = vadd.f32 %v298, %v306
    %v309 = vrcp.pop 14.0
    %v310 = vmul.f32 %v308, %v309
    %vm311 = vcmask 402432
    %v312 = vsel %vm311, %v310, -inf
    %313 = vmax.xlane.f32.xlu0 %v312
    %v314 = vpop.xlane.xlu0 %313
    %v315 = vadd.f32 %v314, 1e-08
    %v316 = vrcp.pop %v315
    %v317 = vmul.f32 %v310, %v316
    %vm318 = vcmp.lt.f32.partialorder %v317, 0.05
    %v319 = vsel %vm318, 1, 0
    %v320 = vcvt.s32.f32 %v319
    %322 = vset.pattern.permute.xlu0 0
    %323 = vperm.xlu0 %322, %v320
    %v324 = vpop.permute.xlu0 %323
    %326 = vset.pattern.permute.xlu0 49
    %327 = vperm.xlu0 %326, %v320
    %v328 = vpop.permute.xlu0 %327
    %330 = vrot.lane.b32.xlu0 %v320, 7
    %v331 = vpop.permute.xlu0 %330
    %vm333 = vcmask 56320
    %v334 = vsel %vm333, %v324, %v331
    %vm335 = vcmask 465920
    %v336 = vsel %vm335, %v334, %v328
    %v337 = vsub.f32 1.0, %v336
    %v338 = vmul.f32 %v336, %v106
    %340 = vrot.lane.b32.xlu0 %v338, 127
    %v341 = vpop.permute.xlu0 %340
    %v343 = vsel %vm87, %v341, 0.0
    %344 = vadd.xlane.f32.xlu0 %v343
    %v345 = vpop.xlane.xlu0 %344
    %v346 = vrot.slane %v345, 4
    %v347 = vadd.f32 %v345, %v346
    %v348 = vrot.slane %v347, 2
    %v349 = vadd.f32 %v347, %v348
    %v350 = vrot.slane %v349, 1
    %v351 = vadd.f32 %v349, %v350
    %s352 = vtos %v351
    %v353 = vrcp.pop 126.0
    %s354 = vtos %v353
    %s355 = smul.f32 %s352, %s354
    %s356 = smul.f32 %s355, 3.0
    %v357 = vmul.f32 %v337, %v105
    %359 = vrot.lane.b32.xlu0 %v357, 127
    %v360 = vpop.permute.xlu0 %359
    %v362 = vsel %vm87, %v360, 0.0
    %363 = vadd.xlane.f32.xlu0 %v362
    %v364 = vpop.xlane.xlu0 %363
    %v365 = vrot.slane %v364, 4
    %v366 = vadd.f32 %v364, %v365
    %v367 = vrot.slane %v366, 2
    %v368 = vadd.f32 %v366, %v367
    %v369 = vrot.slane %v368, 1
    %v370 = vadd.f32 %v368, %v369
    %s371 = vtos %v370
    %v372 = vrcp.pop 126.0
    %s373 = vtos %v372
    %s374 = smul.f32 %s371, %s373
    %s375 = smul.f32 %s374, 0.4
    %s376 = sadd.f32 %s356, %s375
    %378 = vrot.lane.b32.xlu0 %v337, 127
    %v379 = vpop.permute.xlu0 %378
    %v381 = vsel %vm87, %v379, 0.0
    %382 = vadd.xlane.f32.xlu0 %v381
    %v383 = vpop.xlane.xlu0 %382
    %v384 = vrot.slane %v383, 4
    %v385 = vadd.f32 %v383, %v384
    %v386 = vrot.slane %v385, 2
    %v387 = vadd.f32 %v385, %v386
    %v388 = vrot.slane %v387, 1
    %v389 = vadd.f32 %v387, %v388
    %s390 = vtos %v389
    %v391 = vmul.f32 %v337, %v55
    %393 = vrot.lane.b32.xlu0 %v391, 127
    %v394 = vpop.permute.xlu0 %393
    %v396 = vsel %vm87, %v394, 0.0
    %397 = vadd.xlane.f32.xlu0 %v396
    %v398 = vpop.xlane.xlu0 %397
    %v399 = vrot.slane %v398, 4
    %v400 = vadd.f32 %v398, %v399
    %v401 = vrot.slane %v400, 2
    %v402 = vadd.f32 %v400, %v401
    %v403 = vrot.slane %v402, 1
    %v404 = vadd.f32 %v402, %v403
    %s405 = vtos %v404
    %p406 = scmp.gt.f32.partialorder %s390, 0.0
    %s407 = smax.f32 %s390, 1.0
    %v408 = vstv %s407
    %v409 = vrcp.pop %v408
    %s410 = vtos %v409
    %s411 = smul.f32 %s405, %s410
    %s412 = smul.f32 %s411, 0.5
    %s413 = scalar_select %p406, %s412, 0.0
    %415 = vrot.lane.b32.xlu0 %v73, 1
    %v416 = vpop.permute.xlu0 %415
    %v418 = vsub.f32 %v73, %v416
    %v419 = vand.u32 2147483647, %v418
    %v421 = vshra.s32 %v419, 31
    %vm422 = vcmp.eq.s32.totalorder %v421, 0
    %v423 = vshra.s32 %v419, 30
    %v424 = vand.u32 %v423, 1
    %vm425 = vcmp.eq.s32.totalorder %v424, 0
    %vm426 = vmand %vm422, %vm425
    %v427 = vsel %vm426, 1, 0
    %v428 = vcvt.s32.f32 %v427
    %430 = vrot.lane.b32.xlu0 %v428, 126
    %v431 = vpop.permute.xlu0 %430
    %vm433 = vcmask 500736
    %v434 = vsel %vm433, %v431, 0.0
    %435 = vadd.xlane.f32.xlu0 %v434
    %v436 = vpop.xlane.xlu0 %435
    %vm437 = vcmp.ge.f32.partialorder 30.0, %v436
    %v438 = vsel %vm437, 1073741824, 0
    %v439 = vsub.f32 30.0, %v436
    %v440 = vsel %vm437, %v439, 30.0
    %v441 = vshra.s32 %v438, 30
    %vm442 = vcmp.eq.s32.totalorder %v423, %v441
    %v443 = vshra.s32 %v419, 29
    %v444 = vand.u32 %v443, 1
    %vm445 = vcmp.eq.s32.totalorder %v444, 0
    %vm446 = vmand %vm442, %vm445
    %v447 = vsel %vm446, 1, 0
    %v448 = vcvt.s32.f32 %v447
    %450 = vrot.lane.b32.xlu0 %v448, 126
    %v451 = vpop.permute.xlu0 %450
    %v453 = vsel %vm433, %v451, 0.0
    %454 = vadd.xlane.f32.xlu0 %v453
    %v455 = vpop.xlane.xlu0 %454
    %vm456 = vcmp.ge.f32.partialorder %v440, %v455
    %v457 = vor.u32 %v438, 536870912
    %v458 = vsel %vm456, %v457, %v438
    %v459 = vsub.f32 %v440, %v455
    %v460 = vsel %vm456, %v459, %v440
    %v461 = vshra.s32 %v458, 29
    %vm462 = vcmp.eq.s32.totalorder %v443, %v461
    %v463 = vshra.s32 %v419, 28
    %v464 = vand.u32 %v463, 1
    %vm465 = vcmp.eq.s32.totalorder %v464, 0
    %vm466 = vmand %vm462, %vm465
    %v467 = vsel %vm466, 1, 0
    %v468 = vcvt.s32.f32 %v467
    %470 = vrot.lane.b32.xlu0 %v468, 126
    %v471 = vpop.permute.xlu0 %470
    %v473 = vsel %vm433, %v471, 0.0
    %474 = vadd.xlane.f32.xlu0 %v473
    %v475 = vpop.xlane.xlu0 %474
    %vm476 = vcmp.ge.f32.partialorder %v460, %v475
    %v477 = vor.u32 %v458, 268435456
    %v478 = vsel %vm476, %v477, %v458
    %v479 = vsub.f32 %v460, %v475
    %v480 = vsel %vm476, %v479, %v460
    %v481 = vshra.s32 %v478, 28
    %vm482 = vcmp.eq.s32.totalorder %v463, %v481
    %v483 = vshra.s32 %v419, 27
    %v484 = vand.u32 %v483, 1
    %vm485 = vcmp.eq.s32.totalorder %v484, 0
    %vm486 = vmand %vm482, %vm485
    %v487 = vsel %vm486, 1, 0
    %v488 = vcvt.s32.f32 %v487
    %490 = vrot.lane.b32.xlu0 %v488, 126
    %v491 = vpop.permute.xlu0 %490
    %v493 = vsel %vm433, %v491, 0.0
    %494 = vadd.xlane.f32.xlu0 %v493
    %v495 = vpop.xlane.xlu0 %494
    %vm496 = vcmp.ge.f32.partialorder %v480, %v495
    %v497 = vor.u32 %v478, 134217728
    %v498 = vsel %vm496, %v497, %v478
    %v499 = vsub.f32 %v480, %v495
    %v500 = vsel %vm496, %v499, %v480
    %v501 = vshra.s32 %v498, 27
    %vm502 = vcmp.eq.s32.totalorder %v483, %v501
    %v503 = vshra.s32 %v419, 26
    %v504 = vand.u32 %v503, 1
    %vm505 = vcmp.eq.s32.totalorder %v504, 0
    %vm506 = vmand %vm502, %vm505
    %v507 = vsel %vm506, 1, 0
    %v508 = vcvt.s32.f32 %v507
    %510 = vrot.lane.b32.xlu0 %v508, 126
    %v511 = vpop.permute.xlu0 %510
    %v513 = vsel %vm433, %v511, 0.0
    %514 = vadd.xlane.f32.xlu0 %v513
    %v515 = vpop.xlane.xlu0 %514
    %vm516 = vcmp.ge.f32.partialorder %v500, %v515
    %v517 = vor.u32 %v498, 67108864
    %v518 = vsel %vm516, %v517, %v498
    %v519 = vsub.f32 %v500, %v515
    %v520 = vsel %vm516, %v519, %v500
    %v521 = vshra.s32 %v518, 26
    %vm522 = vcmp.eq.s32.totalorder %v503, %v521
    %v523 = vshra.s32 %v419, 25
    %v524 = vand.u32 %v523, 1
    %vm525 = vcmp.eq.s32.totalorder %v524, 0
    %vm526 = vmand %vm522, %vm525
    %v527 = vsel %vm526, 1, 0
    %v528 = vcvt.s32.f32 %v527
    %530 = vrot.lane.b32.xlu0 %v528, 126
    %v531 = vpop.permute.xlu0 %530
    %v533 = vsel %vm433, %v531, 0.0
    %534 = vadd.xlane.f32.xlu0 %v533
    %v535 = vpop.xlane.xlu0 %534
    %vm536 = vcmp.ge.f32.partialorder %v520, %v535
    %v537 = vor.u32 %v518, 33554432
    %v538 = vsel %vm536, %v537, %v518
    %v539 = vsub.f32 %v520, %v535
    %v540 = vsel %vm536, %v539, %v520
    %v541 = vshra.s32 %v538, 25
    %vm542 = vcmp.eq.s32.totalorder %v523, %v541
    %v543 = vshra.s32 %v419, 24
    %v544 = vand.u32 %v543, 1
    %vm545 = vcmp.eq.s32.totalorder %v544, 0
    %vm546 = vmand %vm542, %vm545
    %v547 = vsel %vm546, 1, 0
    %v548 = vcvt.s32.f32 %v547
    %550 = vrot.lane.b32.xlu0 %v548, 126
    %v551 = vpop.permute.xlu0 %550
    %v553 = vsel %vm433, %v551, 0.0
    %554 = vadd.xlane.f32.xlu0 %v553
    %v555 = vpop.xlane.xlu0 %554
    %vm556 = vcmp.ge.f32.partialorder %v540, %v555
    %v557 = vor.u32 %v538, 16777216
    %v558 = vsel %vm556, %v557, %v538
    %v559 = vsub.f32 %v540, %v555
    %v560 = vsel %vm556, %v559, %v540
    %v561 = vshra.s32 %v558, 24
    %vm562 = vcmp.eq.s32.totalorder %v543, %v561
    %v563 = vshra.s32 %v419, 23
    %v564 = vand.u32 %v563, 1
    %vm565 = vcmp.eq.s32.totalorder %v564, 0
    %vm566 = vmand %vm562, %vm565
    %v567 = vsel %vm566, 1, 0
    %v568 = vcvt.s32.f32 %v567
    %570 = vrot.lane.b32.xlu0 %v568, 126
    %v571 = vpop.permute.xlu0 %570
    %v573 = vsel %vm433, %v571, 0.0
    %574 = vadd.xlane.f32.xlu0 %v573
    %v575 = vpop.xlane.xlu0 %574
    %vm576 = vcmp.ge.f32.partialorder %v560, %v575
    %v577 = vor.u32 %v558, 8388608
    %v578 = vsel %vm576, %v577, %v558
    %v579 = vsub.f32 %v560, %v575
    %v580 = vsel %vm576, %v579, %v560
    %v581 = vshra.s32 %v578, 23
    %vm582 = vcmp.eq.s32.totalorder %v563, %v581
    %v583 = vshra.s32 %v419, 22
    %v584 = vand.u32 %v583, 1
    %vm585 = vcmp.eq.s32.totalorder %v584, 0
    %vm586 = vmand %vm582, %vm585
    %v587 = vsel %vm586, 1, 0
    %v588 = vcvt.s32.f32 %v587
    %590 = vrot.lane.b32.xlu0 %v588, 126
    %v591 = vpop.permute.xlu0 %590
    %v593 = vsel %vm433, %v591, 0.0
    %594 = vadd.xlane.f32.xlu0 %v593
    %v595 = vpop.xlane.xlu0 %594
    %vm596 = vcmp.ge.f32.partialorder %v580, %v595
    %v597 = vor.u32 %v578, 4194304
    %v598 = vsel %vm596, %v597, %v578
    %v599 = vsub.f32 %v580, %v595
    %v600 = vsel %vm596, %v599, %v580
    %v601 = vshra.s32 %v598, 22
    %vm602 = vcmp.eq.s32.totalorder %v583, %v601
    %v603 = vshra.s32 %v419, 21
    %v604 = vand.u32 %v603, 1
    %vm605 = vcmp.eq.s32.totalorder %v604, 0
    %vm606 = vmand %vm602, %vm605
    %v607 = vsel %vm606, 1, 0
    %v608 = vcvt.s32.f32 %v607
    %610 = vrot.lane.b32.xlu0 %v608, 126
    %v611 = vpop.permute.xlu0 %610
    %v613 = vsel %vm433, %v611, 0.0
    %614 = vadd.xlane.f32.xlu0 %v613
    %v615 = vpop.xlane.xlu0 %614
    %vm616 = vcmp.ge.f32.partialorder %v600, %v615
    %v617 = vor.u32 %v598, 2097152
    %v618 = vsel %vm616, %v617, %v598
    %v619 = vsub.f32 %v600, %v615
    %v620 = vsel %vm616, %v619, %v600
    %v621 = vshra.s32 %v618, 21
    %vm622 = vcmp.eq.s32.totalorder %v603, %v621
    %v623 = vshra.s32 %v419, 20
    %v624 = vand.u32 %v623, 1
    %vm625 = vcmp.eq.s32.totalorder %v624, 0
    %vm626 = vmand %vm622, %vm625
    %v627 = vsel %vm626, 1, 0
    %v628 = vcvt.s32.f32 %v627
    %630 = vrot.lane.b32.xlu0 %v628, 126
    %v631 = vpop.permute.xlu0 %630
    %v633 = vsel %vm433, %v631, 0.0
    %634 = vadd.xlane.f32.xlu0 %v633
    %v635 = vpop.xlane.xlu0 %634
    %vm636 = vcmp.ge.f32.partialorder %v620, %v635
    %v637 = vor.u32 %v618, 1048576
    %v638 = vsel %vm636, %v637, %v618
    %v639 = vsub.f32 %v620, %v635
    %v640 = vsel %vm636, %v639, %v620
    %v641 = vshra.s32 %v638, 20
    %vm642 = vcmp.eq.s32.totalorder %v623, %v641
    %v643 = vshra.s32 %v419, 19
    %v644 = vand.u32 %v643, 1
    %vm645 = vcmp.eq.s32.totalorder %v644, 0
    %vm646 = vmand %vm642, %vm645
    %v647 = vsel %vm646, 1, 0
    %v648 = vcvt.s32.f32 %v647
    %650 = vrot.lane.b32.xlu0 %v648, 126
    %v651 = vpop.permute.xlu0 %650
    %v653 = vsel %vm433, %v651, 0.0
    %654 = vadd.xlane.f32.xlu0 %v653
    %v655 = vpop.xlane.xlu0 %654
    %vm656 = vcmp.ge.f32.partialorder %v640, %v655
    %v657 = vor.u32 %v638, 524288
    %v658 = vsel %vm656, %v657, %v638
    %v659 = vsub.f32 %v640, %v655
    %v660 = vsel %vm656, %v659, %v640
    %v661 = vshra.s32 %v658, 19
    %vm662 = vcmp.eq.s32.totalorder %v643, %v661
    %v663 = vshra.s32 %v419, 18
    %v664 = vand.u32 %v663, 1
    %vm665 = vcmp.eq.s32.totalorder %v664, 0
    %vm666 = vmand %vm662, %vm665
    %v667 = vsel %vm666, 1, 0
    %v668 = vcvt.s32.f32 %v667
    %670 = vrot.lane.b32.xlu0 %v668, 126
    %v671 = vpop.permute.xlu0 %670
    %v673 = vsel %vm433, %v671, 0.0
    %674 = vadd.xlane.f32.xlu0 %v673
    %v675 = vpop.xlane.xlu0 %674
    %vm676 = vcmp.ge.f32.partialorder %v660, %v675
    %v677 = vor.u32 %v658, 262144
    %v678 = vsel %vm676, %v677, %v658
    %v679 = vsub.f32 %v660, %v675
    %v680 = vsel %vm676, %v679, %v660
    %v681 = vshra.s32 %v678, 18
    %vm682 = vcmp.eq.s32.totalorder %v663, %v681
    %v683 = vshra.s32 %v419, 17
    %v684 = vand.u32 %v683, 1
    %vm685 = vcmp.eq.s32.totalorder %v684, 0
    %vm686 = vmand %vm682, %vm685
    %v687 = vsel %vm686, 1, 0
    %v688 = vcvt.s32.f32 %v687
    %690 = vrot.lane.b32.xlu0 %v688, 126
    %v691 = vpop.permute.xlu0 %690
    %v693 = vsel %vm433, %v691, 0.0
    %694 = vadd.xlane.f32.xlu0 %v693
    %v695 = vpop.xlane.xlu0 %694
    %vm696 = vcmp.ge.f32.partialorder %v680, %v695
    %v697 = vor.u32 %v678, 131072
    %v698 = vsel %vm696, %v697, %v678
    %v699 = vsub.f32 %v680, %v695
    %v700 = vsel %vm696, %v699, %v680
    %v701 = vshra.s32 %v698, 17
    %vm702 = vcmp.eq.s32.totalorder %v683, %v701
    %v703 = vshra.s32 %v419, 16
    %v704 = vand.u32 %v703, 1
    %vm705 = vcmp.eq.s32.totalorder %v704, 0
    %vm706 = vmand %vm702, %vm705
    %v707 = vsel %vm706, 1, 0
    %v708 = vcvt.s32.f32 %v707
    %710 = vrot.lane.b32.xlu0 %v708, 126
    %v711 = vpop.permute.xlu0 %710
    %v713 = vsel %vm433, %v711, 0.0
    %714 = vadd.xlane.f32.xlu0 %v713
    %v715 = vpop.xlane.xlu0 %714
    %vm716 = vcmp.ge.f32.partialorder %v700, %v715
    %v717 = vor.u32 %v698, 65536
    %v718 = vsel %vm716, %v717, %v698
    %v719 = vsub.f32 %v700, %v715
    %v720 = vsel %vm716, %v719, %v700
    %v721 = vshra.s32 %v718, 16
    %vm722 = vcmp.eq.s32.totalorder %v703, %v721
    %v723 = vshra.s32 %v419, 15
    %v724 = vand.u32 %v723, 1
    %vm725 = vcmp.eq.s32.totalorder %v724, 0
    %vm726 = vmand %vm722, %vm725
    %v727 = vsel %vm726, 1, 0
    %v728 = vcvt.s32.f32 %v727
    %730 = vrot.lane.b32.xlu0 %v728, 126
    %v731 = vpop.permute.xlu0 %730
    %v733 = vsel %vm433, %v731, 0.0
    %734 = vadd.xlane.f32.xlu0 %v733
    %v735 = vpop.xlane.xlu0 %734
    %vm736 = vcmp.ge.f32.partialorder %v720, %v735
    %v737 = vor.u32 %v718, 32768
    %v738 = vsel %vm736, %v737, %v718
    %v739 = vsub.f32 %v720, %v735
    %v740 = vsel %vm736, %v739, %v720
    %v741 = vshra.s32 %v738, 15
    %vm742 = vcmp.eq.s32.totalorder %v723, %v741
    %v743 = vshra.s32 %v419, 14
    %v744 = vand.u32 %v743, 1
    %vm745 = vcmp.eq.s32.totalorder %v744, 0
    %vm746 = vmand %vm742, %vm745
    %v747 = vsel %vm746, 1, 0
    %v748 = vcvt.s32.f32 %v747
    %750 = vrot.lane.b32.xlu0 %v748, 126
    %v751 = vpop.permute.xlu0 %750
    %v753 = vsel %vm433, %v751, 0.0
    %754 = vadd.xlane.f32.xlu0 %v753
    %v755 = vpop.xlane.xlu0 %754
    %vm756 = vcmp.ge.f32.partialorder %v740, %v755
    %v757 = vor.u32 %v738, 16384
    %v758 = vsel %vm756, %v757, %v738
    %v759 = vsub.f32 %v740, %v755
    %v760 = vsel %vm756, %v759, %v740
    %v761 = vshra.s32 %v758, 14
    %vm762 = vcmp.eq.s32.totalorder %v743, %v761
    %v763 = vshra.s32 %v419, 13
    %v764 = vand.u32 %v763, 1
    %vm765 = vcmp.eq.s32.totalorder %v764, 0
    %vm766 = vmand %vm762, %vm765
    %v767 = vsel %vm766, 1, 0
    %v768 = vcvt.s32.f32 %v767
    %770 = vrot.lane.b32.xlu0 %v768, 126
    %v771 = vpop.permute.xlu0 %770
    %v773 = vsel %vm433, %v771, 0.0
    %774 = vadd.xlane.f32.xlu0 %v773
    %v775 = vpop.xlane.xlu0 %774
    %vm776 = vcmp.ge.f32.partialorder %v760, %v775
    %v777 = vor.u32 %v758, 8192
    %v778 = vsel %vm776, %v777, %v758
    %v779 = vsub.f32 %v760, %v775
    %v780 = vsel %vm776, %v779, %v760
    %v781 = vshra.s32 %v778, 13
    %vm782 = vcmp.eq.s32.totalorder %v763, %v781
    %v783 = vshra.s32 %v419, 12
    %v784 = vand.u32 %v783, 1
    %vm785 = vcmp.eq.s32.totalorder %v784, 0
    %vm786 = vmand %vm782, %vm785
    %v787 = vsel %vm786, 1, 0
    %v788 = vcvt.s32.f32 %v787
    %790 = vrot.lane.b32.xlu0 %v788, 126
    %v791 = vpop.permute.xlu0 %790
    %v793 = vsel %vm433, %v791, 0.0
    %794 = vadd.xlane.f32.xlu0 %v793
    %v795 = vpop.xlane.xlu0 %794
    %vm796 = vcmp.ge.f32.partialorder %v780, %v795
    %v797 = vor.u32 %v778, 4096
    %v798 = vsel %vm796, %v797, %v778
    %v799 = vsub.f32 %v780, %v795
    %v800 = vsel %vm796, %v799, %v780
    %v801 = vshra.s32 %v798, 12
    %vm802 = vcmp.eq.s32.totalorder %v783, %v801
    %v803 = vshra.s32 %v419, 11
    %v804 = vand.u32 %v803, 1
    %vm805 = vcmp.eq.s32.totalorder %v804, 0
    %vm806 = vmand %vm802, %vm805
    %v807 = vsel %vm806, 1, 0
    %v808 = vcvt.s32.f32 %v807
    %810 = vrot.lane.b32.xlu0 %v808, 126
    %v811 = vpop.permute.xlu0 %810
    %v813 = vsel %vm433, %v811, 0.0
    %814 = vadd.xlane.f32.xlu0 %v813
    %v815 = vpop.xlane.xlu0 %814
    %vm816 = vcmp.ge.f32.partialorder %v800, %v815
    %v817 = vor.u32 %v798, 2048
    %v818 = vsel %vm816, %v817, %v798
    %v819 = vsub.f32 %v800, %v815
    %v820 = vsel %vm816, %v819, %v800
    %v821 = vshra.s32 %v818, 11
    %vm822 = vcmp.eq.s32.totalorder %v803, %v821
    %v823 = vshra.s32 %v419, 10
    %v824 = vand.u32 %v823, 1
    %vm825 = vcmp.eq.s32.totalorder %v824, 0
    %vm826 = vmand %vm822, %vm825
    %v827 = vsel %vm826, 1, 0
    %v828 = vcvt.s32.f32 %v827
    %830 = vrot.lane.b32.xlu0 %v828, 126
    %v831 = vpop.permute.xlu0 %830
    %v833 = vsel %vm433, %v831, 0.0
    %834 = vadd.xlane.f32.xlu0 %v833
    %v835 = vpop.xlane.xlu0 %834
    %vm836 = vcmp.ge.f32.partialorder %v820, %v835
    %v837 = vor.u32 %v818, 1024
    %v838 = vsel %vm836, %v837, %v818
    %v839 = vsub.f32 %v820, %v835
    %v840 = vsel %vm836, %v839, %v820
    %v841 = vshra.s32 %v838, 10
    %vm842 = vcmp.eq.s32.totalorder %v823, %v841
    %v843 = vshra.s32 %v419, 9
    %v844 = vand.u32 %v843, 1
    %vm845 = vcmp.eq.s32.totalorder %v844, 0
    %vm846 = vmand %vm842, %vm845
    %v847 = vsel %vm846, 1, 0
    %v848 = vcvt.s32.f32 %v847
    %850 = vrot.lane.b32.xlu0 %v848, 126
    %v851 = vpop.permute.xlu0 %850
    %v853 = vsel %vm433, %v851, 0.0
    %854 = vadd.xlane.f32.xlu0 %v853
    %v855 = vpop.xlane.xlu0 %854
    %vm856 = vcmp.ge.f32.partialorder %v840, %v855
    %v857 = vor.u32 %v838, 512
    %v858 = vsel %vm856, %v857, %v838
    %v859 = vsub.f32 %v840, %v855
    %v860 = vsel %vm856, %v859, %v840
    %v861 = vshra.s32 %v858, 9
    %vm862 = vcmp.eq.s32.totalorder %v843, %v861
    %v863 = vshra.s32 %v419, 8
    %v864 = vand.u32 %v863, 1
    %vm865 = vcmp.eq.s32.totalorder %v864, 0
    %vm866 = vmand %vm862, %vm865
    %v867 = vsel %vm866, 1, 0
    %v868 = vcvt.s32.f32 %v867
    %870 = vrot.lane.b32.xlu0 %v868, 126
    %v871 = vpop.permute.xlu0 %870
    %v873 = vsel %vm433, %v871, 0.0
    %874 = vadd.xlane.f32.xlu0 %v873
    %v875 = vpop.xlane.xlu0 %874
    %vm876 = vcmp.ge.f32.partialorder %v860, %v875
    %v877 = vor.u32 %v858, 256
    %v878 = vsel %vm876, %v877, %v858
    %v879 = vsub.f32 %v860, %v875
    %v880 = vsel %vm876, %v879, %v860
    %v881 = vshra.s32 %v878, 8
    %vm882 = vcmp.eq.s32.totalorder %v863, %v881
    %v883 = vshra.s32 %v419, 7
    %v884 = vand.u32 %v883, 1
    %vm885 = vcmp.eq.s32.totalorder %v884, 0
    %vm886 = vmand %vm882, %vm885
    %v887 = vsel %vm886, 1, 0
    %v888 = vcvt.s32.f32 %v887
    %890 = vrot.lane.b32.xlu0 %v888, 126
    %v891 = vpop.permute.xlu0 %890
    %v893 = vsel %vm433, %v891, 0.0
    %894 = vadd.xlane.f32.xlu0 %v893
    %v895 = vpop.xlane.xlu0 %894
    %vm896 = vcmp.ge.f32.partialorder %v880, %v895
    %v897 = vor.u32 %v878, 128
    %v898 = vsel %vm896, %v897, %v878
    %v899 = vsub.f32 %v880, %v895
    %v900 = vsel %vm896, %v899, %v880
    %v901 = vshra.s32 %v898, 7
    %vm902 = vcmp.eq.s32.totalorder %v883, %v901
    %v903 = vshra.s32 %v419, 6
    %v904 = vand.u32 %v903, 1
    %vm905 = vcmp.eq.s32.totalorder %v904, 0
    %vm906 = vmand %vm902, %vm905
    %v907 = vsel %vm906, 1, 0
    %v908 = vcvt.s32.f32 %v907
    %910 = vrot.lane.b32.xlu0 %v908, 126
    %v911 = vpop.permute.xlu0 %910
    %v913 = vsel %vm433, %v911, 0.0
    %914 = vadd.xlane.f32.xlu0 %v913
    %v915 = vpop.xlane.xlu0 %914
    %vm916 = vcmp.ge.f32.partialorder %v900, %v915
    %v917 = vor.u32 %v898, 64
    %v918 = vsel %vm916, %v917, %v898
    %v919 = vsub.f32 %v900, %v915
    %v920 = vsel %vm916, %v919, %v900
    %v921 = vshra.s32 %v918, 6
    %vm922 = vcmp.eq.s32.totalorder %v903, %v921
    %v923 = vshra.s32 %v419, 5
    %v924 = vand.u32 %v923, 1
    %vm925 = vcmp.eq.s32.totalorder %v924, 0
    %vm926 = vmand %vm922, %vm925
    %v927 = vsel %vm926, 1, 0
    %v928 = vcvt.s32.f32 %v927
    %930 = vrot.lane.b32.xlu0 %v928, 126
    %v931 = vpop.permute.xlu0 %930
    %v933 = vsel %vm433, %v931, 0.0
    %934 = vadd.xlane.f32.xlu0 %v933
    %v935 = vpop.xlane.xlu0 %934
    %vm936 = vcmp.ge.f32.partialorder %v920, %v935
    %v937 = vor.u32 %v918, 32
    %v938 = vsel %vm936, %v937, %v918
    %v939 = vsub.f32 %v920, %v935
    %v940 = vsel %vm936, %v939, %v920
    %v941 = vshra.s32 %v938, 5
    %vm942 = vcmp.eq.s32.totalorder %v923, %v941
    %v943 = vshra.s32 %v419, 4
    %v944 = vand.u32 %v943, 1
    %vm945 = vcmp.eq.s32.totalorder %v944, 0
    %vm946 = vmand %vm942, %vm945
    %v947 = vsel %vm946, 1, 0
    %v948 = vcvt.s32.f32 %v947
    %950 = vrot.lane.b32.xlu0 %v948, 126
    %v951 = vpop.permute.xlu0 %950
    %v953 = vsel %vm433, %v951, 0.0
    %954 = vadd.xlane.f32.xlu0 %v953
    %v955 = vpop.xlane.xlu0 %954
    %vm956 = vcmp.ge.f32.partialorder %v940, %v955
    %v957 = vor.u32 %v938, 16
    %v958 = vsel %vm956, %v957, %v938
    %v959 = vsub.f32 %v940, %v955
    %v960 = vsel %vm956, %v959, %v940
    %v961 = vshra.s32 %v958, 4
    %vm962 = vcmp.eq.s32.totalorder %v943, %v961
    %v963 = vshra.s32 %v419, 3
    %v964 = vand.u32 %v963, 1
    %vm965 = vcmp.eq.s32.totalorder %v964, 0
    %vm966 = vmand %vm962, %vm965
    %v967 = vsel %vm966, 1, 0
    %v968 = vcvt.s32.f32 %v967
    %970 = vrot.lane.b32.xlu0 %v968, 126
    %v971 = vpop.permute.xlu0 %970
    %v973 = vsel %vm433, %v971, 0.0
    %974 = vadd.xlane.f32.xlu0 %v973
    %v975 = vpop.xlane.xlu0 %974
    %vm976 = vcmp.ge.f32.partialorder %v960, %v975
    %v977 = vor.u32 %v958, 8
    %v978 = vsel %vm976, %v977, %v958
    %v979 = vsub.f32 %v960, %v975
    %v980 = vsel %vm976, %v979, %v960
    %v981 = vshra.s32 %v978, 3
    %vm982 = vcmp.eq.s32.totalorder %v963, %v981
    %v983 = vshra.s32 %v419, 2
    %v984 = vand.u32 %v983, 1
    %vm985 = vcmp.eq.s32.totalorder %v984, 0
    %vm986 = vmand %vm982, %vm985
    %v987 = vsel %vm986, 1, 0
    %v988 = vcvt.s32.f32 %v987
    %990 = vrot.lane.b32.xlu0 %v988, 126
    %v991 = vpop.permute.xlu0 %990
    %v993 = vsel %vm433, %v991, 0.0
    %994 = vadd.xlane.f32.xlu0 %v993
    %v995 = vpop.xlane.xlu0 %994
    %vm996 = vcmp.ge.f32.partialorder %v980, %v995
    %v997 = vor.u32 %v978, 4
    %v998 = vsel %vm996, %v997, %v978
    %v999 = vsub.f32 %v980, %v995
    %v1000 = vsel %vm996, %v999, %v980
    %v1001 = vshra.s32 %v998, 2
    %vm1002 = vcmp.eq.s32.totalorder %v983, %v1001
    %v1003 = vshra.s32 %v419, 1
    %v1004 = vand.u32 %v1003, 1
    %vm1005 = vcmp.eq.s32.totalorder %v1004, 0
    %vm1006 = vmand %vm1002, %vm1005
    %v1007 = vsel %vm1006, 1, 0
    %v1008 = vcvt.s32.f32 %v1007
    %1010 = vrot.lane.b32.xlu0 %v1008, 126
    %v1011 = vpop.permute.xlu0 %1010
    %v1013 = vsel %vm433, %v1011, 0.0
    %1014 = vadd.xlane.f32.xlu0 %v1013
    %v1015 = vpop.xlane.xlu0 %1014
    %vm1016 = vcmp.ge.f32.partialorder %v1000, %v1015
    %v1017 = vor.u32 %v998, 2
    %v1018 = vsel %vm1016, %v1017, %v998
    %v1019 = vsub.f32 %v1000, %v1015
    %v1020 = vsel %vm1016, %v1019, %v1000
    %v1021 = vshra.s32 %v1018, 1
    %vm1022 = vcmp.eq.s32.totalorder %v1003, %v1021
    %v1023 = vand.u32 %v419, 1
    %vm1024 = vcmp.eq.s32.totalorder %v1023, 0
    %vm1025 = vmand %vm1022, %vm1024
    %v1026 = vsel %vm1025, 1, 0
    %v1027 = vcvt.s32.f32 %v1026
    %1029 = vrot.lane.b32.xlu0 %v1027, 126
    %v1030 = vpop.permute.xlu0 %1029
    %v1032 = vsel %vm433, %v1030, 0.0
    %1033 = vadd.xlane.f32.xlu0 %v1032
    %v1034 = vpop.xlane.xlu0 %1033
    %vm1035 = vcmp.ge.f32.partialorder %v1020, %v1034
    %v1036 = vor.u32 %v1018, 1
    %v1037 = vsel %vm1035, %v1036, %v1018
    %v1039 = vsub.f32 %v418, %v1037
    %v1040 = vand.u32 2147483647, %v1039
    %v1042 = vshra.s32 %v1040, 31
    %vm1043 = vcmp.eq.s32.totalorder %v1042, 0
    %v1044 = vshra.s32 %v1040, 30
    %v1045 = vand.u32 %v1044, 1
    %vm1046 = vcmp.eq.s32.totalorder %v1045, 0
    %vm1047 = vmand %vm1043, %vm1046
    %v1048 = vsel %vm1047, 1, 0
    %v1049 = vcvt.s32.f32 %v1048
    %1051 = vrot.lane.b32.xlu0 %v1049, 126
    %v1052 = vpop.permute.xlu0 %1051
    %v1054 = vsel %vm433, %v1052, 0.0
    %1055 = vadd.xlane.f32.xlu0 %v1054
    %v1056 = vpop.xlane.xlu0 %1055
    %vm1057 = vcmp.ge.f32.partialorder 30.0, %v1056
    %v1058 = vsel %vm1057, 1073741824, 0
    %v1059 = vsub.f32 30.0, %v1056
    %v1060 = vsel %vm1057, %v1059, 30.0
    %v1061 = vshra.s32 %v1058, 30
    %vm1062 = vcmp.eq.s32.totalorder %v1044, %v1061
    %v1063 = vshra.s32 %v1040, 29
    %v1064 = vand.u32 %v1063, 1
    %vm1065 = vcmp.eq.s32.totalorder %v1064, 0
    %vm1066 = vmand %vm1062, %vm1065
    %v1067 = vsel %vm1066, 1, 0
    %v1068 = vcvt.s32.f32 %v1067
    %1070 = vrot.lane.b32.xlu0 %v1068, 126
    %v1071 = vpop.permute.xlu0 %1070
    %v1073 = vsel %vm433, %v1071, 0.0
    %1074 = vadd.xlane.f32.xlu0 %v1073
    %v1075 = vpop.xlane.xlu0 %1074
    %vm1076 = vcmp.ge.f32.partialorder %v1060, %v1075
    %v1077 = vor.u32 %v1058, 536870912
    %v1078 = vsel %vm1076, %v1077, %v1058
    %v1079 = vsub.f32 %v1060, %v1075
    %v1080 = vsel %vm1076, %v1079, %v1060
    %v1081 = vshra.s32 %v1078, 29
    %vm1082 = vcmp.eq.s32.totalorder %v1063, %v1081
    %v1083 = vshra.s32 %v1040, 28
    %v1084 = vand.u32 %v1083, 1
    %vm1085 = vcmp.eq.s32.totalorder %v1084, 0
    %vm1086 = vmand %vm1082, %vm1085
    %v1087 = vsel %vm1086, 1, 0
    %v1088 = vcvt.s32.f32 %v1087
    %1090 = vrot.lane.b32.xlu0 %v1088, 126
    %v1091 = vpop.permute.xlu0 %1090
    %v1093 = vsel %vm433, %v1091, 0.0
    %1094 = vadd.xlane.f32.xlu0 %v1093
    %v1095 = vpop.xlane.xlu0 %1094
    %vm1096 = vcmp.ge.f32.partialorder %v1080, %v1095
    %v1097 = vor.u32 %v1078, 268435456
    %v1098 = vsel %vm1096, %v1097, %v1078
    %v1099 = vsub.f32 %v1080, %v1095
    %v1100 = vsel %vm1096, %v1099, %v1080
    %v1101 = vshra.s32 %v1098, 28
    %vm1102 = vcmp.eq.s32.totalorder %v1083, %v1101
    %v1103 = vshra.s32 %v1040, 27
    %v1104 = vand.u32 %v1103, 1
    %vm1105 = vcmp.eq.s32.totalorder %v1104, 0
    %vm1106 = vmand %vm1102, %vm1105
    %v1107 = vsel %vm1106, 1, 0
    %v1108 = vcvt.s32.f32 %v1107
    %1110 = vrot.lane.b32.xlu0 %v1108, 126
    %v1111 = vpop.permute.xlu0 %1110
    %v1113 = vsel %vm433, %v1111, 0.0
    %1114 = vadd.xlane.f32.xlu0 %v1113
    %v1115 = vpop.xlane.xlu0 %1114
    %vm1116 = vcmp.ge.f32.partialorder %v1100, %v1115
    %v1117 = vor.u32 %v1098, 134217728
    %v1118 = vsel %vm1116, %v1117, %v1098
    %v1119 = vsub.f32 %v1100, %v1115
    %v1120 = vsel %vm1116, %v1119, %v1100
    %v1121 = vshra.s32 %v1118, 27
    %vm1122 = vcmp.eq.s32.totalorder %v1103, %v1121
    %v1123 = vshra.s32 %v1040, 26
    %v1124 = vand.u32 %v1123, 1
    %vm1125 = vcmp.eq.s32.totalorder %v1124, 0
    %vm1126 = vmand %vm1122, %vm1125
    %v1127 = vsel %vm1126, 1, 0
    %v1128 = vcvt.s32.f32 %v1127
    %1130 = vrot.lane.b32.xlu0 %v1128, 126
    %v1131 = vpop.permute.xlu0 %1130
    %v1133 = vsel %vm433, %v1131, 0.0
    %1134 = vadd.xlane.f32.xlu0 %v1133
    %v1135 = vpop.xlane.xlu0 %1134
    %vm1136 = vcmp.ge.f32.partialorder %v1120, %v1135
    %v1137 = vor.u32 %v1118, 67108864
    %v1138 = vsel %vm1136, %v1137, %v1118
    %v1139 = vsub.f32 %v1120, %v1135
    %v1140 = vsel %vm1136, %v1139, %v1120
    %v1141 = vshra.s32 %v1138, 26
    %vm1142 = vcmp.eq.s32.totalorder %v1123, %v1141
    %v1143 = vshra.s32 %v1040, 25
    %v1144 = vand.u32 %v1143, 1
    %vm1145 = vcmp.eq.s32.totalorder %v1144, 0
    %vm1146 = vmand %vm1142, %vm1145
    %v1147 = vsel %vm1146, 1, 0
    %v1148 = vcvt.s32.f32 %v1147
    %1150 = vrot.lane.b32.xlu0 %v1148, 126
    %v1151 = vpop.permute.xlu0 %1150
    %v1153 = vsel %vm433, %v1151, 0.0
    %1154 = vadd.xlane.f32.xlu0 %v1153
    %v1155 = vpop.xlane.xlu0 %1154
    %vm1156 = vcmp.ge.f32.partialorder %v1140, %v1155
    %v1157 = vor.u32 %v1138, 33554432
    %v1158 = vsel %vm1156, %v1157, %v1138
    %v1159 = vsub.f32 %v1140, %v1155
    %v1160 = vsel %vm1156, %v1159, %v1140
    %v1161 = vshra.s32 %v1158, 25
    %vm1162 = vcmp.eq.s32.totalorder %v1143, %v1161
    %v1163 = vshra.s32 %v1040, 24
    %v1164 = vand.u32 %v1163, 1
    %vm1165 = vcmp.eq.s32.totalorder %v1164, 0
    %vm1166 = vmand %vm1162, %vm1165
    %v1167 = vsel %vm1166, 1, 0
    %v1168 = vcvt.s32.f32 %v1167
    %1170 = vrot.lane.b32.xlu0 %v1168, 126
    %v1171 = vpop.permute.xlu0 %1170
    %v1173 = vsel %vm433, %v1171, 0.0
    %1174 = vadd.xlane.f32.xlu0 %v1173
    %v1175 = vpop.xlane.xlu0 %1174
    %vm1176 = vcmp.ge.f32.partialorder %v1160, %v1175
    %v1177 = vor.u32 %v1158, 16777216
    %v1178 = vsel %vm1176, %v1177, %v1158
    %v1179 = vsub.f32 %v1160, %v1175
    %v1180 = vsel %vm1176, %v1179, %v1160
    %v1181 = vshra.s32 %v1178, 24
    %vm1182 = vcmp.eq.s32.totalorder %v1163, %v1181
    %v1183 = vshra.s32 %v1040, 23
    %v1184 = vand.u32 %v1183, 1
    %vm1185 = vcmp.eq.s32.totalorder %v1184, 0
    %vm1186 = vmand %vm1182, %vm1185
    %v1187 = vsel %vm1186, 1, 0
    %v1188 = vcvt.s32.f32 %v1187
    %1190 = vrot.lane.b32.xlu0 %v1188, 126
    %v1191 = vpop.permute.xlu0 %1190
    %v1193 = vsel %vm433, %v1191, 0.0
    %1194 = vadd.xlane.f32.xlu0 %v1193
    %v1195 = vpop.xlane.xlu0 %1194
    %vm1196 = vcmp.ge.f32.partialorder %v1180, %v1195
    %v1197 = vor.u32 %v1178, 8388608
    %v1198 = vsel %vm1196, %v1197, %v1178
    %v1199 = vsub.f32 %v1180, %v1195
    %v1200 = vsel %vm1196, %v1199, %v1180
    %v1201 = vshra.s32 %v1198, 23
    %vm1202 = vcmp.eq.s32.totalorder %v1183, %v1201
    %v1203 = vshra.s32 %v1040, 22
    %v1204 = vand.u32 %v1203, 1
    %vm1205 = vcmp.eq.s32.totalorder %v1204, 0
    %vm1206 = vmand %vm1202, %vm1205
    %v1207 = vsel %vm1206, 1, 0
    %v1208 = vcvt.s32.f32 %v1207
    %1210 = vrot.lane.b32.xlu0 %v1208, 126
    %v1211 = vpop.permute.xlu0 %1210
    %v1213 = vsel %vm433, %v1211, 0.0
    %1214 = vadd.xlane.f32.xlu0 %v1213
    %v1215 = vpop.xlane.xlu0 %1214
    %vm1216 = vcmp.ge.f32.partialorder %v1200, %v1215
    %v1217 = vor.u32 %v1198, 4194304
    %v1218 = vsel %vm1216, %v1217, %v1198
    %v1219 = vsub.f32 %v1200, %v1215
    %v1220 = vsel %vm1216, %v1219, %v1200
    %v1221 = vshra.s32 %v1218, 22
    %vm1222 = vcmp.eq.s32.totalorder %v1203, %v1221
    %v1223 = vshra.s32 %v1040, 21
    %v1224 = vand.u32 %v1223, 1
    %vm1225 = vcmp.eq.s32.totalorder %v1224, 0
    %vm1226 = vmand %vm1222, %vm1225
    %v1227 = vsel %vm1226, 1, 0
    %v1228 = vcvt.s32.f32 %v1227
    %1230 = vrot.lane.b32.xlu0 %v1228, 126
    %v1231 = vpop.permute.xlu0 %1230
    %v1233 = vsel %vm433, %v1231, 0.0
    %1234 = vadd.xlane.f32.xlu0 %v1233
    %v1235 = vpop.xlane.xlu0 %1234
    %vm1236 = vcmp.ge.f32.partialorder %v1220, %v1235
    %v1237 = vor.u32 %v1218, 2097152
    %v1238 = vsel %vm1236, %v1237, %v1218
    %v1239 = vsub.f32 %v1220, %v1235
    %v1240 = vsel %vm1236, %v1239, %v1220
    %v1241 = vshra.s32 %v1238, 21
    %vm1242 = vcmp.eq.s32.totalorder %v1223, %v1241
    %v1243 = vshra.s32 %v1040, 20
    %v1244 = vand.u32 %v1243, 1
    %vm1245 = vcmp.eq.s32.totalorder %v1244, 0
    %vm1246 = vmand %vm1242, %vm1245
    %v1247 = vsel %vm1246, 1, 0
    %v1248 = vcvt.s32.f32 %v1247
    %1250 = vrot.lane.b32.xlu0 %v1248, 126
    %v1251 = vpop.permute.xlu0 %1250
    %v1253 = vsel %vm433, %v1251, 0.0
    %1254 = vadd.xlane.f32.xlu0 %v1253
    %v1255 = vpop.xlane.xlu0 %1254
    %vm1256 = vcmp.ge.f32.partialorder %v1240, %v1255
    %v1257 = vor.u32 %v1238, 1048576
    %v1258 = vsel %vm1256, %v1257, %v1238
    %v1259 = vsub.f32 %v1240, %v1255
    %v1260 = vsel %vm1256, %v1259, %v1240
    %v1261 = vshra.s32 %v1258, 20
    %vm1262 = vcmp.eq.s32.totalorder %v1243, %v1261
    %v1263 = vshra.s32 %v1040, 19
    %v1264 = vand.u32 %v1263, 1
    %vm1265 = vcmp.eq.s32.totalorder %v1264, 0
    %vm1266 = vmand %vm1262, %vm1265
    %v1267 = vsel %vm1266, 1, 0
    %v1268 = vcvt.s32.f32 %v1267
    %1270 = vrot.lane.b32.xlu0 %v1268, 126
    %v1271 = vpop.permute.xlu0 %1270
    %v1273 = vsel %vm433, %v1271, 0.0
    %1274 = vadd.xlane.f32.xlu0 %v1273
    %v1275 = vpop.xlane.xlu0 %1274
    %vm1276 = vcmp.ge.f32.partialorder %v1260, %v1275
    %v1277 = vor.u32 %v1258, 524288
    %v1278 = vsel %vm1276, %v1277, %v1258
    %v1279 = vsub.f32 %v1260, %v1275
    %v1280 = vsel %vm1276, %v1279, %v1260
    %v1281 = vshra.s32 %v1278, 19
    %vm1282 = vcmp.eq.s32.totalorder %v1263, %v1281
    %v1283 = vshra.s32 %v1040, 18
    %v1284 = vand.u32 %v1283, 1
    %vm1285 = vcmp.eq.s32.totalorder %v1284, 0
    %vm1286 = vmand %vm1282, %vm1285
    %v1287 = vsel %vm1286, 1, 0
    %v1288 = vcvt.s32.f32 %v1287
    %1290 = vrot.lane.b32.xlu0 %v1288, 126
    %v1291 = vpop.permute.xlu0 %1290
    %v1293 = vsel %vm433, %v1291, 0.0
    %1294 = vadd.xlane.f32.xlu0 %v1293
    %v1295 = vpop.xlane.xlu0 %1294
    %vm1296 = vcmp.ge.f32.partialorder %v1280, %v1295
    %v1297 = vor.u32 %v1278, 262144
    %v1298 = vsel %vm1296, %v1297, %v1278
    %v1299 = vsub.f32 %v1280, %v1295
    %v1300 = vsel %vm1296, %v1299, %v1280
    %v1301 = vshra.s32 %v1298, 18
    %vm1302 = vcmp.eq.s32.totalorder %v1283, %v1301
    %v1303 = vshra.s32 %v1040, 17
    %v1304 = vand.u32 %v1303, 1
    %vm1305 = vcmp.eq.s32.totalorder %v1304, 0
    %vm1306 = vmand %vm1302, %vm1305
    %v1307 = vsel %vm1306, 1, 0
    %v1308 = vcvt.s32.f32 %v1307
    %1310 = vrot.lane.b32.xlu0 %v1308, 126
    %v1311 = vpop.permute.xlu0 %1310
    %v1313 = vsel %vm433, %v1311, 0.0
    %1314 = vadd.xlane.f32.xlu0 %v1313
    %v1315 = vpop.xlane.xlu0 %1314
    %vm1316 = vcmp.ge.f32.partialorder %v1300, %v1315
    %v1317 = vor.u32 %v1298, 131072
    %v1318 = vsel %vm1316, %v1317, %v1298
    %v1319 = vsub.f32 %v1300, %v1315
    %v1320 = vsel %vm1316, %v1319, %v1300
    %v1321 = vshra.s32 %v1318, 17
    %vm1322 = vcmp.eq.s32.totalorder %v1303, %v1321
    %v1323 = vshra.s32 %v1040, 16
    %v1324 = vand.u32 %v1323, 1
    %vm1325 = vcmp.eq.s32.totalorder %v1324, 0
    %vm1326 = vmand %vm1322, %vm1325
    %v1327 = vsel %vm1326, 1, 0
    %v1328 = vcvt.s32.f32 %v1327
    %1330 = vrot.lane.b32.xlu0 %v1328, 126
    %v1331 = vpop.permute.xlu0 %1330
    %v1333 = vsel %vm433, %v1331, 0.0
    %1334 = vadd.xlane.f32.xlu0 %v1333
    %v1335 = vpop.xlane.xlu0 %1334
    %vm1336 = vcmp.ge.f32.partialorder %v1320, %v1335
    %v1337 = vor.u32 %v1318, 65536
    %v1338 = vsel %vm1336, %v1337, %v1318
    %v1339 = vsub.f32 %v1320, %v1335
    %v1340 = vsel %vm1336, %v1339, %v1320
    %v1341 = vshra.s32 %v1338, 16
    %vm1342 = vcmp.eq.s32.totalorder %v1323, %v1341
    %v1343 = vshra.s32 %v1040, 15
    %v1344 = vand.u32 %v1343, 1
    %vm1345 = vcmp.eq.s32.totalorder %v1344, 0
    %vm1346 = vmand %vm1342, %vm1345
    %v1347 = vsel %vm1346, 1, 0
    %v1348 = vcvt.s32.f32 %v1347
    %1350 = vrot.lane.b32.xlu0 %v1348, 126
    %v1351 = vpop.permute.xlu0 %1350
    %v1353 = vsel %vm433, %v1351, 0.0
    %1354 = vadd.xlane.f32.xlu0 %v1353
    %v1355 = vpop.xlane.xlu0 %1354
    %vm1356 = vcmp.ge.f32.partialorder %v1340, %v1355
    %v1357 = vor.u32 %v1338, 32768
    %v1358 = vsel %vm1356, %v1357, %v1338
    %v1359 = vsub.f32 %v1340, %v1355
    %v1360 = vsel %vm1356, %v1359, %v1340
    %v1361 = vshra.s32 %v1358, 15
    %vm1362 = vcmp.eq.s32.totalorder %v1343, %v1361
    %v1363 = vshra.s32 %v1040, 14
    %v1364 = vand.u32 %v1363, 1
    %vm1365 = vcmp.eq.s32.totalorder %v1364, 0
    %vm1366 = vmand %vm1362, %vm1365
    %v1367 = vsel %vm1366, 1, 0
    %v1368 = vcvt.s32.f32 %v1367
    %1370 = vrot.lane.b32.xlu0 %v1368, 126
    %v1371 = vpop.permute.xlu0 %1370
    %v1373 = vsel %vm433, %v1371, 0.0
    %1374 = vadd.xlane.f32.xlu0 %v1373
    %v1375 = vpop.xlane.xlu0 %1374
    %vm1376 = vcmp.ge.f32.partialorder %v1360, %v1375
    %v1377 = vor.u32 %v1358, 16384
    %v1378 = vsel %vm1376, %v1377, %v1358
    %v1379 = vsub.f32 %v1360, %v1375
    %v1380 = vsel %vm1376, %v1379, %v1360
    %v1381 = vshra.s32 %v1378, 14
    %vm1382 = vcmp.eq.s32.totalorder %v1363, %v1381
    %v1383 = vshra.s32 %v1040, 13
    %v1384 = vand.u32 %v1383, 1
    %vm1385 = vcmp.eq.s32.totalorder %v1384, 0
    %vm1386 = vmand %vm1382, %vm1385
    %v1387 = vsel %vm1386, 1, 0
    %v1388 = vcvt.s32.f32 %v1387
    %1390 = vrot.lane.b32.xlu0 %v1388, 126
    %v1391 = vpop.permute.xlu0 %1390
    %v1393 = vsel %vm433, %v1391, 0.0
    %1394 = vadd.xlane.f32.xlu0 %v1393
    %v1395 = vpop.xlane.xlu0 %1394
    %vm1396 = vcmp.ge.f32.partialorder %v1380, %v1395
    %v1397 = vor.u32 %v1378, 8192
    %v1398 = vsel %vm1396, %v1397, %v1378
    %v1399 = vsub.f32 %v1380, %v1395
    %v1400 = vsel %vm1396, %v1399, %v1380
    %v1401 = vshra.s32 %v1398, 13
    %vm1402 = vcmp.eq.s32.totalorder %v1383, %v1401
    %v1403 = vshra.s32 %v1040, 12
    %v1404 = vand.u32 %v1403, 1
    %vm1405 = vcmp.eq.s32.totalorder %v1404, 0
    %vm1406 = vmand %vm1402, %vm1405
    %v1407 = vsel %vm1406, 1, 0
    %v1408 = vcvt.s32.f32 %v1407
    %1410 = vrot.lane.b32.xlu0 %v1408, 126
    %v1411 = vpop.permute.xlu0 %1410
    %v1413 = vsel %vm433, %v1411, 0.0
    %1414 = vadd.xlane.f32.xlu0 %v1413
    %v1415 = vpop.xlane.xlu0 %1414
    %vm1416 = vcmp.ge.f32.partialorder %v1400, %v1415
    %v1417 = vor.u32 %v1398, 4096
    %v1418 = vsel %vm1416, %v1417, %v1398
    %v1419 = vsub.f32 %v1400, %v1415
    %v1420 = vsel %vm1416, %v1419, %v1400
    %v1421 = vshra.s32 %v1418, 12
    %vm1422 = vcmp.eq.s32.totalorder %v1403, %v1421
    %v1423 = vshra.s32 %v1040, 11
    %v1424 = vand.u32 %v1423, 1
    %vm1425 = vcmp.eq.s32.totalorder %v1424, 0
    %vm1426 = vmand %vm1422, %vm1425
    %v1427 = vsel %vm1426, 1, 0
    %v1428 = vcvt.s32.f32 %v1427
    %1430 = vrot.lane.b32.xlu0 %v1428, 126
    %v1431 = vpop.permute.xlu0 %1430
    %v1433 = vsel %vm433, %v1431, 0.0
    %1434 = vadd.xlane.f32.xlu0 %v1433
    %v1435 = vpop.xlane.xlu0 %1434
    %vm1436 = vcmp.ge.f32.partialorder %v1420, %v1435
    %v1437 = vor.u32 %v1418, 2048
    %v1438 = vsel %vm1436, %v1437, %v1418
    %v1439 = vsub.f32 %v1420, %v1435
    %v1440 = vsel %vm1436, %v1439, %v1420
    %v1441 = vshra.s32 %v1438, 11
    %vm1442 = vcmp.eq.s32.totalorder %v1423, %v1441
    %v1443 = vshra.s32 %v1040, 10
    %v1444 = vand.u32 %v1443, 1
    %vm1445 = vcmp.eq.s32.totalorder %v1444, 0
    %vm1446 = vmand %vm1442, %vm1445
    %v1447 = vsel %vm1446, 1, 0
    %v1448 = vcvt.s32.f32 %v1447
    %1450 = vrot.lane.b32.xlu0 %v1448, 126
    %v1451 = vpop.permute.xlu0 %1450
    %v1453 = vsel %vm433, %v1451, 0.0
    %1454 = vadd.xlane.f32.xlu0 %v1453
    %v1455 = vpop.xlane.xlu0 %1454
    %vm1456 = vcmp.ge.f32.partialorder %v1440, %v1455
    %v1457 = vor.u32 %v1438, 1024
    %v1458 = vsel %vm1456, %v1457, %v1438
    %v1459 = vsub.f32 %v1440, %v1455
    %v1460 = vsel %vm1456, %v1459, %v1440
    %v1461 = vshra.s32 %v1458, 10
    %vm1462 = vcmp.eq.s32.totalorder %v1443, %v1461
    %v1463 = vshra.s32 %v1040, 9
    %v1464 = vand.u32 %v1463, 1
    %vm1465 = vcmp.eq.s32.totalorder %v1464, 0
    %vm1466 = vmand %vm1462, %vm1465
    %v1467 = vsel %vm1466, 1, 0
    %v1468 = vcvt.s32.f32 %v1467
    %1470 = vrot.lane.b32.xlu0 %v1468, 126
    %v1471 = vpop.permute.xlu0 %1470
    %v1473 = vsel %vm433, %v1471, 0.0
    %1474 = vadd.xlane.f32.xlu0 %v1473
    %v1475 = vpop.xlane.xlu0 %1474
    %vm1476 = vcmp.ge.f32.partialorder %v1460, %v1475
    %v1477 = vor.u32 %v1458, 512
    %v1478 = vsel %vm1476, %v1477, %v1458
    %v1479 = vsub.f32 %v1460, %v1475
    %v1480 = vsel %vm1476, %v1479, %v1460
    %v1481 = vshra.s32 %v1478, 9
    %vm1482 = vcmp.eq.s32.totalorder %v1463, %v1481
    %v1483 = vshra.s32 %v1040, 8
    %v1484 = vand.u32 %v1483, 1
    %vm1485 = vcmp.eq.s32.totalorder %v1484, 0
    %vm1486 = vmand %vm1482, %vm1485
    %v1487 = vsel %vm1486, 1, 0
    %v1488 = vcvt.s32.f32 %v1487
    %1490 = vrot.lane.b32.xlu0 %v1488, 126
    %v1491 = vpop.permute.xlu0 %1490
    %v1493 = vsel %vm433, %v1491, 0.0
    %1494 = vadd.xlane.f32.xlu0 %v1493
    %v1495 = vpop.xlane.xlu0 %1494
    %vm1496 = vcmp.ge.f32.partialorder %v1480, %v1495
    %v1497 = vor.u32 %v1478, 256
    %v1498 = vsel %vm1496, %v1497, %v1478
    %v1499 = vsub.f32 %v1480, %v1495
    %v1500 = vsel %vm1496, %v1499, %v1480
    %v1501 = vshra.s32 %v1498, 8
    %vm1502 = vcmp.eq.s32.totalorder %v1483, %v1501
    %v1503 = vshra.s32 %v1040, 7
    %v1504 = vand.u32 %v1503, 1
    %vm1505 = vcmp.eq.s32.totalorder %v1504, 0
    %vm1506 = vmand %vm1502, %vm1505
    %v1507 = vsel %vm1506, 1, 0
    %v1508 = vcvt.s32.f32 %v1507
    %1510 = vrot.lane.b32.xlu0 %v1508, 126
    %v1511 = vpop.permute.xlu0 %1510
    %v1513 = vsel %vm433, %v1511, 0.0
    %1514 = vadd.xlane.f32.xlu0 %v1513
    %v1515 = vpop.xlane.xlu0 %1514
    %vm1516 = vcmp.ge.f32.partialorder %v1500, %v1515
    %v1517 = vor.u32 %v1498, 128
    %v1518 = vsel %vm1516, %v1517, %v1498
    %v1519 = vsub.f32 %v1500, %v1515
    %v1520 = vsel %vm1516, %v1519, %v1500
    %v1521 = vshra.s32 %v1518, 7
    %vm1522 = vcmp.eq.s32.totalorder %v1503, %v1521
    %v1523 = vshra.s32 %v1040, 6
    %v1524 = vand.u32 %v1523, 1
    %vm1525 = vcmp.eq.s32.totalorder %v1524, 0
    %vm1526 = vmand %vm1522, %vm1525
    %v1527 = vsel %vm1526, 1, 0
    %v1528 = vcvt.s32.f32 %v1527
    %1530 = vrot.lane.b32.xlu0 %v1528, 126
    %v1531 = vpop.permute.xlu0 %1530
    %v1533 = vsel %vm433, %v1531, 0.0
    %1534 = vadd.xlane.f32.xlu0 %v1533
    %v1535 = vpop.xlane.xlu0 %1534
    %vm1536 = vcmp.ge.f32.partialorder %v1520, %v1535
    %v1537 = vor.u32 %v1518, 64
    %v1538 = vsel %vm1536, %v1537, %v1518
    %v1539 = vsub.f32 %v1520, %v1535
    %v1540 = vsel %vm1536, %v1539, %v1520
    %v1541 = vshra.s32 %v1538, 6
    %vm1542 = vcmp.eq.s32.totalorder %v1523, %v1541
    %v1543 = vshra.s32 %v1040, 5
    %v1544 = vand.u32 %v1543, 1
    %vm1545 = vcmp.eq.s32.totalorder %v1544, 0
    %vm1546 = vmand %vm1542, %vm1545
    %v1547 = vsel %vm1546, 1, 0
    %v1548 = vcvt.s32.f32 %v1547
    %1550 = vrot.lane.b32.xlu0 %v1548, 126
    %v1551 = vpop.permute.xlu0 %1550
    %v1553 = vsel %vm433, %v1551, 0.0
    %1554 = vadd.xlane.f32.xlu0 %v1553
    %v1555 = vpop.xlane.xlu0 %1554
    %vm1556 = vcmp.ge.f32.partialorder %v1540, %v1555
    %v1557 = vor.u32 %v1538, 32
    %v1558 = vsel %vm1556, %v1557, %v1538
    %v1559 = vsub.f32 %v1540, %v1555
    %v1560 = vsel %vm1556, %v1559, %v1540
    %v1561 = vshra.s32 %v1558, 5
    %vm1562 = vcmp.eq.s32.totalorder %v1543, %v1561
    %v1563 = vshra.s32 %v1040, 4
    %v1564 = vand.u32 %v1563, 1
    %vm1565 = vcmp.eq.s32.totalorder %v1564, 0
    %vm1566 = vmand %vm1562, %vm1565
    %v1567 = vsel %vm1566, 1, 0
    %v1568 = vcvt.s32.f32 %v1567
    %1570 = vrot.lane.b32.xlu0 %v1568, 126
    %v1571 = vpop.permute.xlu0 %1570
    %v1573 = vsel %vm433, %v1571, 0.0
    %1574 = vadd.xlane.f32.xlu0 %v1573
    %v1575 = vpop.xlane.xlu0 %1574
    %vm1576 = vcmp.ge.f32.partialorder %v1560, %v1575
    %v1577 = vor.u32 %v1558, 16
    %v1578 = vsel %vm1576, %v1577, %v1558
    %v1579 = vsub.f32 %v1560, %v1575
    %v1580 = vsel %vm1576, %v1579, %v1560
    %v1581 = vshra.s32 %v1578, 4
    %vm1582 = vcmp.eq.s32.totalorder %v1563, %v1581
    %v1583 = vshra.s32 %v1040, 3
    %v1584 = vand.u32 %v1583, 1
    %vm1585 = vcmp.eq.s32.totalorder %v1584, 0
    %vm1586 = vmand %vm1582, %vm1585
    %v1587 = vsel %vm1586, 1, 0
    %v1588 = vcvt.s32.f32 %v1587
    %1590 = vrot.lane.b32.xlu0 %v1588, 126
    %v1591 = vpop.permute.xlu0 %1590
    %v1593 = vsel %vm433, %v1591, 0.0
    %1594 = vadd.xlane.f32.xlu0 %v1593
    %v1595 = vpop.xlane.xlu0 %1594
    %vm1596 = vcmp.ge.f32.partialorder %v1580, %v1595
    %v1597 = vor.u32 %v1578, 8
    %v1598 = vsel %vm1596, %v1597, %v1578
    %v1599 = vsub.f32 %v1580, %v1595
    %v1600 = vsel %vm1596, %v1599, %v1580
    %v1601 = vshra.s32 %v1598, 3
    %vm1602 = vcmp.eq.s32.totalorder %v1583, %v1601
    %v1603 = vshra.s32 %v1040, 2
    %v1604 = vand.u32 %v1603, 1
    %vm1605 = vcmp.eq.s32.totalorder %v1604, 0
    %vm1606 = vmand %vm1602, %vm1605
    %v1607 = vsel %vm1606, 1, 0
    %v1608 = vcvt.s32.f32 %v1607
    %1610 = vrot.lane.b32.xlu0 %v1608, 126
    %v1611 = vpop.permute.xlu0 %1610
    %v1613 = vsel %vm433, %v1611, 0.0
    %1614 = vadd.xlane.f32.xlu0 %v1613
    %v1615 = vpop.xlane.xlu0 %1614
    %vm1616 = vcmp.ge.f32.partialorder %v1600, %v1615
    %v1617 = vor.u32 %v1598, 4
    %v1618 = vsel %vm1616, %v1617, %v1598
    %v1619 = vsub.f32 %v1600, %v1615
    %v1620 = vsel %vm1616, %v1619, %v1600
    %v1621 = vshra.s32 %v1618, 2
    %vm1622 = vcmp.eq.s32.totalorder %v1603, %v1621
    %v1623 = vshra.s32 %v1040, 1
    %v1624 = vand.u32 %v1623, 1
    %vm1625 = vcmp.eq.s32.totalorder %v1624, 0
    %vm1626 = vmand %vm1622, %vm1625
    %v1627 = vsel %vm1626, 1, 0
    %v1628 = vcvt.s32.f32 %v1627
    %1630 = vrot.lane.b32.xlu0 %v1628, 126
    %v1631 = vpop.permute.xlu0 %1630
    %v1633 = vsel %vm433, %v1631, 0.0
    %1634 = vadd.xlane.f32.xlu0 %v1633
    %v1635 = vpop.xlane.xlu0 %1634
    %vm1636 = vcmp.ge.f32.partialorder %v1620, %v1635
    %v1637 = vor.u32 %v1618, 2
    %v1638 = vsel %vm1636, %v1637, %v1618
    %v1639 = vsub.f32 %v1620, %v1635
    %v1640 = vsel %vm1636, %v1639, %v1620
    %v1641 = vshra.s32 %v1638, 1
    %vm1642 = vcmp.eq.s32.totalorder %v1623, %v1641
    %v1643 = vand.u32 %v1040, 1
    %vm1644 = vcmp.eq.s32.totalorder %v1643, 0
    %vm1645 = vmand %vm1642, %vm1644
    %v1646 = vsel %vm1645, 1, 0
    %v1647 = vcvt.s32.f32 %v1646
    %1649 = vrot.lane.b32.xlu0 %v1647, 126
    %v1650 = vpop.permute.xlu0 %1649
    %v1652 = vsel %vm433, %v1650, 0.0
    %1653 = vadd.xlane.f32.xlu0 %v1652
    %v1654 = vpop.xlane.xlu0 %1653
    %vm1655 = vcmp.ge.f32.partialorder %v1640, %v1654
    %v1656 = vor.u32 %v1638, 1
    %v1657 = vsel %vm1655, %v1656, %v1638
    %v1659 = vmul.f32 %v1657, 2.5
    %v1660 = vadd.f32 %v1037, %v1659
    %vm1661 = vcmp.gt.f32.partialorder %v419, %v1660
    %v1662 = vsel %vm1661, 1, 0
    %v1663 = vcvt.s32.f32 %v1662
    %1665 = vrot.lane.b32.xlu0 %v1663, 125
    %v1666 = vpop.permute.xlu0 %1665
    %vm1668 = vcmask 498688
    %v1669 = vsel %vm1668, %v1666, 0.0
    %1670 = vrot.lane.b32.xlu0 %v1663, 127
    %v1671 = vpop.permute.xlu0 %1670
    %vm1673 = vcmask 7168
    %v1674 = vsel %vm1673, 0.0, %v1671
    %v1675 = vmax.f32 %v1669, %v1674
    %1677 = vrot.lane.b32.xlu0 %v1675, 2
    %v1678 = vpop.permute.xlu0 %1677
    %v1680 = vmax.f32 %v1663, %v1678
    %1682 = vrot.lane.b32.xlu0 %v1680, 126
    %v1683 = vpop.permute.xlu0 %1682
    %v1685 = vsel %vm433, %v1683, 0.0
    %1686 = vadd.xlane.f32.xlu0 %v1685
    %v1687 = vpop.xlane.xlu0 %1686
    %v1688 = vrot.slane %v1687, 4
    %v1689 = vadd.f32 %v1687, %v1688
    %v1690 = vrot.slane %v1689, 2
    %v1691 = vadd.f32 %v1689, %v1690
    %v1692 = vrot.slane %v1691, 1
    %v1693 = vadd.f32 %v1691, %v1692
    %s1694 = vtos %v1693
    %1696 = vrot.lane.b32.xlu0 %v55, 1
    %v1697 = vpop.permute.xlu0 %1696
    %v1699 = vmul.f32 %v1680, %v1697
    %1701 = vrot.lane.b32.xlu0 %v1699, 126
    %v1702 = vpop.permute.xlu0 %1701
    %v1704 = vsel %vm433, %v1702, 0.0
    %1705 = vadd.xlane.f32.xlu0 %v1704
    %v1706 = vpop.xlane.xlu0 %1705
    %v1707 = vrot.slane %v1706, 4
    %v1708 = vadd.f32 %v1706, %v1707
    %v1709 = vrot.slane %v1708, 2
    %v1710 = vadd.f32 %v1708, %v1709
    %v1711 = vrot.slane %v1710, 1
    %v1712 = vadd.f32 %v1710, %v1711
    %s1713 = vtos %v1712
    %p1714 = scmp.gt.f32.partialorder %s1694, 0.0
    %s1715 = smax.f32 %s1694, 1.0
    %v1716 = vstv %s1715
    %v1717 = vrcp.pop %v1716
    %s1718 = vtos %v1717
    %s1719 = smul.f32 %s1713, %s1718
    %s1720 = smul.f32 %s1719, 5.0
    %s1721 = scalar_select %p1714, %s1720, 0.0
    %v1722 = vmul.f32 %v418, %v418
    %1724 = vrot.lane.b32.xlu0 %v1722, 126
    %v1725 = vpop.permute.xlu0 %1724
    %v1727 = vsel %vm433, %v1725, 0.0
    %1728 = vadd.xlane.f32.xlu0 %v1727
    %v1729 = vpop.xlane.xlu0 %1728
    %v1730 = vrot.slane %v1729, 4
    %v1731 = vadd.f32 %v1729, %v1730
    %v1732 = vrot.slane %v1731, 2
    %v1733 = vadd.f32 %v1731, %v1732
    %v1734 = vrot.slane %v1733, 1
    %v1735 = vadd.f32 %v1733, %v1734
    %s1736 = vtos %v1735
    %v1737 = vrcp.pop 124.0
    %s1738 = vtos %v1737
    %s1739 = smul.f32 %s1736, %s1738
    %s1740 = smul.f32 %s1739, 0.08
    %s1741 = smul.f32 %s100, 0.3
    %s1742 = sadd.f32 %s68, %s1741
    %s1743 = smul.f32 %s376, 0.25
    %s1744 = sadd.f32 %s1742, %s1743
    %s1745 = smul.f32 %s1721, 0.8
    %s1746 = sadd.f32 %s1744, %s1745
    %s1747 = sadd.f32 %s1746, %s1740
    %s1748 = sadd.f32 %s1747, %s413
    %s1749 = scalar_lea.smem [#allocation5], 0
    %1750 = sst [smem:[%s1749]] %s1748
    // Predicated region
    $region14: #{enhanced_spike_control_loss.1} parent=1 // pred_check
      _
    $region15: #{enhanced_spike_control_loss.1} parent=1 // pred_check_branch
      %1752 = sbr.rel (0) target = $region17
    $region16: #{enhanced_spike_control_loss.1} parent=1 // pred_region
      %s1754 = ssub.s32 16, 16
      %1755 = vsyncadd [#allocation4], %s1754
      %1758 = dma.smem_to_hbm [#allocation5], 16, %s2, [#allocation4]
    $region17: #{enhanced_spike_control_loss.1} parent=1 // pred_fallthru
      _
    // Predicated region
    $region18: #{enhanced_spike_control_loss.1} parent=1 // pred_check
      _
    $region19: #{enhanced_spike_control_loss.1} parent=1 // pred_check_branch
      %1760 = sbr.rel (0) target = $region21
    $region20: #{enhanced_spike_control_loss.1} parent=1 // pred_region
      %1761 = dma.done [#allocation4], 16
    $region21: #{enhanced_spike_control_loss.1} parent=1 // pred_fallthru
      _
    %1762 = sfence
    %1763 = vsyncpa [#allocation3], 1
    %1764 = vsyncpa [#allocation4], 1

</llo_original>
